<compile_context>
chip_gen: v6e
topology: v6e:2x2x1
jax: 0.10.0
libtpu: 0.0.40
codegen_flags: <defaults>
</compile_context>

<pallas_src>
import math
from functools import partial

import jax
import jax.numpy as jnp
from jax.experimental import pallas as pl
from jax.experimental.pallas import tpu as pltpu


def _round_up(x, m):
    return (x + m - 1) // m * m


def _blurred_weight(weight, multiplier):
    """(Cin, Cout, k, k) -> blurred (Cin, Cout, k+1, k+1), exactly as PyTorch."""
    w = jnp.pad(weight.astype(jnp.float32) * multiplier,
                ((0, 0), (0, 0), (1, 1), (1, 1)))
    return (w[:, :, 1:, 1:] + w[:, :, :-1, 1:]
            + w[:, :, 1:, :-1] + w[:, :, :-1, :-1]) * 0.25


def _fused_upsample_kernel(x_ref, w_ref, b_ref, o_ref):
    """One batch element of FusedUpsample.

    x_ref: (1, H+2, W+2, Cin_p)  zero-padded NHWC input, bf16
    w_ref: (4, 4*Cin_p, Cp)      per-parity folded conv weights, bf16
    b_ref: (1, Cp)               bias (zero-padded to Cp), f32
    o_ref: (1, H, 2, W, 2*Cp)    o[0, m, ph, n, pw*Cp + c] == out[2m+ph, 2n+pw, c]
    """
    _, hp2, wp2, cin = x_ref.shape
    h, w = hp2 - 2, wp2 - 2
    cp = b_ref.shape[-1]
    bias = b_ref[...]                                        # hoisted (1, Cp)
    for ph in range(2):
        for pw in range(2):
            # 2x2 taps of this output parity, folded along channels -> K = 4*Cin_p.
            taps = [x_ref[0, ph + dh:ph + dh + h, pw + dw:pw + dw + w, :]
                    for dh in range(2) for dw in range(2)]
            patch = jnp.concatenate(taps, axis=-1).reshape(h * w, 4 * cin)
            y = jnp.dot(patch, w_ref[2 * ph + pw],
                        preferred_element_type=jnp.float32) + bias
            o_ref[0, :, ph, :, pw * cp:(pw + 1) * cp] = y.reshape(h, w, cp)


@partial(jax.jit, static_argnames=("padding",))
def fused_upsample(x_nchw, weight, bias, padding=1):
    """FusedUpsample.forward.  x: (B, Cin, H, W); weight: (Cin, Cout, k, k)."""
    cin, cout, k, _ = weight.shape
    if k != 3 or padding != 1:
        # TODO(synk): polyphase offsets below are derived for the StyleGAN1
        # configuration only (kernel_size=3 -> 4x4 blurred kernel, padding=1).
        raise NotImplementedError("only kernel_size=3, padding=1 is supported")
    b, _, h, w = x_nchw.shape
    cin_p = _round_up(cin, 128)        # lane-align every tap block of K
    cp = _round_up(cout, 128)          # lane-dense output stores

    # ---- glue (pure JAX): layout + parameter folding ------------------------
    x_nhwc = jnp.transpose(x_nchw, (0, 2, 3, 1))
    xpad = jnp.pad(x_nhwc, ((0, 0), (1, 1), (1, 1), (0, cin_p - cin)))
    xpad = xpad.astype(jnp.bfloat16)

    wb = _blurred_weight(weight, math.sqrt(2.0 / (cin * k * k)))    # (Cin, Cout, 4, 4)
    wb = jnp.pad(wb, ((0, cin_p - cin), (0, cp - cout), (0, 0), (0, 0)))
    parities = []
    for ph in range(2):
        for pw in range(2):
            taps = [wb[:, :, 3 - ph - 2 * dh, 3 - pw - 2 * dw]      # (Cin_p, Cp)
                    for dh in range(2) for dw in range(2)]
            parities.append(jnp.concatenate(taps, axis=0))          # (4*Cin_p, Cp)
    w_par = jnp.stack(parities, axis=0).astype(jnp.bfloat16)        # (4, 4*Cin_p, Cp)
    b_pad = jnp.pad(bias.astype(jnp.float32), (0, cp - cout)).reshape(1, cp)

    # ---- Pallas call ---------------------------------------------------------
    out6 = pl.pallas_call(
        _fused_upsample_kernel,
        out_shape=jax.ShapeDtypeStruct((b, h, 2, w, 2 * cp), jnp.float32),
        grid=(b,),
        in_specs=[
            pl.BlockSpec((1, h + 2, w + 2, cin_p), lambda i: (i, 0, 0, 0)),
            pl.BlockSpec((4, 4 * cin_p, cp), lambda i: (0, 0, 0)),
            pl.BlockSpec((1, cp), lambda i: (0, 0)),
        ],
        out_specs=pl.BlockSpec((1, h, 2, w, 2 * cp), lambda i: (i, 0, 0, 0, 0)),
        compiler_params=pltpu.CompilerParams(
            dimension_semantics=("parallel",),
            vmem_limit_bytes=64 * 1024 * 1024),
    )(xpad, w_par, b_pad)

    # (B, H, 2, W, 2*Cp) is row-major identical to (B, 2H, 2W, Cp): the parity
    # interleave is a free reshape.  Crop the channel padding, go back to NCHW.
    out = out6.reshape(b, 2 * h, 2 * w, cp)[..., :cout]
    return jnp.transpose(out, (0, 3, 1, 2))


def reference_fused_upsample(x, weight, bias, padding=1):
    """Pure-JAX reference replicating F.conv_transpose2d(stride=2) exactly."""
    cin, cout, k, _ = weight.shape
    wb = _blurred_weight(weight, math.sqrt(2.0 / (cin * k * k)))    # (Cin, Cout, K, K)
    kk = k + 1
    # conv_transpose(x, w, s=2, p) == dilated conv with flipped, io-swapped kernel.
    w_conv = jnp.transpose(wb, (1, 0, 2, 3))[:, :, ::-1, ::-1]      # (Cout, Cin, K, K)
    q = kk - 1 - padding
    out = jax.lax.conv_general_dilated(
        x.astype(jnp.float32), w_conv, window_strides=(1, 1),
        padding=((q, q), (q, q)), lhs_dilation=(2, 2),
        dimension_numbers=("NCHW", "OIHW", "NCHW"),
        precision=jax.lax.Precision.HIGHEST)
    return out + bias.reshape(1, cout, 1, 1).astype(jnp.float32)


if __name__ == "__main__":
    B, CIN, COUT, H, W = 2, 4, 8, 16, 16
    key = jax.random.PRNGKey(0)
    kx, kw, kb = jax.random.split(key, 3)
    x = jax.random.normal(kx, (B, CIN, H, W), jnp.float32)
    weight = jax.random.normal(kw, (CIN, COUT, 3, 3), jnp.float32)   # torch.randn init
    bias = 0.1 * jax.random.normal(kb, (COUT,), jnp.float32)         # module init is 0; nonzero exercises the add

    out = jax.block_until_ready(fused_upsample(x, weight, bias, padding=1))
    ref = jax.block_until_ready(reference_fused_upsample(x, weight, bias, padding=1))

    assert out.shape == (B, COUT, 2 * H, 2 * W), out.shape
    if not bool(jnp.allclose(out, ref, atol=2e-2, rtol=2e-2)):
        raise AssertionError(
            f"mismatch vs reference, max abs err={float(jnp.max(jnp.abs(out - ref)))}")
    print("KERNEL_OK")
</pallas_src>

<mosaic_0001>
module attributes {stable_mosaic.version = 11 : i64} {
  func.func @_fused_upsample_kernel(%arg0: i32, %arg1: memref<1x18x18x128xbf16, #tpu.memory_space<vmem>>, %arg2: memref<4x512x128xbf16, #tpu.memory_space<vmem>>, %arg3: memref<1x128xf32, #tpu.memory_space<vmem>>, %arg4: memref<1x16x2x16x256xf32, #tpu.memory_space<vmem>>) attributes {dimension_semantics = [#tpu.dimension_semantics<parallel>], iteration_bounds = array<i64: 2>, scalar_prefetch = 0 : i64, scratch_operands = 0 : i64, tpu.core_type = #tpu.core_type<tc>, window_params = [{transform_indices = @transform_0, window_bounds = array<i64: 1, 18, 18, 128>}, {pipeline_mode = #tpu.pipeline_mode<synchronous>, transform_indices = @transform_1, window_bounds = array<i64: 4, 512, 128>}, {pipeline_mode = #tpu.pipeline_mode<synchronous>, transform_indices = @transform_2, window_bounds = array<i64: 1, 128>}, {transform_indices = @transform_3, window_bounds = array<i64: 1, 16, 2, 16, 256>}]} {
    %c0 = arith.constant 0 : index
    %c0_0 = arith.constant 0 : index
    %0 = vector.load %arg3[%c0, %c0_0] : memref<1x128xf32, #tpu.memory_space<vmem>>, vector<1x128xf32>
    %c0_1 = arith.constant 0 : index
    %c0_2 = arith.constant 0 : index
    %c0_3 = arith.constant 0 : index
    %c0_4 = arith.constant 0 : index
    %1 = vector.load %arg1[%c0_1, %c0_2, %c0_3, %c0_4] : memref<1x18x18x128xbf16, #tpu.memory_space<vmem>>, vector<1x16x16x128xbf16>
    %2 = vector.shape_cast %1 : vector<1x16x16x128xbf16> to vector<16x16x128xbf16>
    %c0_5 = arith.constant 0 : index
    %c0_6 = arith.constant 0 : index
    %c1 = arith.constant 1 : index
    %c0_7 = arith.constant 0 : index
    %3 = vector.load %arg1[%c0_5, %c0_6, %c1, %c0_7] : memref<1x18x18x128xbf16, #tpu.memory_space<vmem>>, vector<1x16x16x128xbf16>
    %4 = vector.shape_cast %3 : vector<1x16x16x128xbf16> to vector<16x16x128xbf16>
    %c0_8 = arith.constant 0 : index
    %c1_9 = arith.constant 1 : index
    %c0_10 = arith.constant 0 : index
    %c0_11 = arith.constant 0 : index
    %5 = vector.load %arg1[%c0_8, %c1_9, %c0_10, %c0_11] : memref<1x18x18x128xbf16, #tpu.memory_space<vmem>>, vector<1x16x16x128xbf16>
    %6 = vector.shape_cast %5 : vector<1x16x16x128xbf16> to vector<16x16x128xbf16>
    %c0_12 = arith.constant 0 : index
    %c1_13 = arith.constant 1 : index
    %c1_14 = arith.constant 1 : index
    %c0_15 = arith.constant 0 : index
    %7 = vector.load %arg1[%c0_12, %c1_13, %c1_14, %c0_15] : memref<1x18x18x128xbf16, #tpu.memory_space<vmem>>, vector<1x16x16x128xbf16>
    %8 = vector.shape_cast %7 : vector<1x16x16x128xbf16> to vector<16x16x128xbf16>
    %9 = tpu.concatenate %2, %4, %6, %8 in 2 : vector<16x16x128xbf16>, vector<16x16x128xbf16>, vector<16x16x128xbf16>, vector<16x16x128xbf16> -> vector<16x16x512xbf16>
    %10 = vector.shape_cast %9 : vector<16x16x512xbf16> to vector<256x512xbf16>
    %c0_16 = arith.constant 0 : index
    %c0_17 = arith.constant 0 : index
    %c0_18 = arith.constant 0 : index
    %11 = vector.load %arg2[%c0_16, %c0_17, %c0_18] : memref<4x512x128xbf16, #tpu.memory_space<vmem>>, vector<1x512x128xbf16>
    %12 = vector.shape_cast %11 : vector<1x512x128xbf16> to vector<512x128xbf16>
    %cst = arith.constant dense<0.000000e+00> : vector<256x128xf32>
    %13 = tpu.matmul %10, %12, %cst {dimension_numbers = #tpu.dot_dimension_numbers<[1], [0], [0], [1], [0, 0, 1, 1], [], []>} : vector<256x512xbf16>, vector<512x128xbf16>, vector<256x128xf32> -> vector<256x128xf32>
    %14 = vector.broadcast %0 : vector<1x128xf32> to vector<256x128xf32>
    %15 = arith.addf %13, %14 : vector<256x128xf32>
    %16 = vector.shape_cast %15 : vector<256x128xf32> to vector<16x16x128xf32>
    %c0_19 = arith.constant 0 : index
    %c0_20 = arith.constant 0 : index
    %c0_21 = arith.constant 0 : index
    %c0_22 = arith.constant 0 : index
    %c0_23 = arith.constant 0 : index
    %17 = vector.load %arg4[%c0_19, %c0_20, %c0_21, %c0_22, %c0_23] : memref<1x16x2x16x256xf32, #tpu.memory_space<vmem>>, vector<1x16x1x16x128xf32>
    %18 = vector.shape_cast %17 : vector<1x16x1x16x128xf32> to vector<16x16x128xf32>
    %19 = vector.shape_cast %16 : vector<16x16x128xf32> to vector<1x16x1x16x128xf32>
    tpu.vector_store %arg4[%c0_19, %c0_20, %c0_21, %c0_22, %c0_23], %19 {strides = array<i32>} : memref<1x16x2x16x256xf32, #tpu.memory_space<vmem>>, vector<1x16x1x16x128xf32>,
    %c0_24 = arith.constant 0 : index
    %c0_25 = arith.constant 0 : index
    %c1_26 = arith.constant 1 : index
    %c0_27 = arith.constant 0 : index
    %20 = vector.load %arg1[%c0_24, %c0_25, %c1_26, %c0_27] : memref<1x18x18x128xbf16, #tpu.memory_space<vmem>>, vector<1x16x16x128xbf16>
    %21 = vector.shape_cast %20 : vector<1x16x16x128xbf16> to vector<16x16x128xbf16>
    %c0_28 = arith.constant 0 : index
    %c0_29 = arith.constant 0 : index
    %c2 = arith.constant 2 : index
    %c0_30 = arith.constant 0 : index
    %22 = vector.load %arg1[%c0_28, %c0_29, %c2, %c0_30] : memref<1x18x18x128xbf16, #tpu.memory_space<vmem>>, vector<1x16x16x128xbf16>
    %23 = vector.shape_cast %22 : vector<1x16x16x128xbf16> to vector<16x16x128xbf16>
    %c0_31 = arith.constant 0 : index
    %c1_32 = arith.constant 1 : index
    %c1_33 = arith.constant 1 : index
    %c0_34 = arith.constant 0 : index
    %24 = vector.load %arg1[%c0_31, %c1_32, %c1_33, %c0_34] : memref<1x18x18x128xbf16, #tpu.memory_space<vmem>>, vector<1x16x16x128xbf16>
    %25 = vector.shape_cast %24 : vector<1x16x16x128xbf16> to vector<16x16x128xbf16>
    %c0_35 = arith.constant 0 : index
    %c1_36 = arith.constant 1 : index
    %c2_37 = arith.constant 2 : index
    %c0_38 = arith.constant 0 : index
    %26 = vector.load %arg1[%c0_35, %c1_36, %c2_37, %c0_38] : memref<1x18x18x128xbf16, #tpu.memory_space<vmem>>, vector<1x16x16x128xbf16>
    %27 = vector.shape_cast %26 : vector<1x16x16x128xbf16> to vector<16x16x128xbf16>
    %28 = tpu.concatenate %21, %23, %25, %27 in 2 : vector<16x16x128xbf16>, vector<16x16x128xbf16>, vector<16x16x128xbf16>, vector<16x16x128xbf16> -> vector<16x16x512xbf16>
    %29 = vector.shape_cast %28 : vector<16x16x512xbf16> to vector<256x512xbf16>
    %c1_39 = arith.constant 1 : index
    %c0_40 = arith.constant 0 : index
    %c0_41 = arith.constant 0 : index
    %30 = vector.load %arg2[%c1_39, %c0_40, %c0_41] : memref<4x512x128xbf16, #tpu.memory_space<vmem>>, vector<1x512x128xbf16>
    %31 = vector.shape_cast %30 : vector<1x512x128xbf16> to vector<512x128xbf16>
    %cst_42 = arith.constant dense<0.000000e+00> : vector<256x128xf32>
    %32 = tpu.matmul %29, %31, %cst_42 {dimension_numbers = #tpu.dot_dimension_numbers<[1], [0], [0], [1], [0, 0, 1, 1], [], []>} : vector<256x512xbf16>, vector<512x128xbf16>, vector<256x128xf32> -> vector<256x128xf32>
    %33 = vector.broadcast %0 : vector<1x128xf32> to vector<256x128xf32>
    %34 = arith.addf %32, %33 : vector<256x128xf32>
    %35 = vector.shape_cast %34 : vector<256x128xf32> to vector<16x16x128xf32>
    %c0_43 = arith.constant 0 : index
    %c0_44 = arith.constant 0 : index
    %c0_45 = arith.constant 0 : index
    %c0_46 = arith.constant 0 : index
    %c128 = arith.constant 128 : index
    %36 = vector.load %arg4[%c0_43, %c0_44, %c0_45, %c0_46, %c128] : memref<1x16x2x16x256xf32, #tpu.memory_space<vmem>>, vector<1x16x1x16x128xf32>
    %37 = vector.shape_cast %36 : vector<1x16x1x16x128xf32> to vector<16x16x128xf32>
    %38 = vector.shape_cast %35 : vector<16x16x128xf32> to vector<1x16x1x16x128xf32>
    tpu.vector_store %arg4[%c0_43, %c0_44, %c0_45, %c0_46, %c128], %38 {strides = array<i32>} : memref<1x16x2x16x256xf32, #tpu.memory_space<vmem>>, vector<1x16x1x16x128xf32>,
    %c0_47 = arith.constant 0 : index
    %c1_48 = arith.constant 1 : index
    %c0_49 = arith.constant 0 : index
    %c0_50 = arith.constant 0 : index
    %39 = vector.load %arg1[%c0_47, %c1_48, %c0_49, %c0_50] : memref<1x18x18x128xbf16, #tpu.memory_space<vmem>>, vector<1x16x16x128xbf16>
    %40 = vector.shape_cast %39 : vector<1x16x16x128xbf16> to vector<16x16x128xbf16>
    %c0_51 = arith.constant 0 : index
    %c1_52 = arith.constant 1 : index
    %c1_53 = arith.constant 1 : index
    %c0_54 = arith.constant 0 : index
    %41 = vector.load %arg1[%c0_51, %c1_52, %c1_53, %c0_54] : memref<1x18x18x128xbf16, #tpu.memory_space<vmem>>, vector<1x16x16x128xbf16>
    %42 = vector.shape_cast %41 : vector<1x16x16x128xbf16> to vector<16x16x128xbf16>
    %c0_55 = arith.constant 0 : index
    %c2_56 = arith.constant 2 : index
    %c0_57 = arith.constant 0 : index
    %c0_58 = arith.constant 0 : index
    %43 = vector.load %arg1[%c0_55, %c2_56, %c0_57, %c0_58] : memref<1x18x18x128xbf16, #tpu.memory_space<vmem>>, vector<1x16x16x128xbf16>
    %44 = vector.shape_cast %43 : vector<1x16x16x128xbf16> to vector<16x16x128xbf16>
    %c0_59 = arith.constant 0 : index
    %c2_60 = arith.constant 2 : index
    %c1_61 = arith.constant 1 : index
    %c0_62 = arith.constant 0 : index
    %45 = vector.load %arg1[%c0_59, %c2_60, %c1_61, %c0_62] : memref<1x18x18x128xbf16, #tpu.memory_space<vmem>>, vector<1x16x16x128xbf16>
    %46 = vector.shape_cast %45 : vector<1x16x16x128xbf16> to vector<16x16x128xbf16>
    %47 = tpu.concatenate %40, %42, %44, %46 in 2 : vector<16x16x128xbf16>, vector<16x16x128xbf16>, vector<16x16x128xbf16>, vector<16x16x128xbf16> -> vector<16x16x512xbf16>
    %48 = vector.shape_cast %47 : vector<16x16x512xbf16> to vector<256x512xbf16>
    %c2_63 = arith.constant 2 : index
    %c0_64 = arith.constant 0 : index
    %c0_65 = arith.constant 0 : index
    %49 = vector.load %arg2[%c2_63, %c0_64, %c0_65] : memref<4x512x128xbf16, #tpu.memory_space<vmem>>, vector<1x512x128xbf16>
    %50 = vector.shape_cast %49 : vector<1x512x128xbf16> to vector<512x128xbf16>
    %cst_66 = arith.constant dense<0.000000e+00> : vector<256x128xf32>
    %51 = tpu.matmul %48, %50, %cst_66 {dimension_numbers = #tpu.dot_dimension_numbers<[1], [0], [0], [1], [0, 0, 1, 1], [], []>} : vector<256x512xbf16>, vector<512x128xbf16>, vector<256x128xf32> -> vector<256x128xf32>
    %52 = vector.broadcast %0 : vector<1x128xf32> to vector<256x128xf32>
    %53 = arith.addf %51, %52 : vector<256x128xf32>
    %54 = vector.shape_cast %53 : vector<256x128xf32> to vector<16x16x128xf32>
    %c0_67 = arith.constant 0 : index
    %c0_68 = arith.constant 0 : index
    %c1_69 = arith.constant 1 : index
    %c0_70 = arith.constant 0 : index
    %c0_71 = arith.constant 0 : index
    %55 = vector.load %arg4[%c0_67, %c0_68, %c1_69, %c0_70, %c0_71] : memref<1x16x2x16x256xf32, #tpu.memory_space<vmem>>, vector<1x16x1x16x128xf32>
    %56 = vector.shape_cast %55 : vector<1x16x1x16x128xf32> to vector<16x16x128xf32>
    %57 = vector.shape_cast %54 : vector<16x16x128xf32> to vector<1x16x1x16x128xf32>
    tpu.vector_store %arg4[%c0_67, %c0_68, %c1_69, %c0_70, %c0_71], %57 {strides = array<i32>} : memref<1x16x2x16x256xf32, #tpu.memory_space<vmem>>, vector<1x16x1x16x128xf32>,
    %c0_72 = arith.constant 0 : index
    %c1_73 = arith.constant 1 : index
    %c1_74 = arith.constant 1 : index
    %c0_75 = arith.constant 0 : index
    %58 = vector.load %arg1[%c0_72, %c1_73, %c1_74, %c0_75] : memref<1x18x18x128xbf16, #tpu.memory_space<vmem>>, vector<1x16x16x128xbf16>
    %59 = vector.shape_cast %58 : vector<1x16x16x128xbf16> to vector<16x16x128xbf16>
    %c0_76 = arith.constant 0 : index
    %c1_77 = arith.constant 1 : index
    %c2_78 = arith.constant 2 : index
    %c0_79 = arith.constant 0 : index
    %60 = vector.load %arg1[%c0_76, %c1_77, %c2_78, %c0_79] : memref<1x18x18x128xbf16, #tpu.memory_space<vmem>>, vector<1x16x16x128xbf16>
    %61 = vector.shape_cast %60 : vector<1x16x16x128xbf16> to vector<16x16x128xbf16>
    %c0_80 = arith.constant 0 : index
    %c2_81 = arith.constant 2 : index
    %c1_82 = arith.constant 1 : index
    %c0_83 = arith.constant 0 : index
    %62 = vector.load %arg1[%c0_80, %c2_81, %c1_82, %c0_83] : memref<1x18x18x128xbf16, #tpu.memory_space<vmem>>, vector<1x16x16x128xbf16>
    %63 = vector.shape_cast %62 : vector<1x16x16x128xbf16> to vector<16x16x128xbf16>
    %c0_84 = arith.constant 0 : index
    %c2_85 = arith.constant 2 : index
    %c2_86 = arith.constant 2 : index
    %c0_87 = arith.constant 0 : index
    %64 = vector.load %arg1[%c0_84, %c2_85, %c2_86, %c0_87] : memref<1x18x18x128xbf16, #tpu.memory_space<vmem>>, vector<1x16x16x128xbf16>
    %65 = vector.shape_cast %64 : vector<1x16x16x128xbf16> to vector<16x16x128xbf16>
    %66 = tpu.concatenate %59, %61, %63, %65 in 2 : vector<16x16x128xbf16>, vector<16x16x128xbf16>, vector<16x16x128xbf16>, vector<16x16x128xbf16> -> vector<16x16x512xbf16>
    %67 = vector.shape_cast %66 : vector<16x16x512xbf16> to vector<256x512xbf16>
    %c3 = arith.constant 3 : index
    %c0_88 = arith.constant 0 : index
    %c0_89 = arith.constant 0 : index
    %68 = vector.load %arg2[%c3, %c0_88, %c0_89] : memref<4x512x128xbf16, #tpu.memory_space<vmem>>, vector<1x512x128xbf16>
    %69 = vector.shape_cast %68 : vector<1x512x128xbf16> to vector<512x128xbf16>
    %cst_90 = arith.constant dense<0.000000e+00> : vector<256x128xf32>
    %70 = tpu.matmul %67, %69, %cst_90 {dimension_numbers = #tpu.dot_dimension_numbers<[1], [0], [0], [1], [0, 0, 1, 1], [], []>} : vector<256x512xbf16>, vector<512x128xbf16>, vector<256x128xf32> -> vector<256x128xf32>
    %71 = vector.broadcast %0 : vector<1x128xf32> to vector<256x128xf32>
    %72 = arith.addf %70, %71 : vector<256x128xf32>
    %73 = vector.shape_cast %72 : vector<256x128xf32> to vector<16x16x128xf32>
    %c0_91 = arith.constant 0 : index
    %c0_92 = arith.constant 0 : index
    %c1_93 = arith.constant 1 : index
    %c0_94 = arith.constant 0 : index
    %c128_95 = arith.constant 128 : index
    %74 = vector.load %arg4[%c0_91, %c0_92, %c1_93, %c0_94, %c128_95] : memref<1x16x2x16x256xf32, #tpu.memory_space<vmem>>, vector<1x16x1x16x128xf32>
    %75 = vector.shape_cast %74 : vector<1x16x1x16x128xf32> to vector<16x16x128xf32>
    %76 = vector.shape_cast %73 : vector<16x16x128xf32> to vector<1x16x1x16x128xf32>
    tpu.vector_store %arg4[%c0_91, %c0_92, %c1_93, %c0_94, %c128_95], %76 {strides = array<i32>} : memref<1x16x2x16x256xf32, #tpu.memory_space<vmem>>, vector<1x16x1x16x128xf32>,
    return
  }
  func.func @transform_0(%arg0: i32) -> (i32, i32, i32, i32) {
    %c0_i32 = arith.constant 0 : i32
    %c0_i32_0 = arith.constant 0 : i32
    %c0_i32_1 = arith.constant 0 : i32
    %c0_i32_2 = arith.constant 0 : i32
    return %arg0, %c0_i32, %c0_i32_0, %c0_i32_1 : i32, i32, i32, i32
  }
  func.func @transform_1(%arg0: i32) -> (i32, i32, i32) {
    %c0_i32 = arith.constant 0 : i32
    %c0_i32_0 = arith.constant 0 : i32
    %c0_i32_1 = arith.constant 0 : i32
    %c0_i32_2 = arith.constant 0 : i32
    return %c0_i32, %c0_i32_0, %c0_i32_1 : i32, i32, i32
  }
  func.func @transform_2(%arg0: i32) -> (i32, i32) {
    %c0_i32 = arith.constant 0 : i32
    %c0_i32_0 = arith.constant 0 : i32
    %c0_i32_1 = arith.constant 0 : i32
    return %c0_i32, %c0_i32_0 : i32, i32
  }
  func.func @transform_3(%arg0: i32) -> (i32, i32, i32, i32, i32) {
    %c0_i32 = arith.constant 0 : i32
    %c0_i32_0 = arith.constant 0 : i32
    %c0_i32_1 = arith.constant 0 : i32
    %c0_i32_2 = arith.constant 0 : i32
    %c0_i32_3 = arith.constant 0 : i32
    return %arg0, %c0_i32, %c0_i32_0, %c0_i32_1, %c0_i32_2 : i32, i32, i32, i32, i32
  }
}

</mosaic_0001>

<llo_original>
// kernel: fused_upsample.1
$region0: #{fused_upsample.1}
  #allocation0 [shape = 'u32[]', space=smem, size = 0x4, offset = 0x4, fixed_abs, tag = 'smem constant byte address 0x4 - core index']
  #allocation1 [shape = 'u32[144,128]{1,0:T(1,128)}', space=vmem, size = 0x12000, scoped, tag = 'internal scratch']
  %s0 = inlined_call_operand.vmem [shape: bf16[2,18,18,128], index: 0, kind: input, shape index: {}]
  %s1 = inlined_call_operand.vmem [shape: bf16[4,512,128], index: 1, kind: input, shape index: {}]
  %s2 = inlined_call_operand.vmem [shape: f32[1,128], index: 2, kind: input, shape index: {}]
  %s3 = inlined_call_operand.vmem [shape: f32[2,16,2,16,256], index: 3, kind: output, shape index: {}]
  %s4 = sld [smem:[#allocation0]]
  $region45: #{fused_upsample.1} parent=0
    _
  %s6 = ssub.s32 1, %s4
  %s7 = scalar_select 0, %s6, %s4
  loop: start=0, step=1, limit=4
  $region2: #{fused_upsample.1} parent=0 // loop_pre_header
    _
  $region3: #{fused_upsample.1} parent=0 // loop_header
    %s9 = sphi 0, %s13
    %p10 = scmp.ge.s32.totalorder %s9, 4
    %s19 = sphi 0, %s21
    %s22 = sphi 0, %s19
    %s23 = sphi 0, %s22
    %s39 = sphi 0, %s23
    %s43 = sphi 0, %s43
    %s45 = sphi 0, %s43
    %s46 = sphi 0, %s45
    %s60 = sphi 0, %s46
    %s64 = sphi 0, %s64
    %s66 = sphi 0, %s64
    %s67 = sphi 0, %s66
    %s81 = sphi 0, %s67
    %s87 = sphi 0, %s89
    %s90 = sphi 0, %s87
    %s91 = sphi 0, %s90
    %s107 = sphi 0, %s91
  $region4: #{fused_upsample.1} parent=0 // loop_header_branch
    %12 = sbr.rel (%p10) target = $region8
  $region5: #{fused_upsample.1} parent=0 // loop_body
    %s14 = ssub.s32 %s9, 1
    %s15 = ssub.s32 %s9, 2
    %s16 = sadd.s32 %s9, 1
    %s17 = ssub.s32 %s9, %s16
    %p18 = scmp.eq.s32.totalorder %s17, 0
    %s20 = sadd.s32 %s19, 1
    %s21 = scalar_select %p18, %s19, %s20
    %p24 = pneg %p18
    %p25 = scmp.eq.s32.totalorder %s9, 1
    %p26 = por %p24, %p25
    %p27 = scmp.ne.s32.totalorder %s19, %s22
    %p28 = scmp.eq.s32.totalorder %s9, 0
    %p29 = por %p27, %p28
    %p30 = scmp.ne.s32.totalorder %s19, %s22
    %p31 = scmp.eq.s32.totalorder %s14, 1
    %p32 = por %p30, %p31
    %p33 = scmp.ne.s32.totalorder %s22, %s23
    %p34 = scmp.eq.s32.totalorder %s14, 0
    %p35 = por %p33, %p34
    %p36 = scmp.ne.s32.totalorder %s22, %s23
    %p37 = scmp.eq.s32.totalorder %s15, 1
    %p38 = por %p36, %p37
    %p40 = scmp.ne.s32.totalorder %s23, %s39
    %p41 = scmp.eq.s32.totalorder %s15, 0
    %p42 = por %p40, %p41
    %s44 = sadd.s32 %s43, 1
    %p47 = scmp.eq.s32.totalorder %s9, 1
    %p48 = scmp.ne.s32.totalorder %s43, %s45
    %p49 = scmp.eq.s32.totalorder %s9, 0
    %p50 = por %p48, %p49
    %p51 = scmp.ne.s32.totalorder %s43, %s45
    %p52 = scmp.eq.s32.totalorder %s14, 1
    %p53 = por %p51, %p52
    %p54 = scmp.ne.s32.totalorder %s45, %s46
    %p55 = scmp.eq.s32.totalorder %s14, 0
    %p56 = por %p54, %p55
    %p57 = scmp.ne.s32.totalorder %s45, %s46
    %p58 = scmp.eq.s32.totalorder %s15, 1
    %p59 = por %p57, %p58
    %p61 = scmp.ne.s32.totalorder %s46, %s60
    %p62 = scmp.eq.s32.totalorder %s15, 0
    %p63 = por %p61, %p62
    %s65 = sadd.s32 %s64, 1
    %p68 = scmp.eq.s32.totalorder %s9, 1
    %p69 = scmp.ne.s32.totalorder %s64, %s66
    %p70 = scmp.eq.s32.totalorder %s9, 0
    %p71 = por %p69, %p70
    %p72 = scmp.ne.s32.totalorder %s64, %s66
    %p73 = scmp.eq.s32.totalorder %s14, 1
    %p74 = por %p72, %p73
    %p75 = scmp.ne.s32.totalorder %s66, %s67
    %p76 = scmp.eq.s32.totalorder %s14, 0
    %p77 = por %p75, %p76
    %p78 = scmp.ne.s32.totalorder %s66, %s67
    %p79 = scmp.eq.s32.totalorder %s15, 1
    %p80 = por %p78, %p79
    %p82 = scmp.ne.s32.totalorder %s67, %s81
    %p83 = scmp.eq.s32.totalorder %s15, 0
    %p84 = por %p82, %p83
    %s85 = ssub.s32 %s9, %s16
    %p86 = scmp.eq.s32.totalorder %s85, 0
    %s88 = sadd.s32 %s87, 1
    %s89 = scalar_select %p86, %s87, %s88
    %p92 = pneg %p86
    %p93 = scmp.eq.s32.totalorder %s9, 1
    %p94 = por %p92, %p93
    %p95 = scmp.ne.s32.totalorder %s87, %s90
    %p96 = scmp.eq.s32.totalorder %s9, 0
    %p97 = por %p95, %p96
    %p98 = scmp.ne.s32.totalorder %s87, %s90
    %p99 = scmp.eq.s32.totalorder %s14, 1
    %p100 = por %p98, %p99
    %p101 = scmp.ne.s32.totalorder %s90, %s91
    %p102 = scmp.eq.s32.totalorder %s14, 0
    %p103 = por %p101, %p102
    %p104 = scmp.ne.s32.totalorder %s90, %s91
    %p105 = scmp.eq.s32.totalorder %s15, 1
    %p106 = por %p104, %p105
    %p108 = scmp.ne.s32.totalorder %s91, %s107
    %p109 = scmp.eq.s32.totalorder %s15, 0
    %p110 = por %p108, %p109
    %p111 = scmp.le.s32.totalorder 1, %s9
    %p112 = scmp.lt.s32.totalorder %s9, 3
    %p113 = pnand %p111, %p112
    %p114 = pneg %p113
    // Predicated region
    $region9: #{fused_upsample.1} parent=5 // pred_check
      _
    $region10: #{fused_upsample.1} parent=5 // pred_check_branch
      %116 = sbr.rel (%p113) target = $region12
    $region11: #{fused_upsample.1} parent=5 // pred_region
      %s117 = ssub.s32 %s9, 1
      // Predicated region
      $region13: #{fused_upsample.1} parent=11 // pred_check
        %p118 = pneg %p56
      $region14: #{fused_upsample.1} parent=11 // pred_check_branch
        %120 = sbr.rel (%p118) target = $region16
      $region15: #{fused_upsample.1} parent=11 // pred_region
        _
      $region16: #{fused_upsample.1} parent=11 // pred_fallthru
        _
      // Predicated region
      $region17: #{fused_upsample.1} parent=11 // pred_check
        %p121 = pneg %p77
      $region18: #{fused_upsample.1} parent=11 // pred_check_branch
        %123 = sbr.rel (%p121) target = $region20
      $region19: #{fused_upsample.1} parent=11 // pred_region
        _
      $region20: #{fused_upsample.1} parent=11 // pred_fallthru
        _
    $region12: #{fused_upsample.1} parent=5 // pred_fallthru
      _
    %p124 = scmp.lt.s32.totalorder %s9, 2
    // Predicated region
    $region21: #{fused_upsample.1} parent=5 // pred_check
      %p125 = pneg %p124
    $region22: #{fused_upsample.1} parent=5 // pred_check_branch
      %127 = sbr.rel (%p125) target = $region24
    $region23: #{fused_upsample.1} parent=5 // pred_region
      // Predicated region
      $region25: #{fused_upsample.1} parent=23 // pred_check
        %p128 = pneg %p29
      $region26: #{fused_upsample.1} parent=23 // pred_check_branch
        %130 = sbr.rel (%p128) target = $region28
      $region27: #{fused_upsample.1} parent=23 // pred_region
        %p131 = scmp.lt.s32.totalorder %s9, 1
        %s132 = scalar_select %p131, %s9, 1
        %s133 = smul.addr %s132, 54
        %s134 = smul.addr %s133, 4
        %s135 = scalar_lea.vmem %s0, %s134
      $region28: #{fused_upsample.1} parent=23 // pred_fallthru
        _
    $region24: #{fused_upsample.1} parent=5 // pred_fallthru
      _
    %p136 = scmp.le.s32.totalorder 1, %s9
    %p137 = scmp.lt.s32.totalorder %s9, 3
    %p138 = pnand %p136, %p137
    %p139 = pneg %p138
    // Predicated region
    $region29: #{fused_upsample.1} parent=5 // pred_check
      _
    $region30: #{fused_upsample.1} parent=5 // pred_check_branch
      %141 = sbr.rel (%p138) target = $region32
    $region31: #{fused_upsample.1} parent=5 // pred_region
      %s142 = ssub.s32 %s9, 1
      %p143 = scmp.lt.s32.totalorder %s14, 1
      %s144 = scalar_select %p143, %s14, 1
      %s145 = smul.addr %s144, 54
      %s146 = smul.addr %s145, 4
      %s147 = scalar_lea.vmem %s0, %s146
      %p148 = pneg %p35
      %p149 = pneg %p32
      %p150 = pneg %p56
      %p151 = pneg %p53
      %p152 = pneg %p77
      %p153 = pneg %p74
      %p154 = pneg %p103
      %p155 = pneg %p100
      %p156 = scmp.lt.s32.totalorder %s14, 1
      %s157 = scalar_select %p156, %s14, 1
      %s158 = smul.addr %s157, 128
      %s159 = smul.addr %s158, 8
      %s160 = scalar_lea.vmem %s3, %s159
      %p161 = scmp.lt.s32.totalorder %s14, 1
      %s162 = scalar_select %p161, %s14, 1
      %s163 = smul.addr %s162, 54
      %s164 = smul.addr %s163, 4
      %s165 = scalar_lea.vmem %s0, %s164
      %p166 = scmp.lt.s32.totalorder %s14, 1
      %s167 = scalar_select %p166, %s14, 1
      %s168 = smul.addr %s167, 128
      %s169 = smul.addr %s168, 8
      %s170 = scalar_lea.vmem %s3, %s169
      %v172 = vld [vmem:[%s2] sm:$0x1]
      %v173 = vld [vmem:[%s165] sm:$0xf]
      %v174 = vld [vmem:[%s165 + $0x4] sm:$0xf]
      %v175 = vld [vmem:[%s165 + $0xc] sm:$0xf]
      %v176 = vld [vmem:[%s165 + $0x10] sm:$0xf]
      %v177 = vld [vmem:[%s165 + $0x18] sm:$0xf]
      %v178 = vld [vmem:[%s165 + $0x1c] sm:$0xf]
      %v179 = vld [vmem:[%s165 + $0x24] sm:$0xf]
      %v180 = vld [vmem:[%s165 + $0x28] sm:$0xf]
      %v181 = vld [vmem:[%s165 + $0x30] sm:$0xf]
      %v182 = vld [vmem:[%s165 + $0x34] sm:$0xf]
      %v183 = vld [vmem:[%s165 + $0x3c] sm:$0xf]
      %v184 = vld [vmem:[%s165 + $0x40] sm:$0xf]
      %v185 = vld [vmem:[%s165 + $0x48] sm:$0xf]
      %v186 = vld [vmem:[%s165 + $0x4c] sm:$0xf]
      %v187 = vld [vmem:[%s165 + $0x54] sm:$0xf]
      %v188 = vld [vmem:[%s165 + $0x58] sm:$0xf]
      %v189 = vld [vmem:[%s165 + $0x60] sm:$0xf]
      %v190 = vld [vmem:[%s165 + $0x64] sm:$0xf]
      %v191 = vld [vmem:[%s165 + $0x6c] sm:$0xf]
      %v192 = vld [vmem:[%s165 + $0x70] sm:$0xf]
      %v193 = vld [vmem:[%s165 + $0x78] sm:$0xf]
      %v194 = vld [vmem:[%s165 + $0x7c] sm:$0xf]
      %v195 = vld [vmem:[%s165 + $0x84] sm:$0xf]
      %v196 = vld [vmem:[%s165 + $0x88] sm:$0xf]
      %v197 = vld [vmem:[%s165 + $0x90] sm:$0xf]
      %v198 = vld [vmem:[%s165 + $0x94] sm:$0xf]
      %v199 = vld [vmem:[%s165 + $0x9c] sm:$0xf]
      %v200 = vld [vmem:[%s165 + $0xa0] sm:$0xf]
      %v201 = vld [vmem:[%s165 + $0xa8] sm:$0xf]
      %v202 = vld [vmem:[%s165 + $0xac] sm:$0xf]
      %v203 = vld [vmem:[%s165 + $0xb4] sm:$0xf]
      %v204 = vld [vmem:[%s165 + $0xb8] sm:$0xf]
      %v205 = vld [vmem:[%s165 + $0x8] sm:$0x1]
      %v206 = vld [vmem:[%s165 + $0x14] sm:$0x1]
      %v207 = vld [vmem:[%s165 + $0x20] sm:$0x1]
      %v208 = vld [vmem:[%s165 + $0x2c] sm:$0x1]
      %v209 = vld [vmem:[%s165 + $0x38] sm:$0x1]
      %v210 = vld [vmem:[%s165 + $0x44] sm:$0x1]
      %v211 = vld [vmem:[%s165 + $0x50] sm:$0x1]
      %v212 = vld [vmem:[%s165 + $0x5c] sm:$0x1]
      %v213 = vld [vmem:[%s165 + $0x68] sm:$0x1]
      %v214 = vld [vmem:[%s165 + $0x74] sm:$0x1]
      %v215 = vld [vmem:[%s165 + $0x80] sm:$0x1]
      %v216 = vld [vmem:[%s165 + $0x8c] sm:$0x1]
      %v217 = vld [vmem:[%s165 + $0x98] sm:$0x1]
      %v218 = vld [vmem:[%s165 + $0xa4] sm:$0x1]
      %v219 = vld [vmem:[%s165 + $0xb0] sm:$0x1]
      %v220 = vld [vmem:[%s165 + $0xbc] sm:$0x1]
      %s221 = scalar_lea.vmem %s165, 12
      %v222 = vld [vmem:[%s221] sm:$0xf]
      %v223 = vld [vmem:[%s221 + $0x4] sm:$0xf]
      %v224 = vld [vmem:[%s221 + $0xc] sm:$0xf]
      %v225 = vld [vmem:[%s221 + $0x10] sm:$0xf]
      %v226 = vld [vmem:[%s221 + $0x18] sm:$0xf]
      %v227 = vld [vmem:[%s221 + $0x1c] sm:$0xf]
      %v228 = vld [vmem:[%s221 + $0x24] sm:$0xf]
      %v229 = vld [vmem:[%s221 + $0x28] sm:$0xf]
      %v230 = vld [vmem:[%s221 + $0x30] sm:$0xf]
      %v231 = vld [vmem:[%s221 + $0x34] sm:$0xf]
      %v232 = vld [vmem:[%s221 + $0x3c] sm:$0xf]
      %v233 = vld [vmem:[%s221 + $0x40] sm:$0xf]
      %v234 = vld [vmem:[%s221 + $0x48] sm:$0xf]
      %v235 = vld [vmem:[%s221 + $0x4c] sm:$0xf]
      %v236 = vld [vmem:[%s221 + $0x54] sm:$0xf]
      %v237 = vld [vmem:[%s221 + $0x58] sm:$0xf]
      %v238 = vld [vmem:[%s221 + $0x60] sm:$0xf]
      %v239 = vld [vmem:[%s221 + $0x64] sm:$0xf]
      %v240 = vld [vmem:[%s221 + $0x6c] sm:$0xf]
      %v241 = vld [vmem:[%s221 + $0x70] sm:$0xf]
      %v242 = vld [vmem:[%s221 + $0x78] sm:$0xf]
      %v243 = vld [vmem:[%s221 + $0x7c] sm:$0xf]
      %v244 = vld [vmem:[%s221 + $0x84] sm:$0xf]
      %v245 = vld [vmem:[%s221 + $0x88] sm:$0xf]
      %v246 = vld [vmem:[%s221 + $0x90] sm:$0xf]
      %v247 = vld [vmem:[%s221 + $0x94] sm:$0xf]
      %v248 = vld [vmem:[%s221 + $0x9c] sm:$0xf]
      %v249 = vld [vmem:[%s221 + $0xa0] sm:$0xf]
      %v250 = vld [vmem:[%s221 + $0xa8] sm:$0xf]
      %v251 = vld [vmem:[%s221 + $0xac] sm:$0xf]
      %v252 = vld [vmem:[%s221 + $0xb4] sm:$0xf]
      %v253 = vld [vmem:[%s221 + $0xb8] sm:$0xf]
      %v254 = vld [vmem:[%s221 + $0x8] sm:$0x1]
      %v255 = vld [vmem:[%s221 + $0x14] sm:$0x1]
      %v256 = vld [vmem:[%s221 + $0x20] sm:$0x1]
      %v257 = vld [vmem:[%s221 + $0x2c] sm:$0x1]
      %v258 = vld [vmem:[%s221 + $0x38] sm:$0x1]
      %v259 = vld [vmem:[%s221 + $0x44] sm:$0x1]
      %v260 = vld [vmem:[%s221 + $0x50] sm:$0x1]
      %v261 = vld [vmem:[%s221 + $0x5c] sm:$0x1]
      %v262 = vld [vmem:[%s221 + $0x68] sm:$0x1]
      %v263 = vld [vmem:[%s221 + $0x74] sm:$0x1]
      %v264 = vld [vmem:[%s221 + $0x80] sm:$0x1]
      %v265 = vld [vmem:[%s221 + $0x8c] sm:$0x1]
      %v266 = vld [vmem:[%s221 + $0x98] sm:$0x1]
      %v267 = vld [vmem:[%s221 + $0xa4] sm:$0x1]
      %v268 = vld [vmem:[%s221 + $0xb0] sm:$0x1]
      %v269 = vld [vmem:[%s221 + $0xbc] sm:$0x1]
      %v302 = vunpack.c.l.b16 %v173
      %v303 = vunpack.c.l.b16 %v174
      %v304 = vunpack.c.l.b16 %v175
      %v305 = vunpack.c.l.b16 %v176
      %v306 = vunpack.c.l.b16 %v177
      %v307 = vunpack.c.l.b16 %v178
      %v308 = vunpack.c.l.b16 %v179
      %v309 = vunpack.c.l.b16 %v180
      %v310 = vunpack.c.l.b16 %v181
      %v311 = vunpack.c.l.b16 %v182
      %v312 = vunpack.c.l.b16 %v183
      %v313 = vunpack.c.l.b16 %v184
      %v314 = vunpack.c.l.b16 %v185
      %v315 = vunpack.c.l.b16 %v186
      %v316 = vunpack.c.l.b16 %v187
      %v317 = vunpack.c.l.b16 %v188
      %v318 = vunpack.c.l.b16 %v189
      %v319 = vunpack.c.l.b16 %v190
      %v320 = vunpack.c.l.b16 %v191
      %v321 = vunpack.c.l.b16 %v192
      %v322 = vunpack.c.l.b16 %v193
      %v323 = vunpack.c.l.b16 %v194
      %v324 = vunpack.c.l.b16 %v195
      %v325 = vunpack.c.l.b16 %v196
      %v326 = vunpack.c.l.b16 %v197
      %v327 = vunpack.c.l.b16 %v198
      %v328 = vunpack.c.l.b16 %v199
      %v329 = vunpack.c.l.b16 %v200
      %v330 = vunpack.c.l.b16 %v201
      %v331 = vunpack.c.l.b16 %v202
      %v332 = vunpack.c.l.b16 %v203
      %v333 = vunpack.c.l.b16 %v204
      %v334 = vpack.c.b16 %v303, %v302
      %v335 = vpack.c.b16 %v305, %v304
      %v336 = vpack.c.b16 %v307, %v306
      %v337 = vpack.c.b16 %v309, %v308
      %v338 = vpack.c.b16 %v311, %v310
      %v339 = vpack.c.b16 %v313, %v312
      %v340 = vpack.c.b16 %v315, %v314
      %v341 = vpack.c.b16 %v317, %v316
      %v342 = vpack.c.b16 %v319, %v318
      %v343 = vpack.c.b16 %v321, %v320
      %v344 = vpack.c.b16 %v323, %v322
      %v345 = vpack.c.b16 %v325, %v324
      %v346 = vpack.c.b16 %v327, %v326
      %v347 = vpack.c.b16 %v329, %v328
      %v348 = vpack.c.b16 %v331, %v330
      %v349 = vpack.c.b16 %v333, %v332
      %v382 = vunpack.c.l.b16 %v205
      %v383 = vunpack.c.l.b16 %v206
      %v384 = vunpack.c.l.b16 %v207
      %v385 = vunpack.c.l.b16 %v208
      %v386 = vunpack.c.l.b16 %v209
      %v387 = vunpack.c.l.b16 %v210
      %v388 = vunpack.c.l.b16 %v211
      %v389 = vunpack.c.l.b16 %v212
      %v390 = vunpack.c.l.b16 %v213
      %v391 = vunpack.c.l.b16 %v214
      %v392 = vunpack.c.l.b16 %v215
      %v393 = vunpack.c.l.b16 %v216
      %v394 = vunpack.c.l.b16 %v217
      %v395 = vunpack.c.l.b16 %v218
      %v396 = vunpack.c.l.b16 %v219
      %v397 = vunpack.c.l.b16 %v220
      %v398 = vpack.c.b16 %v382, %v382
      %v399 = vpack.c.b16 %v383, %v383
      %v400 = vpack.c.b16 %v384, %v384
      %v401 = vpack.c.b16 %v385, %v385
      %v402 = vpack.c.b16 %v386, %v386
      %v403 = vpack.c.b16 %v387, %v387
      %v404 = vpack.c.b16 %v388, %v388
      %v405 = vpack.c.b16 %v389, %v389
      %v406 = vpack.c.b16 %v390, %v390
      %v407 = vpack.c.b16 %v391, %v391
      %v408 = vpack.c.b16 %v392, %v392
      %v409 = vpack.c.b16 %v393, %v393
      %v410 = vpack.c.b16 %v394, %v394
      %v411 = vpack.c.b16 %v395, %v395
      %v412 = vpack.c.b16 %v396, %v396
      %v413 = vpack.c.b16 %v397, %v397
      %vm414 = vsmask.f32 7424
      %v416 = vshrl.u32 %v334, 16
      %v418 = vshll.u32 %v334, 16
      %v420 = vrot.slane %v418, 1
      %v421 = vor.u32 %v416, %v420
      %v423 = vshll.u32 %v398, 16
      %v425 = vrot.slane %v423, 1
      %v426 = vsel %vm414, %v421, %v425
      %v428 = vshrl.u32 %v335, 16
      %v430 = vshll.u32 %v335, 16
      %v432 = vrot.slane %v430, 1
      %v433 = vor.u32 %v428, %v432
      %v435 = vshll.u32 %v399, 16
      %v437 = vrot.slane %v435, 1
      %v438 = vsel %vm414, %v433, %v437
      %v440 = vshrl.u32 %v336, 16
      %v442 = vshll.u32 %v336, 16
      %v444 = vrot.slane %v442, 1
      %v445 = vor.u32 %v440, %v444
      %v447 = vshll.u32 %v400, 16
      %v449 = vrot.slane %v447, 1
      %v450 = vsel %vm414, %v445, %v449
      %v452 = vshrl.u32 %v337, 16
      %v454 = vshll.u32 %v337, 16
      %v456 = vrot.slane %v454, 1
      %v457 = vor.u32 %v452, %v456
      %v459 = vshll.u32 %v401, 16
      %v461 = vrot.slane %v459, 1
      %v462 = vsel %vm414, %v457, %v461
      %v464 = vshrl.u32 %v338, 16
      %v466 = vshll.u32 %v338, 16
      %v468 = vrot.slane %v466, 1
      %v469 = vor.u32 %v464, %v468
      %v471 = vshll.u32 %v402, 16
      %v473 = vrot.slane %v471, 1
      %v474 = vsel %vm414, %v469, %v473
      %v476 = vshrl.u32 %v339, 16
      %v478 = vshll.u32 %v339, 16
      %v480 = vrot.slane %v478, 1
      %v481 = vor.u32 %v476, %v480
      %v483 = vshll.u32 %v403, 16
      %v485 = vrot.slane %v483, 1
      %v486 = vsel %vm414, %v481, %v485
      %v488 = vshrl.u32 %v340, 16
      %v490 = vshll.u32 %v340, 16
      %v492 = vrot.slane %v490, 1
      %v493 = vor.u32 %v488, %v492
      %v495 = vshll.u32 %v404, 16
      %v497 = vrot.slane %v495, 1
      %v498 = vsel %vm414, %v493, %v497
      %v500 = vshrl.u32 %v341, 16
      %v502 = vshll.u32 %v341, 16
      %v504 = vrot.slane %v502, 1
      %v505 = vor.u32 %v500, %v504
      %v507 = vshll.u32 %v405, 16
      %v509 = vrot.slane %v507, 1
      %v510 = vsel %vm414, %v505, %v509
      %v512 = vshrl.u32 %v342, 16
      %v514 = vshll.u32 %v342, 16
      %v516 = vrot.slane %v514, 1
      %v517 = vor.u32 %v512, %v516
      %v519 = vshll.u32 %v406, 16
      %v521 = vrot.slane %v519, 1
      %v522 = vsel %vm414, %v517, %v521
      %v524 = vshrl.u32 %v343, 16
      %v526 = vshll.u32 %v343, 16
      %v528 = vrot.slane %v526, 1
      %v529 = vor.u32 %v524, %v528
      %v531 = vshll.u32 %v407, 16
      %v533 = vrot.slane %v531, 1
      %v534 = vsel %vm414, %v529, %v533
      %v536 = vshrl.u32 %v344, 16
      %v538 = vshll.u32 %v344, 16
      %v540 = vrot.slane %v538, 1
      %v541 = vor.u32 %v536, %v540
      %v543 = vshll.u32 %v408, 16
      %v545 = vrot.slane %v543, 1
      %v546 = vsel %vm414, %v541, %v545
      %v548 = vshrl.u32 %v345, 16
      %v550 = vshll.u32 %v345, 16
      %v552 = vrot.slane %v550, 1
      %v553 = vor.u32 %v548, %v552
      %v555 = vshll.u32 %v409, 16
      %v557 = vrot.slane %v555, 1
      %v558 = vsel %vm414, %v553, %v557
      %v560 = vshrl.u32 %v346, 16
      %v562 = vshll.u32 %v346, 16
      %v564 = vrot.slane %v562, 1
      %v565 = vor.u32 %v560, %v564
      %v567 = vshll.u32 %v410, 16
      %v569 = vrot.slane %v567, 1
      %v570 = vsel %vm414, %v565, %v569
      %v572 = vshrl.u32 %v347, 16
      %v574 = vshll.u32 %v347, 16
      %v576 = vrot.slane %v574, 1
      %v577 = vor.u32 %v572, %v576
      %v579 = vshll.u32 %v411, 16
      %v581 = vrot.slane %v579, 1
      %v582 = vsel %vm414, %v577, %v581
      %v584 = vshrl.u32 %v348, 16
      %v586 = vshll.u32 %v348, 16
      %v588 = vrot.slane %v586, 1
      %v589 = vor.u32 %v584, %v588
      %v591 = vshll.u32 %v412, 16
      %v593 = vrot.slane %v591, 1
      %v594 = vsel %vm414, %v589, %v593
      %v596 = vshrl.u32 %v349, 16
      %v598 = vshll.u32 %v349, 16
      %v600 = vrot.slane %v598, 1
      %v601 = vor.u32 %v596, %v600
      %v603 = vshll.u32 %v413, 16
      %v605 = vrot.slane %v603, 1
      %v606 = vsel %vm414, %v601, %v605
      %v655 = vunpack.c.l.b16 %v222
      %v656 = vunpack.c.l.b16 %v223
      %v657 = vunpack.c.l.b16 %v224
      %v658 = vunpack.c.l.b16 %v225
      %v659 = vunpack.c.l.b16 %v226
      %v660 = vunpack.c.l.b16 %v227
      %v661 = vunpack.c.l.b16 %v228
      %v662 = vunpack.c.l.b16 %v229
      %v663 = vunpack.c.l.b16 %v230
      %v664 = vunpack.c.l.b16 %v231
      %v665 = vunpack.c.l.b16 %v232
      %v666 = vunpack.c.l.b16 %v233
      %v667 = vunpack.c.l.b16 %v234
      %v668 = vunpack.c.l.b16 %v235
      %v669 = vunpack.c.l.b16 %v236
      %v670 = vunpack.c.l.b16 %v237
      %v671 = vunpack.c.l.b16 %v238
      %v672 = vunpack.c.l.b16 %v239
      %v673 = vunpack.c.l.b16 %v240
      %v674 = vunpack.c.l.b16 %v241
      %v675 = vunpack.c.l.b16 %v242
      %v676 = vunpack.c.l.b16 %v243
      %v677 = vunpack.c.l.b16 %v244
      %v678 = vunpack.c.l.b16 %v245
      %v679 = vunpack.c.l.b16 %v246
      %v680 = vunpack.c.l.b16 %v247
      %v681 = vunpack.c.l.b16 %v248
      %v682 = vunpack.c.l.b16 %v249
      %v683 = vunpack.c.l.b16 %v250
      %v684 = vunpack.c.l.b16 %v251
      %v685 = vunpack.c.l.b16 %v252
      %v686 = vunpack.c.l.b16 %v253
      %v687 = vpack.c.b16 %v656, %v655
      %v688 = vpack.c.b16 %v658, %v657
      %v689 = vpack.c.b16 %v660, %v659
      %v690 = vpack.c.b16 %v662, %v661
      %v691 = vpack.c.b16 %v664, %v663
      %v692 = vpack.c.b16 %v666, %v665
      %v693 = vpack.c.b16 %v668, %v667
      %v694 = vpack.c.b16 %v670, %v669
      %v695 = vpack.c.b16 %v672, %v671
      %v696 = vpack.c.b16 %v674, %v673
      %v697 = vpack.c.b16 %v676, %v675
      %v698 = vpack.c.b16 %v678, %v677
      %v699 = vpack.c.b16 %v680, %v679
      %v700 = vpack.c.b16 %v682, %v681
      %v701 = vpack.c.b16 %v684, %v683
      %v702 = vpack.c.b16 %v686, %v685
      %v735 = vunpack.c.l.b16 %v254
      %v736 = vunpack.c.l.b16 %v255
      %v737 = vunpack.c.l.b16 %v256
      %v738 = vunpack.c.l.b16 %v257
      %v739 = vunpack.c.l.b16 %v258
      %v740 = vunpack.c.l.b16 %v259
      %v741 = vunpack.c.l.b16 %v260
      %v742 = vunpack.c.l.b16 %v261
      %v743 = vunpack.c.l.b16 %v262
      %v744 = vunpack.c.l.b16 %v263
      %v745 = vunpack.c.l.b16 %v264
      %v746 = vunpack.c.l.b16 %v265
      %v747 = vunpack.c.l.b16 %v266
      %v748 = vunpack.c.l.b16 %v267
      %v749 = vunpack.c.l.b16 %v268
      %v750 = vunpack.c.l.b16 %v269
      %v751 = vpack.c.b16 %v735, %v735
      %v752 = vpack.c.b16 %v736, %v736
      %v753 = vpack.c.b16 %v737, %v737
      %v754 = vpack.c.b16 %v738, %v738
      %v755 = vpack.c.b16 %v739, %v739
      %v756 = vpack.c.b16 %v740, %v740
      %v757 = vpack.c.b16 %v741, %v741
      %v758 = vpack.c.b16 %v742, %v742
      %v759 = vpack.c.b16 %v743, %v743
      %v760 = vpack.c.b16 %v744, %v744
      %v761 = vpack.c.b16 %v745, %v745
      %v762 = vpack.c.b16 %v746, %v746
      %v763 = vpack.c.b16 %v747, %v747
      %v764 = vpack.c.b16 %v748, %v748
      %v765 = vpack.c.b16 %v749, %v749
      %v766 = vpack.c.b16 %v750, %v750
      %v768 = vshrl.u32 %v687, 16
      %v770 = vshll.u32 %v687, 16
      %v772 = vrot.slane %v770, 1
      %v773 = vor.u32 %v768, %v772
      %v775 = vshll.u32 %v751, 16
      %v777 = vrot.slane %v775, 1
      %v778 = vsel %vm414, %v773, %v777
      %v780 = vshrl.u32 %v688, 16
      %v782 = vshll.u32 %v688, 16
      %v784 = vrot.slane %v782, 1
      %v785 = vor.u32 %v780, %v784
      %v787 = vshll.u32 %v752, 16
      %v789 = vrot.slane %v787, 1
      %v790 = vsel %vm414, %v785, %v789
      %v792 = vshrl.u32 %v689, 16
      %v794 = vshll.u32 %v689, 16
      %v796 = vrot.slane %v794, 1
      %v797 = vor.u32 %v792, %v796
      %v799 = vshll.u32 %v753, 16
      %v801 = vrot.slane %v799, 1
      %v802 = vsel %vm414, %v797, %v801
      %v804 = vshrl.u32 %v690, 16
      %v806 = vshll.u32 %v690, 16
      %v808 = vrot.slane %v806, 1
      %v809 = vor.u32 %v804, %v808
      %v811 = vshll.u32 %v754, 16
      %v813 = vrot.slane %v811, 1
      %v814 = vsel %vm414, %v809, %v813
      %v816 = vshrl.u32 %v691, 16
      %v818 = vshll.u32 %v691, 16
      %v820 = vrot.slane %v818, 1
      %v821 = vor.u32 %v816, %v820
      %v823 = vshll.u32 %v755, 16
      %v825 = vrot.slane %v823, 1
      %v826 = vsel %vm414, %v821, %v825
      %v828 = vshrl.u32 %v692, 16
      %v830 = vshll.u32 %v692, 16
      %v832 = vrot.slane %v830, 1
      %v833 = vor.u32 %v828, %v832
      %v835 = vshll.u32 %v756, 16
      %v837 = vrot.slane %v835, 1
      %v838 = vsel %vm414, %v833, %v837
      %v840 = vshrl.u32 %v693, 16
      %v842 = vshll.u32 %v693, 16
      %v844 = vrot.slane %v842, 1
      %v845 = vor.u32 %v840, %v844
      %v847 = vshll.u32 %v757, 16
      %v849 = vrot.slane %v847, 1
      %v850 = vsel %vm414, %v845, %v849
      %v852 = vshrl.u32 %v694, 16
      %v854 = vshll.u32 %v694, 16
      %v856 = vrot.slane %v854, 1
      %v857 = vor.u32 %v852, %v856
      %v859 = vshll.u32 %v758, 16
      %v861 = vrot.slane %v859, 1
      %v862 = vsel %vm414, %v857, %v861
      %v864 = vshrl.u32 %v695, 16
      %v866 = vshll.u32 %v695, 16
      %v868 = vrot.slane %v866, 1
      %v869 = vor.u32 %v864, %v868
      %v871 = vshll.u32 %v759, 16
      %v873 = vrot.slane %v871, 1
      %v874 = vsel %vm414, %v869, %v873
      %v876 = vshrl.u32 %v696, 16
      %v878 = vshll.u32 %v696, 16
      %v880 = vrot.slane %v878, 1
      %v881 = vor.u32 %v876, %v880
      %v883 = vshll.u32 %v760, 16
      %v885 = vrot.slane %v883, 1
      %v886 = vsel %vm414, %v881, %v885
      %v888 = vshrl.u32 %v697, 16
      %v890 = vshll.u32 %v697, 16
      %v892 = vrot.slane %v890, 1
      %v893 = vor.u32 %v888, %v892
      %v895 = vshll.u32 %v761, 16
      %v897 = vrot.slane %v895, 1
      %v898 = vsel %vm414, %v893, %v897
      %v900 = vshrl.u32 %v698, 16
      %v902 = vshll.u32 %v698, 16
      %v904 = vrot.slane %v902, 1
      %v905 = vor.u32 %v900, %v904
      %v907 = vshll.u32 %v762, 16
      %v909 = vrot.slane %v907, 1
      %v910 = vsel %vm414, %v905, %v909
      %v912 = vshrl.u32 %v699, 16
      %v914 = vshll.u32 %v699, 16
      %v916 = vrot.slane %v914, 1
      %v917 = vor.u32 %v912, %v916
      %v919 = vshll.u32 %v763, 16
      %v921 = vrot.slane %v919, 1
      %v922 = vsel %vm414, %v917, %v921
      %v924 = vshrl.u32 %v700, 16
      %v926 = vshll.u32 %v700, 16
      %v928 = vrot.slane %v926, 1
      %v929 = vor.u32 %v924, %v928
      %v931 = vshll.u32 %v764, 16
      %v933 = vrot.slane %v931, 1
      %v934 = vsel %vm414, %v929, %v933
      %v936 = vshrl.u32 %v701, 16
      %v938 = vshll.u32 %v701, 16
      %v940 = vrot.slane %v938, 1
      %v941 = vor.u32 %v936, %v940
      %v943 = vshll.u32 %v765, 16
      %v945 = vrot.slane %v943, 1
      %v946 = vsel %vm414, %v941, %v945
      %v948 = vshrl.u32 %v702, 16
      %v950 = vshll.u32 %v702, 16
      %v952 = vrot.slane %v950, 1
      %v953 = vor.u32 %v948, %v952
      %v955 = vshll.u32 %v766, 16
      %v957 = vrot.slane %v955, 1
      %v958 = vsel %vm414, %v953, %v957
      %v975 = vld [vmem:[%s1] sm:$0xf]
      %v976 = vld [vmem:[%s1 + $0x4] sm:$0xf]
      %v977 = vld [vmem:[%s1 + $0x8] sm:$0xf]
      %v978 = vld [vmem:[%s1 + $0xc] sm:$0xf]
      %v979 = vld [vmem:[%s1 + $0x10] sm:$0xf]
      %v980 = vld [vmem:[%s1 + $0x14] sm:$0xf]
      %v981 = vld [vmem:[%s1 + $0x18] sm:$0xf]
      %v982 = vld [vmem:[%s1 + $0x1c] sm:$0xf]
      %v983 = vld [vmem:[%s1 + $0x20] sm:$0xf]
      %v984 = vld [vmem:[%s1 + $0x24] sm:$0xf]
      %v985 = vld [vmem:[%s1 + $0x28] sm:$0xf]
      %v986 = vld [vmem:[%s1 + $0x2c] sm:$0xf]
      %v987 = vld [vmem:[%s1 + $0x30] sm:$0xf]
      %v988 = vld [vmem:[%s1 + $0x34] sm:$0xf]
      %v989 = vld [vmem:[%s1 + $0x38] sm:$0xf]
      %v990 = vld [vmem:[%s1 + $0x3c] sm:$0xf]
      %v991 = vld [vmem:[%s1 + $0x40] sm:$0xf]
      %v992 = vld [vmem:[%s1 + $0x44] sm:$0xf]
      %v993 = vld [vmem:[%s1 + $0x48] sm:$0xf]
      %v994 = vld [vmem:[%s1 + $0x4c] sm:$0xf]
      %v995 = vld [vmem:[%s1 + $0x50] sm:$0xf]
      %v996 = vld [vmem:[%s1 + $0x54] sm:$0xf]
      %v997 = vld [vmem:[%s1 + $0x58] sm:$0xf]
      %v998 = vld [vmem:[%s1 + $0x5c] sm:$0xf]
      %v999 = vld [vmem:[%s1 + $0x60] sm:$0xf]
      %v1000 = vld [vmem:[%s1 + $0x64] sm:$0xf]
      %v1001 = vld [vmem:[%s1 + $0x68] sm:$0xf]
      %v1002 = vld [vmem:[%s1 + $0x6c] sm:$0xf]
      %v1003 = vld [vmem:[%s1 + $0x70] sm:$0xf]
      %v1004 = vld [vmem:[%s1 + $0x74] sm:$0xf]
      %v1005 = vld [vmem:[%s1 + $0x78] sm:$0xf]
      %v1006 = vld [vmem:[%s1 + $0x7c] sm:$0xf]
      %v1007 = vld [vmem:[%s1 + $0x80] sm:$0xf]
      %v1008 = vld [vmem:[%s1 + $0x84] sm:$0xf]
      %v1009 = vld [vmem:[%s1 + $0x88] sm:$0xf]
      %v1010 = vld [vmem:[%s1 + $0x8c] sm:$0xf]
      %v1011 = vld [vmem:[%s1 + $0x90] sm:$0xf]
      %v1012 = vld [vmem:[%s1 + $0x94] sm:$0xf]
      %v1013 = vld [vmem:[%s1 + $0x98] sm:$0xf]
      %v1014 = vld [vmem:[%s1 + $0x9c] sm:$0xf]
      %v1015 = vld [vmem:[%s1 + $0xa0] sm:$0xf]
      %v1016 = vld [vmem:[%s1 + $0xa4] sm:$0xf]
      %v1017 = vld [vmem:[%s1 + $0xa8] sm:$0xf]
      %v1018 = vld [vmem:[%s1 + $0xac] sm:$0xf]
      %v1019 = vld [vmem:[%s1 + $0xb0] sm:$0xf]
      %v1020 = vld [vmem:[%s1 + $0xb4] sm:$0xf]
      %v1021 = vld [vmem:[%s1 + $0xb8] sm:$0xf]
      %v1022 = vld [vmem:[%s1 + $0xbc] sm:$0xf]
      %v1023 = vld [vmem:[%s1 + $0xc0] sm:$0xf]
      %v1024 = vld [vmem:[%s1 + $0xc4] sm:$0xf]
      %v1025 = vld [vmem:[%s1 + $0xc8] sm:$0xf]
      %v1026 = vld [vmem:[%s1 + $0xcc] sm:$0xf]
      %v1027 = vld [vmem:[%s1 + $0xd0] sm:$0xf]
      %v1028 = vld [vmem:[%s1 + $0xd4] sm:$0xf]
      %v1029 = vld [vmem:[%s1 + $0xd8] sm:$0xf]
      %v1030 = vld [vmem:[%s1 + $0xdc] sm:$0xf]
      %v1031 = vld [vmem:[%s1 + $0xe0] sm:$0xf]
      %v1032 = vld [vmem:[%s1 + $0xe4] sm:$0xf]
      %v1033 = vld [vmem:[%s1 + $0xe8] sm:$0xf]
      %v1034 = vld [vmem:[%s1 + $0xec] sm:$0xf]
      %v1035 = vld [vmem:[%s1 + $0xf0] sm:$0xf]
      %v1036 = vld [vmem:[%s1 + $0xf4] sm:$0xf]
      %v1037 = vld [vmem:[%s1 + $0xf8] sm:$0xf]
      %v1038 = vld [vmem:[%s1 + $0xfc] sm:$0xf]
      %v1040 = vlaneseq
      %v1041 = vshrl.u32 %v1040, 7
      %v1042 = vsub.s32 0, %v1041
      %v1043 = vrot.slane %v172, %v1042
      %v1109 = vunpack.c.l.b16 %v975
      %v1110 = vunpack.c.l.b16 %v976
      %v1111 = vunpack.c.l.b16 %v977
      %v1112 = vunpack.c.l.b16 %v978
      %v1113 = vunpack.c.l.b16 %v979
      %v1114 = vunpack.c.l.b16 %v980
      %v1115 = vunpack.c.l.b16 %v981
      %v1116 = vunpack.c.l.b16 %v982
      %v1117 = vunpack.c.l.b16 %v983
      %v1118 = vunpack.c.l.b16 %v984
      %v1119 = vunpack.c.l.b16 %v985
      %v1120 = vunpack.c.l.b16 %v986
      %v1121 = vunpack.c.l.b16 %v987
      %v1122 = vunpack.c.l.b16 %v988
      %v1123 = vunpack.c.l.b16 %v989
      %v1124 = vunpack.c.l.b16 %v990
      %v1125 = vunpack.c.l.b16 %v991
      %v1126 = vunpack.c.l.b16 %v992
      %v1127 = vunpack.c.l.b16 %v993
      %v1128 = vunpack.c.l.b16 %v994
      %v1129 = vunpack.c.l.b16 %v995
      %v1130 = vunpack.c.l.b16 %v996
      %v1131 = vunpack.c.l.b16 %v997
      %v1132 = vunpack.c.l.b16 %v998
      %v1133 = vunpack.c.l.b16 %v999
      %v1134 = vunpack.c.l.b16 %v1000
      %v1135 = vunpack.c.l.b16 %v1001
      %v1136 = vunpack.c.l.b16 %v1002
      %v1137 = vunpack.c.l.b16 %v1003
      %v1138 = vunpack.c.l.b16 %v1004
      %v1139 = vunpack.c.l.b16 %v1005
      %v1140 = vunpack.c.l.b16 %v1006
      %v1141 = vunpack.c.l.b16 %v1007
      %v1142 = vunpack.c.l.b16 %v1008
      %v1143 = vunpack.c.l.b16 %v1009
      %v1144 = vunpack.c.l.b16 %v1010
      %v1145 = vunpack.c.l.b16 %v1011
      %v1146 = vunpack.c.l.b16 %v1012
      %v1147 = vunpack.c.l.b16 %v1013
      %v1148 = vunpack.c.l.b16 %v1014
      %v1149 = vunpack.c.l.b16 %v1015
      %v1150 = vunpack.c.l.b16 %v1016
      %v1151 = vunpack.c.l.b16 %v1017
      %v1152 = vunpack.c.l.b16 %v1018
      %v1153 = vunpack.c.l.b16 %v1019
      %v1154 = vunpack.c.l.b16 %v1020
      %v1155 = vunpack.c.l.b16 %v1021
      %v1156 = vunpack.c.l.b16 %v1022
      %v1157 = vunpack.c.l.b16 %v1023
      %v1158 = vunpack.c.l.b16 %v1024
      %v1159 = vunpack.c.l.b16 %v1025
      %v1160 = vunpack.c.l.b16 %v1026
      %v1161 = vunpack.c.l.b16 %v1027
      %v1162 = vunpack.c.l.b16 %v1028
      %v1163 = vunpack.c.l.b16 %v1029
      %v1164 = vunpack.c.l.b16 %v1030
      %v1165 = vunpack.c.l.b16 %v1031
      %v1166 = vunpack.c.l.b16 %v1032
      %v1167 = vunpack.c.l.b16 %v1033
      %v1168 = vunpack.c.l.b16 %v1034
      %v1169 = vunpack.c.l.b16 %v1035
      %v1170 = vunpack.c.l.b16 %v1036
      %v1171 = vunpack.c.l.b16 %v1037
      %v1172 = vunpack.c.l.b16 %v1038
      %v1173 = vpack.c.b16 %v1110, %v1109
      %v1174 = vpack.c.b16 %v1112, %v1111
      %v1175 = vpack.c.b16 %v1114, %v1113
      %v1176 = vpack.c.b16 %v1116, %v1115
      %v1177 = vpack.c.b16 %v1118, %v1117
      %v1178 = vpack.c.b16 %v1120, %v1119
      %v1179 = vpack.c.b16 %v1122, %v1121
      %v1180 = vpack.c.b16 %v1124, %v1123
      %v1181 = vpack.c.b16 %v1126, %v1125
      %v1182 = vpack.c.b16 %v1128, %v1127
      %v1183 = vpack.c.b16 %v1130, %v1129
      %v1184 = vpack.c.b16 %v1132, %v1131
      %v1185 = vpack.c.b16 %v1134, %v1133
      %v1186 = vpack.c.b16 %v1136, %v1135
      %v1187 = vpack.c.b16 %v1138, %v1137
      %v1188 = vpack.c.b16 %v1140, %v1139
      %v1189 = vpack.c.b16 %v1142, %v1141
      %v1190 = vpack.c.b16 %v1144, %v1143
      %v1191 = vpack.c.b16 %v1146, %v1145
      %v1192 = vpack.c.b16 %v1148, %v1147
      %v1193 = vpack.c.b16 %v1150, %v1149
      %v1194 = vpack.c.b16 %v1152, %v1151
      %v1195 = vpack.c.b16 %v1154, %v1153
      %v1196 = vpack.c.b16 %v1156, %v1155
      %v1197 = vpack.c.b16 %v1158, %v1157
      %v1198 = vpack.c.b16 %v1160, %v1159
      %v1199 = vpack.c.b16 %v1162, %v1161
      %v1200 = vpack.c.b16 %v1164, %v1163
      %v1201 = vpack.c.b16 %v1166, %v1165
      %v1202 = vpack.c.b16 %v1168, %v1167
      %v1203 = vpack.c.b16 %v1170, %v1169
      %v1204 = vpack.c.b16 %v1172, %v1171
      %1237 = vmatprep.subr.bf16.mxu0 0
      %1238 = vmatpush1.bf16.msra.mxu0 %v1180
      %1239 = vmatprep.subr.bf16.mxu0 0
      %1240 = vmatpush1.bf16.msra.mxu0 %v1179
      %1241 = vmatprep.subr.bf16.mxu0 0
      %1242 = vmatpush1.bf16.msra.mxu0 %v1178
      %1243 = vmatprep.subr.bf16.mxu0 0
      %1244 = vmatpush1.bf16.msra.mxu0 %v1177
      %1245 = vmatprep.subr.bf16.mxu0 0
      %1246 = vmatpush1.bf16.msra.mxu0 %v1176
      %1247 = vmatprep.subr.bf16.mxu0 0
      %1248 = vmatpush1.bf16.msra.mxu0 %v1175
      %1249 = vmatprep.subr.bf16.mxu0 0
      %1250 = vmatpush1.bf16.msra.mxu0 %v1174
      %1251 = vmatprep.subr.bf16.mxu0 0
      %1252 = vmatpush1.bf16.msra.mxu0 %v1173
      %1253 = vmatprep.subr.bf16.mxu0 0
      %1254 = vmatpush2.bf16.msra.mxu0 %v1188
      %1255 = vmatprep.subr.bf16.mxu0 0
      %1256 = vmatpush2.bf16.msra.mxu0 %v1187
      %1257 = vmatprep.subr.bf16.mxu0 0
      %1258 = vmatpush2.bf16.msra.mxu0 %v1186
      %1259 = vmatprep.subr.bf16.mxu0 0
      %1260 = vmatpush2.bf16.msra.mxu0 %v1185
      %1261 = vmatprep.subr.bf16.mxu0 0
      %1262 = vmatpush2.bf16.msra.mxu0 %v1184
      %1263 = vmatprep.subr.bf16.mxu0 0
      %1264 = vmatpush2.bf16.msra.mxu0 %v1183
      %1265 = vmatprep.subr.bf16.mxu0 0
      %1266 = vmatpush2.bf16.msra.mxu0 %v1182
      %1267 = vmatprep.subr.bf16.mxu0 0
      %1268 = vmatpush2.bf16.msra.mxu0 %v1181
      %1269 = vmatprep.mubr.bf16.mxu0 %v426
      %1270 = vmatmul.mubr.bf16.gmra.mxu0 %v334
      %v1271 = vpop.f32.mrf.mxu0
      %v1272 = vadd.f32 %v1043, %v1271
      %v1273 = vpop.f32.mrf.mxu0
      %v1274 = vpop.f32.mrf.mxu0
      %v1275 = vadd.f32 %v1043, %v1274
      %v1276 = vpop.f32.mrf.mxu0
      %1277 = vmatprep.mubr.bf16.mxu0 %v438
      %1278 = vmatmul.mubr.bf16.gmra.mxu0 %v335
      %v1279 = vpop.f32.mrf.mxu0
      %v1280 = vadd.f32 %v1043, %v1279
      %v1281 = vpop.f32.mrf.mxu0
      %v1282 = vpop.f32.mrf.mxu0
      %v1283 = vadd.f32 %v1043, %v1282
      %v1284 = vpop.f32.mrf.mxu0
      %1285 = vmatprep.mubr.bf16.mxu0 %v450
      %1286 = vmatmul.mubr.bf16.gmra.mxu0 %v336
      %v1287 = vpop.f32.mrf.mxu0
      %v1288 = vadd.f32 %v1043, %v1287
      %v1289 = vpop.f32.mrf.mxu0
      %v1290 = vpop.f32.mrf.mxu0
      %v1291 = vadd.f32 %v1043, %v1290
      %v1292 = vpop.f32.mrf.mxu0
      %1293 = vmatprep.mubr.bf16.mxu0 %v462
      %1294 = vmatmul.mubr.bf16.gmra.mxu0 %v337
      %v1295 = vpop.f32.mrf.mxu0
      %v1296 = vadd.f32 %v1043, %v1295
      %v1297 = vpop.f32.mrf.mxu0
      %v1298 = vpop.f32.mrf.mxu0
      %v1299 = vadd.f32 %v1043, %v1298
      %v1300 = vpop.f32.mrf.mxu0
      %1301 = vmatprep.mubr.bf16.mxu0 %v474
      %1302 = vmatmul.mubr.bf16.gmra.mxu0 %v338
      %v1303 = vpop.f32.mrf.mxu0
      %v1304 = vadd.f32 %v1043, %v1303
      %v1305 = vpop.f32.mrf.mxu0
      %v1306 = vpop.f32.mrf.mxu0
      %v1307 = vadd.f32 %v1043, %v1306
      %v1308 = vpop.f32.mrf.mxu0
      %1309 = vmatprep.mubr.bf16.mxu0 %v486
      %1310 = vmatmul.mubr.bf16.gmra.mxu0 %v339
      %v1311 = vpop.f32.mrf.mxu0
      %v1312 = vadd.f32 %v1043, %v1311
      %v1313 = vpop.f32.mrf.mxu0
      %v1314 = vpop.f32.mrf.mxu0
      %v1315 = vadd.f32 %v1043, %v1314
      %v1316 = vpop.f32.mrf.mxu0
      %1317 = vmatprep.mubr.bf16.mxu0 %v498
      %1318 = vmatmul.mubr.bf16.gmra.mxu0 %v340
      %v1319 = vpop.f32.mrf.mxu0
      %v1320 = vadd.f32 %v1043, %v1319
      %v1321 = vpop.f32.mrf.mxu0
      %v1322 = vpop.f32.mrf.mxu0
      %v1323 = vadd.f32 %v1043, %v1322
      %v1324 = vpop.f32.mrf.mxu0
      %1325 = vmatprep.mubr.bf16.mxu0 %v510
      %1326 = vmatmul.mubr.bf16.gmra.mxu0 %v341
      %v1327 = vpop.f32.mrf.mxu0
      %v1328 = vadd.f32 %v1043, %v1327
      %v1329 = vpop.f32.mrf.mxu0
      %v1330 = vpop.f32.mrf.mxu0
      %v1331 = vadd.f32 %v1043, %v1330
      %v1332 = vpop.f32.mrf.mxu0
      %1333 = vmatprep.mubr.bf16.mxu0 %v522
      %1334 = vmatmul.mubr.bf16.gmra.mxu0 %v342
      %v1335 = vpop.f32.mrf.mxu0
      %v1336 = vadd.f32 %v1043, %v1335
      %v1337 = vpop.f32.mrf.mxu0
      %v1338 = vpop.f32.mrf.mxu0
      %v1339 = vadd.f32 %v1043, %v1338
      %v1340 = vpop.f32.mrf.mxu0
      %1341 = vmatprep.mubr.bf16.mxu0 %v534
      %1342 = vmatmul.mubr.bf16.gmra.mxu0 %v343
      %v1343 = vpop.f32.mrf.mxu0
      %v1344 = vadd.f32 %v1043, %v1343
      %v1345 = vpop.f32.mrf.mxu0
      %v1346 = vpop.f32.mrf.mxu0
      %v1347 = vadd.f32 %v1043, %v1346
      %v1348 = vpop.f32.mrf.mxu0
      %1349 = vmatprep.mubr.bf16.mxu0 %v546
      %1350 = vmatmul.mubr.bf16.gmra.mxu0 %v344
      %v1351 = vpop.f32.mrf.mxu0
      %v1352 = vadd.f32 %v1043, %v1351
      %v1353 = vpop.f32.mrf.mxu0
      %v1354 = vpop.f32.mrf.mxu0
      %v1355 = vadd.f32 %v1043, %v1354
      %v1356 = vpop.f32.mrf.mxu0
      %1357 = vmatprep.mubr.bf16.mxu0 %v558
      %1358 = vmatmul.mubr.bf16.gmra.mxu0 %v345
      %v1359 = vpop.f32.mrf.mxu0
      %v1360 = vadd.f32 %v1043, %v1359
      %v1361 = vpop.f32.mrf.mxu0
      %v1362 = vpop.f32.mrf.mxu0
      %v1363 = vadd.f32 %v1043, %v1362
      %v1364 = vpop.f32.mrf.mxu0
      %1365 = vmatprep.mubr.bf16.mxu0 %v570
      %1366 = vmatmul.mubr.bf16.gmra.mxu0 %v346
      %v1367 = vpop.f32.mrf.mxu0
      %v1368 = vadd.f32 %v1043, %v1367
      %v1369 = vpop.f32.mrf.mxu0
      %v1370 = vpop.f32.mrf.mxu0
      %v1371 = vadd.f32 %v1043, %v1370
      %v1372 = vpop.f32.mrf.mxu0
      %1373 = vmatprep.mubr.bf16.mxu0 %v582
      %1374 = vmatmul.mubr.bf16.gmra.mxu0 %v347
      %v1375 = vpop.f32.mrf.mxu0
      %v1376 = vadd.f32 %v1043, %v1375
      %v1377 = vpop.f32.mrf.mxu0
      %v1378 = vpop.f32.mrf.mxu0
      %v1379 = vadd.f32 %v1043, %v1378
      %v1380 = vpop.f32.mrf.mxu0
      %1381 = vmatprep.mubr.bf16.mxu0 %v594
      %1382 = vmatmul.mubr.bf16.gmra.mxu0 %v348
      %v1383 = vpop.f32.mrf.mxu0
      %v1384 = vadd.f32 %v1043, %v1383
      %v1385 = vpop.f32.mrf.mxu0
      %v1386 = vpop.f32.mrf.mxu0
      %v1387 = vadd.f32 %v1043, %v1386
      %v1388 = vpop.f32.mrf.mxu0
      %1389 = vmatprep.mubr.bf16.mxu0 %v606
      %1390 = vmatmul.mubr.bf16.gmra.mxu0 %v349
      %v1391 = vpop.f32.mrf.mxu0
      %v1392 = vadd.f32 %v1043, %v1391
      %v1393 = vpop.f32.mrf.mxu0
      %v1394 = vpop.f32.mrf.mxu0
      %v1395 = vadd.f32 %v1043, %v1394
      %v1396 = vpop.f32.mrf.mxu0
      %1397 = vdwg.mxu0
      %1398 = vmatprep.subr.bf16.mxu0 0
      %1399 = vmatpush1.bf16.msra.mxu0 %v1196
      %1400 = vmatprep.subr.bf16.mxu0 0
      %1401 = vmatpush1.bf16.msra.mxu0 %v1195
      %1402 = vmatprep.subr.bf16.mxu0 0
      %1403 = vmatpush1.bf16.msra.mxu0 %v1194
      %1404 = vmatprep.subr.bf16.mxu0 0
      %1405 = vmatpush1.bf16.msra.mxu0 %v1193
      %1406 = vmatprep.subr.bf16.mxu0 0
      %1407 = vmatpush1.bf16.msra.mxu0 %v1192
      %1408 = vmatprep.subr.bf16.mxu0 0
      %1409 = vmatpush1.bf16.msra.mxu0 %v1191
      %1410 = vmatprep.subr.bf16.mxu0 0
      %1411 = vmatpush1.bf16.msra.mxu0 %v1190
      %1412 = vmatprep.subr.bf16.mxu0 0
      %1413 = vmatpush1.bf16.msra.mxu0 %v1189
      %1414 = vmatprep.subr.bf16.mxu0 0
      %1415 = vmatpush2.bf16.msra.mxu0 %v1204
      %1416 = vmatprep.subr.bf16.mxu0 0
      %1417 = vmatpush2.bf16.msra.mxu0 %v1203
      %1418 = vmatprep.subr.bf16.mxu0 0
      %1419 = vmatpush2.bf16.msra.mxu0 %v1202
      %1420 = vmatprep.subr.bf16.mxu0 0
      %1421 = vmatpush2.bf16.msra.mxu0 %v1201
      %1422 = vmatprep.subr.bf16.mxu0 0
      %1423 = vmatpush2.bf16.msra.mxu0 %v1200
      %1424 = vmatprep.subr.bf16.mxu0 0
      %1425 = vmatpush2.bf16.msra.mxu0 %v1199
      %1426 = vmatprep.subr.bf16.mxu0 0
      %1427 = vmatpush2.bf16.msra.mxu0 %v1198
      %1428 = vmatprep.subr.bf16.mxu0 0
      %1429 = vmatpush2.bf16.msra.mxu0 %v1197
      %1430 = vmatprep.mubr.bf16.mxu0 %v778
      %1431 = vmatmul.mubr.bf16.gmra.mxu0 %v687
      %v1432 = vpop.f32.mrf.mxu0
      %v1433 = vadd.f32 %v1272, %v1432
      %v1434 = vpop.f32.mrf.mxu0
      %v1435 = vpop.f32.mrf.mxu0
      %v1436 = vadd.f32 %v1275, %v1435
      %v1437 = vpop.f32.mrf.mxu0
      %1438 = vmatprep.mubr.bf16.mxu0 %v790
      %1439 = vmatmul.mubr.bf16.gmra.mxu0 %v688
      %v1440 = vpop.f32.mrf.mxu0
      %v1441 = vadd.f32 %v1280, %v1440
      %v1442 = vpop.f32.mrf.mxu0
      %v1443 = vpop.f32.mrf.mxu0
      %v1444 = vadd.f32 %v1283, %v1443
      %v1445 = vpop.f32.mrf.mxu0
      %1446 = vmatprep.mubr.bf16.mxu0 %v802
      %1447 = vmatmul.mubr.bf16.gmra.mxu0 %v689
      %v1448 = vpop.f32.mrf.mxu0
      %v1449 = vadd.f32 %v1288, %v1448
      %v1450 = vpop.f32.mrf.mxu0
      %v1451 = vpop.f32.mrf.mxu0
      %v1452 = vadd.f32 %v1291, %v1451
      %v1453 = vpop.f32.mrf.mxu0
      %1454 = vmatprep.mubr.bf16.mxu0 %v814
      %1455 = vmatmul.mubr.bf16.gmra.mxu0 %v690
      %v1456 = vpop.f32.mrf.mxu0
      %v1457 = vadd.f32 %v1296, %v1456
      %v1458 = vpop.f32.mrf.mxu0
      %v1459 = vpop.f32.mrf.mxu0
      %v1460 = vadd.f32 %v1299, %v1459
      %v1461 = vpop.f32.mrf.mxu0
      %1462 = vmatprep.mubr.bf16.mxu0 %v826
      %1463 = vmatmul.mubr.bf16.gmra.mxu0 %v691
      %v1464 = vpop.f32.mrf.mxu0
      %v1465 = vadd.f32 %v1304, %v1464
      %v1466 = vpop.f32.mrf.mxu0
      %v1467 = vpop.f32.mrf.mxu0
      %v1468 = vadd.f32 %v1307, %v1467
      %v1469 = vpop.f32.mrf.mxu0
      %1470 = vmatprep.mubr.bf16.mxu0 %v838
      %1471 = vmatmul.mubr.bf16.gmra.mxu0 %v692
      %v1472 = vpop.f32.mrf.mxu0
      %v1473 = vadd.f32 %v1312, %v1472
      %v1474 = vpop.f32.mrf.mxu0
      %v1475 = vpop.f32.mrf.mxu0
      %v1476 = vadd.f32 %v1315, %v1475
      %v1477 = vpop.f32.mrf.mxu0
      %1478 = vmatprep.mubr.bf16.mxu0 %v850
      %1479 = vmatmul.mubr.bf16.gmra.mxu0 %v693
      %v1480 = vpop.f32.mrf.mxu0
      %v1481 = vadd.f32 %v1320, %v1480
      %v1482 = vpop.f32.mrf.mxu0
      %v1483 = vpop.f32.mrf.mxu0
      %v1484 = vadd.f32 %v1323, %v1483
      %v1485 = vpop.f32.mrf.mxu0
      %1486 = vmatprep.mubr.bf16.mxu0 %v862
      %1487 = vmatmul.mubr.bf16.gmra.mxu0 %v694
      %v1488 = vpop.f32.mrf.mxu0
      %v1489 = vadd.f32 %v1328, %v1488
      %v1490 = vpop.f32.mrf.mxu0
      %v1491 = vpop.f32.mrf.mxu0
      %v1492 = vadd.f32 %v1331, %v1491
      %v1493 = vpop.f32.mrf.mxu0
      %1494 = vmatprep.mubr.bf16.mxu0 %v874
      %1495 = vmatmul.mubr.bf16.gmra.mxu0 %v695
      %v1496 = vpop.f32.mrf.mxu0
      %v1497 = vadd.f32 %v1336, %v1496
      %v1498 = vpop.f32.mrf.mxu0
      %v1499 = vpop.f32.mrf.mxu0
      %v1500 = vadd.f32 %v1339, %v1499
      %v1501 = vpop.f32.mrf.mxu0
      %1502 = vmatprep.mubr.bf16.mxu0 %v886
      %1503 = vmatmul.mubr.bf16.gmra.mxu0 %v696
      %v1504 = vpop.f32.mrf.mxu0
      %v1505 = vadd.f32 %v1344, %v1504
      %v1506 = vpop.f32.mrf.mxu0
      %v1507 = vpop.f32.mrf.mxu0
      %v1508 = vadd.f32 %v1347, %v1507
      %v1509 = vpop.f32.mrf.mxu0
      %1510 = vmatprep.mubr.bf16.mxu0 %v898
      %1511 = vmatmul.mubr.bf16.gmra.mxu0 %v697
      %v1512 = vpop.f32.mrf.mxu0
      %v1513 = vadd.f32 %v1352, %v1512
      %v1514 = vpop.f32.mrf.mxu0
      %v1515 = vpop.f32.mrf.mxu0
      %v1516 = vadd.f32 %v1355, %v1515
      %v1517 = vpop.f32.mrf.mxu0
      %1518 = vmatprep.mubr.bf16.mxu0 %v910
      %1519 = vmatmul.mubr.bf16.gmra.mxu0 %v698
      %v1520 = vpop.f32.mrf.mxu0
      %v1521 = vadd.f32 %v1360, %v1520
      %v1522 = vpop.f32.mrf.mxu0
      %v1523 = vpop.f32.mrf.mxu0
      %v1524 = vadd.f32 %v1363, %v1523
      %v1525 = vpop.f32.mrf.mxu0
      %1526 = vmatprep.mubr.bf16.mxu0 %v922
      %1527 = vmatmul.mubr.bf16.gmra.mxu0 %v699
      %v1528 = vpop.f32.mrf.mxu0
      %v1529 = vadd.f32 %v1368, %v1528
      %v1530 = vpop.f32.mrf.mxu0
      %v1531 = vpop.f32.mrf.mxu0
      %v1532 = vadd.f32 %v1371, %v1531
      %v1533 = vpop.f32.mrf.mxu0
      %1534 = vmatprep.mubr.bf16.mxu0 %v934
      %1535 = vmatmul.mubr.bf16.gmra.mxu0 %v700
      %v1536 = vpop.f32.mrf.mxu0
      %v1537 = vadd.f32 %v1376, %v1536
      %v1538 = vpop.f32.mrf.mxu0
      %v1539 = vpop.f32.mrf.mxu0
      %v1540 = vadd.f32 %v1379, %v1539
      %v1541 = vpop.f32.mrf.mxu0
      %1542 = vmatprep.mubr.bf16.mxu0 %v946
      %1543 = vmatmul.mubr.bf16.gmra.mxu0 %v701
      %v1544 = vpop.f32.mrf.mxu0
      %v1545 = vadd.f32 %v1384, %v1544
      %v1546 = vpop.f32.mrf.mxu0
      %v1547 = vpop.f32.mrf.mxu0
      %v1548 = vadd.f32 %v1387, %v1547
      %v1549 = vpop.f32.mrf.mxu0
      %1550 = vmatprep.mubr.bf16.mxu0 %v958
      %1551 = vmatmul.mubr.bf16.gmra.mxu0 %v702
      %v1552 = vpop.f32.mrf.mxu0
      %v1553 = vadd.f32 %v1392, %v1552
      %v1554 = vpop.f32.mrf.mxu0
      %v1555 = vpop.f32.mrf.mxu0
      %v1556 = vadd.f32 %v1395, %v1555
      %v1557 = vpop.f32.mrf.mxu0
      %1558 = vdwg.mxu0
      %1559 = vst [vmem:[%s170] sm:$0xff] %v1433
      %1560 = vst [vmem:[%s170 + $0x10] sm:$0xff] %v1436
      %1561 = vst [vmem:[%s170 + $0x40] sm:$0xff] %v1441
      %1562 = vst [vmem:[%s170 + $0x50] sm:$0xff] %v1444
      %1563 = vst [vmem:[%s170 + $0x80] sm:$0xff] %v1449
      %1564 = vst [vmem:[%s170 + $0x90] sm:$0xff] %v1452
      %1565 = vst [vmem:[%s170 + $0xc0] sm:$0xff] %v1457
      %1566 = vst [vmem:[%s170 + $0xd0] sm:$0xff] %v1460
      %1567 = vst [vmem:[%s170 + $0x100] sm:$0xff] %v1465
      %1568 = vst [vmem:[%s170 + $0x110] sm:$0xff] %v1468
      %1569 = vst [vmem:[%s170 + $0x140] sm:$0xff] %v1473
      %1570 = vst [vmem:[%s170 + $0x150] sm:$0xff] %v1476
      %1571 = vst [vmem:[%s170 + $0x180] sm:$0xff] %v1481
      %1572 = vst [vmem:[%s170 + $0x190] sm:$0xff] %v1484
      %1573 = vst [vmem:[%s170 + $0x1c0] sm:$0xff] %v1489
      %1574 = vst [vmem:[%s170 + $0x1d0] sm:$0xff] %v1492
      %1575 = vst [vmem:[%s170 + $0x200] sm:$0xff] %v1497
      %1576 = vst [vmem:[%s170 + $0x210] sm:$0xff] %v1500
      %1577 = vst [vmem:[%s170 + $0x240] sm:$0xff] %v1505
      %1578 = vst [vmem:[%s170 + $0x250] sm:$0xff] %v1508
      %1579 = vst [vmem:[%s170 + $0x280] sm:$0xff] %v1513
      %1580 = vst [vmem:[%s170 + $0x290] sm:$0xff] %v1516
      %1581 = vst [vmem:[%s170 + $0x2c0] sm:$0xff] %v1521
      %1582 = vst [vmem:[%s170 + $0x2d0] sm:$0xff] %v1524
      %1583 = vst [vmem:[%s170 + $0x300] sm:$0xff] %v1529
      %1584 = vst [vmem:[%s170 + $0x310] sm:$0xff] %v1532
      %1585 = vst [vmem:[%s170 + $0x340] sm:$0xff] %v1537
      %1586 = vst [vmem:[%s170 + $0x350] sm:$0xff] %v1540
      %1587 = vst [vmem:[%s170 + $0x380] sm:$0xff] %v1545
      %1588 = vst [vmem:[%s170 + $0x390] sm:$0xff] %v1548
      %1589 = vst [vmem:[%s170 + $0x3c0] sm:$0xff] %v1553
      %1590 = vst [vmem:[%s170 + $0x3d0] sm:$0xff] %v1556
      %v1591 = vld [vmem:[%s165] sm:$0xf]
      %v1592 = vld [vmem:[%s165 + $0x4] sm:$0xf]
      %v1593 = vld [vmem:[%s165 + $0x8] sm:$0x1]
      %v1594 = vld [vmem:[%s165 + $0xc] sm:$0xf]
      %v1595 = vld [vmem:[%s165 + $0x10] sm:$0xf]
      %v1596 = vld [vmem:[%s165 + $0x14] sm:$0x1]
      %v1597 = vld [vmem:[%s165 + $0x18] sm:$0xf]
      %v1598 = vld [vmem:[%s165 + $0x1c] sm:$0xf]
      %v1599 = vld [vmem:[%s165 + $0x20] sm:$0x1]
      %v1600 = vld [vmem:[%s165 + $0x24] sm:$0xf]
      %v1601 = vld [vmem:[%s165 + $0x28] sm:$0xf]
      %v1602 = vld [vmem:[%s165 + $0x2c] sm:$0x1]
      %v1603 = vld [vmem:[%s165 + $0x30] sm:$0xf]
      %v1604 = vld [vmem:[%s165 + $0x34] sm:$0xf]
      %v1605 = vld [vmem:[%s165 + $0x38] sm:$0x1]
      %v1606 = vld [vmem:[%s165 + $0x3c] sm:$0xf]
      %v1607 = vld [vmem:[%s165 + $0x40] sm:$0xf]
      %v1608 = vld [vmem:[%s165 + $0x44] sm:$0x1]
      %v1609 = vld [vmem:[%s165 + $0x48] sm:$0xf]
      %v1610 = vld [vmem:[%s165 + $0x4c] sm:$0xf]
      %v1611 = vld [vmem:[%s165 + $0x50] sm:$0x1]
      %v1612 = vld [vmem:[%s165 + $0x54] sm:$0xf]
      %v1613 = vld [vmem:[%s165 + $0x58] sm:$0xf]
      %v1614 = vld [vmem:[%s165 + $0x5c] sm:$0x1]
      %v1615 = vld [vmem:[%s165 + $0x60] sm:$0xf]
      %v1616 = vld [vmem:[%s165 + $0x64] sm:$0xf]
      %v1617 = vld [vmem:[%s165 + $0x68] sm:$0x1]
      %v1618 = vld [vmem:[%s165 + $0x6c] sm:$0xf]
      %v1619 = vld [vmem:[%s165 + $0x70] sm:$0xf]
      %v1620 = vld [vmem:[%s165 + $0x74] sm:$0x1]
      %v1621 = vld [vmem:[%s165 + $0x78] sm:$0xf]
      %v1622 = vld [vmem:[%s165 + $0x7c] sm:$0xf]
      %v1623 = vld [vmem:[%s165 + $0x80] sm:$0x1]
      %v1624 = vld [vmem:[%s165 + $0x84] sm:$0xf]
      %v1625 = vld [vmem:[%s165 + $0x88] sm:$0xf]
      %v1626 = vld [vmem:[%s165 + $0x8c] sm:$0x1]
      %v1627 = vld [vmem:[%s165 + $0x90] sm:$0xf]
      %v1628 = vld [vmem:[%s165 + $0x94] sm:$0xf]
      %v1629 = vld [vmem:[%s165 + $0x98] sm:$0x1]
      %v1630 = vld [vmem:[%s165 + $0x9c] sm:$0xf]
      %v1631 = vld [vmem:[%s165 + $0xa0] sm:$0xf]
      %v1632 = vld [vmem:[%s165 + $0xa4] sm:$0x1]
      %v1633 = vld [vmem:[%s165 + $0xa8] sm:$0xf]
      %v1634 = vld [vmem:[%s165 + $0xac] sm:$0xf]
      %v1635 = vld [vmem:[%s165 + $0xb0] sm:$0x1]
      %v1636 = vld [vmem:[%s165 + $0xb4] sm:$0xf]
      %v1637 = vld [vmem:[%s165 + $0xb8] sm:$0xf]
      %v1638 = vld [vmem:[%s165 + $0xbc] sm:$0x1]
      %v1639 = vld [vmem:[%s165] sm:$0xe]
      %v1640 = vld [vmem:[%s165 + $0xc] sm:$0xe]
      %v1641 = vld [vmem:[%s165 + $0x18] sm:$0xe]
      %v1642 = vld [vmem:[%s165 + $0x24] sm:$0xe]
      %v1643 = vld [vmem:[%s165 + $0x30] sm:$0xe]
      %v1644 = vld [vmem:[%s165 + $0x3c] sm:$0xe]
      %v1645 = vld [vmem:[%s165 + $0x48] sm:$0xe]
      %v1646 = vld [vmem:[%s165 + $0x54] sm:$0xe]
      %v1647 = vld [vmem:[%s165 + $0x60] sm:$0xe]
      %v1648 = vld [vmem:[%s165 + $0x6c] sm:$0xe]
      %v1649 = vld [vmem:[%s165 + $0x78] sm:$0xe]
      %v1650 = vld [vmem:[%s165 + $0x84] sm:$0xe]
      %v1651 = vld [vmem:[%s165 + $0x90] sm:$0xe]
      %v1652 = vld [vmem:[%s165 + $0x9c] sm:$0xe]
      %v1653 = vld [vmem:[%s165 + $0xa8] sm:$0xe]
      %v1654 = vld [vmem:[%s165 + $0xb4] sm:$0xe]
      %v1655 = vld [vmem:[%s221] sm:$0xf]
      %v1656 = vld [vmem:[%s221 + $0x4] sm:$0xf]
      %v1657 = vld [vmem:[%s221 + $0x8] sm:$0x1]
      %v1658 = vld [vmem:[%s221 + $0xc] sm:$0xf]
      %v1659 = vld [vmem:[%s221 + $0x10] sm:$0xf]
      %v1660 = vld [vmem:[%s221 + $0x14] sm:$0x1]
      %v1661 = vld [vmem:[%s221 + $0x18] sm:$0xf]
      %v1662 = vld [vmem:[%s221 + $0x1c] sm:$0xf]
      %v1663 = vld [vmem:[%s221 + $0x20] sm:$0x1]
      %v1664 = vld [vmem:[%s221 + $0x24] sm:$0xf]
      %v1665 = vld [vmem:[%s221 + $0x28] sm:$0xf]
      %v1666 = vld [vmem:[%s221 + $0x2c] sm:$0x1]
      %v1667 = vld [vmem:[%s221 + $0x30] sm:$0xf]
      %v1668 = vld [vmem:[%s221 + $0x34] sm:$0xf]
      %v1669 = vld [vmem:[%s221 + $0x38] sm:$0x1]
      %v1670 = vld [vmem:[%s221 + $0x3c] sm:$0xf]
      %v1671 = vld [vmem:[%s221 + $0x40] sm:$0xf]
      %v1672 = vld [vmem:[%s221 + $0x44] sm:$0x1]
      %v1673 = vld [vmem:[%s221 + $0x48] sm:$0xf]
      %v1674 = vld [vmem:[%s221 + $0x4c] sm:$0xf]
      %v1675 = vld [vmem:[%s221 + $0x50] sm:$0x1]
      %v1676 = vld [vmem:[%s221 + $0x54] sm:$0xf]
      %v1677 = vld [vmem:[%s221 + $0x58] sm:$0xf]
      %v1678 = vld [vmem:[%s221 + $0x5c] sm:$0x1]
      %v1679 = vld [vmem:[%s221 + $0x60] sm:$0xf]
      %v1680 = vld [vmem:[%s221 + $0x64] sm:$0xf]
      %v1681 = vld [vmem:[%s221 + $0x68] sm:$0x1]
      %v1682 = vld [vmem:[%s221 + $0x6c] sm:$0xf]
      %v1683 = vld [vmem:[%s221 + $0x70] sm:$0xf]
      %v1684 = vld [vmem:[%s221 + $0x74] sm:$0x1]
      %v1685 = vld [vmem:[%s221 + $0x78] sm:$0xf]
      %v1686 = vld [vmem:[%s221 + $0x7c] sm:$0xf]
      %v1687 = vld [vmem:[%s221 + $0x80] sm:$0x1]
      %v1688 = vld [vmem:[%s221 + $0x84] sm:$0xf]
      %v1689 = vld [vmem:[%s221 + $0x88] sm:$0xf]
      %v1690 = vld [vmem:[%s221 + $0x8c] sm:$0x1]
      %v1691 = vld [vmem:[%s221 + $0x90] sm:$0xf]
      %v1692 = vld [vmem:[%s221 + $0x94] sm:$0xf]
      %v1693 = vld [vmem:[%s221 + $0x98] sm:$0x1]
      %v1694 = vld [vmem:[%s221 + $0x9c] sm:$0xf]
      %v1695 = vld [vmem:[%s221 + $0xa0] sm:$0xf]
      %v1696 = vld [vmem:[%s221 + $0xa4] sm:$0x1]
      %v1697 = vld [vmem:[%s221 + $0xa8] sm:$0xf]
      %v1698 = vld [vmem:[%s221 + $0xac] sm:$0xf]
      %v1699 = vld [vmem:[%s221 + $0xb0] sm:$0x1]
      %v1700 = vld [vmem:[%s221 + $0xb4] sm:$0xf]
      %v1701 = vld [vmem:[%s221 + $0xb8] sm:$0xf]
      %v1702 = vld [vmem:[%s221 + $0xbc] sm:$0x1]
      %v1703 = vld [vmem:[%s221] sm:$0xe]
      %v1704 = vld [vmem:[%s221 + $0xc] sm:$0xe]
      %v1705 = vld [vmem:[%s221 + $0x18] sm:$0xe]
      %v1706 = vld [vmem:[%s221 + $0x24] sm:$0xe]
      %v1707 = vld [vmem:[%s221 + $0x30] sm:$0xe]
      %v1708 = vld [vmem:[%s221 + $0x3c] sm:$0xe]
      %v1709 = vld [vmem:[%s221 + $0x48] sm:$0xe]
      %v1710 = vld [vmem:[%s221 + $0x54] sm:$0xe]
      %v1711 = vld [vmem:[%s221 + $0x60] sm:$0xe]
      %v1712 = vld [vmem:[%s221 + $0x6c] sm:$0xe]
      %v1713 = vld [vmem:[%s221 + $0x78] sm:$0xe]
      %v1714 = vld [vmem:[%s221 + $0x84] sm:$0xe]
      %v1715 = vld [vmem:[%s221 + $0x90] sm:$0xe]
      %v1716 = vld [vmem:[%s221 + $0x9c] sm:$0xe]
      %v1717 = vld [vmem:[%s221 + $0xa8] sm:$0xe]
      %v1718 = vld [vmem:[%s221 + $0xb4] sm:$0xe]
      %v1767 = vunpack.c.l.b16 %v1591
      %v1768 = vunpack.c.l.b16 %v1592
      %v1769 = vunpack.c.l.b16 %v1593
      %v1770 = vunpack.c.l.b16 %v1594
      %v1771 = vunpack.c.l.b16 %v1595
      %v1772 = vunpack.c.l.b16 %v1596
      %v1773 = vunpack.c.l.b16 %v1597
      %v1774 = vunpack.c.l.b16 %v1598
      %v1775 = vunpack.c.l.b16 %v1599
      %v1776 = vunpack.c.l.b16 %v1600
      %v1777 = vunpack.c.l.b16 %v1601
      %v1778 = vunpack.c.l.b16 %v1602
      %v1779 = vunpack.c.l.b16 %v1603
      %v1780 = vunpack.c.l.b16 %v1604
      %v1781 = vunpack.c.l.b16 %v1605
      %v1782 = vunpack.c.l.b16 %v1606
      %v1783 = vunpack.c.l.b16 %v1607
      %v1784 = vunpack.c.l.b16 %v1608
      %v1785 = vunpack.c.l.b16 %v1609
      %v1786 = vunpack.c.l.b16 %v1610
      %v1787 = vunpack.c.l.b16 %v1611
      %v1788 = vunpack.c.l.b16 %v1612
      %v1789 = vunpack.c.l.b16 %v1613
      %v1790 = vunpack.c.l.b16 %v1614
      %v1791 = vunpack.c.l.b16 %v1615
      %v1792 = vunpack.c.l.b16 %v1616
      %v1793 = vunpack.c.l.b16 %v1617
      %v1794 = vunpack.c.l.b16 %v1618
      %v1795 = vunpack.c.l.b16 %v1619
      %v1796 = vunpack.c.l.b16 %v1620
      %v1797 = vunpack.c.l.b16 %v1621
      %v1798 = vunpack.c.l.b16 %v1622
      %v1799 = vunpack.c.l.b16 %v1623
      %v1800 = vunpack.c.l.b16 %v1624
      %v1801 = vunpack.c.l.b16 %v1625
      %v1802 = vunpack.c.l.b16 %v1626
      %v1803 = vunpack.c.l.b16 %v1627
      %v1804 = vunpack.c.l.b16 %v1628
      %v1805 = vunpack.c.l.b16 %v1629
      %v1806 = vunpack.c.l.b16 %v1630
      %v1807 = vunpack.c.l.b16 %v1631
      %v1808 = vunpack.c.l.b16 %v1632
      %v1809 = vunpack.c.l.b16 %v1633
      %v1810 = vunpack.c.l.b16 %v1634
      %v1811 = vunpack.c.l.b16 %v1635
      %v1812 = vunpack.c.l.b16 %v1636
      %v1813 = vunpack.c.l.b16 %v1637
      %v1814 = vunpack.c.l.b16 %v1638
      %v1815 = vpack.c.b16 %v1768, %v1767
      %v1816 = vpack.c.b16 %v1769, %v1769
      %v1817 = vpack.c.b16 %v1771, %v1770
      %v1818 = vpack.c.b16 %v1772, %v1772
      %v1819 = vpack.c.b16 %v1774, %v1773
      %v1820 = vpack.c.b16 %v1775, %v1775
      %v1821 = vpack.c.b16 %v1777, %v1776
      %v1822 = vpack.c.b16 %v1778, %v1778
      %v1823 = vpack.c.b16 %v1780, %v1779
      %v1824 = vpack.c.b16 %v1781, %v1781
      %v1825 = vpack.c.b16 %v1783, %v1782
      %v1826 = vpack.c.b16 %v1784, %v1784
      %v1827 = vpack.c.b16 %v1786, %v1785
      %v1828 = vpack.c.b16 %v1787, %v1787
      %v1829 = vpack.c.b16 %v1789, %v1788
      %v1830 = vpack.c.b16 %v1790, %v1790
      %v1831 = vpack.c.b16 %v1792, %v1791
      %v1832 = vpack.c.b16 %v1793, %v1793
      %v1833 = vpack.c.b16 %v1795, %v1794
      %v1834 = vpack.c.b16 %v1796, %v1796
      %v1835 = vpack.c.b16 %v1798, %v1797
      %v1836 = vpack.c.b16 %v1799, %v1799
      %v1837 = vpack.c.b16 %v1801, %v1800
      %v1838 = vpack.c.b16 %v1802, %v1802
      %v1839 = vpack.c.b16 %v1804, %v1803
      %v1840 = vpack.c.b16 %v1805, %v1805
      %v1841 = vpack.c.b16 %v1807, %v1806
      %v1842 = vpack.c.b16 %v1808, %v1808
      %v1843 = vpack.c.b16 %v1810, %v1809
      %v1844 = vpack.c.b16 %v1811, %v1811
      %v1845 = vpack.c.b16 %v1813, %v1812
      %v1846 = vpack.c.b16 %v1814, %v1814
      %v1863 = vunpack.c.l.b16 %v1639
      %v1864 = vunpack.c.l.b16 %v1640
      %v1865 = vunpack.c.l.b16 %v1641
      %v1866 = vunpack.c.l.b16 %v1642
      %v1867 = vunpack.c.l.b16 %v1643
      %v1868 = vunpack.c.l.b16 %v1644
      %v1869 = vunpack.c.l.b16 %v1645
      %v1870 = vunpack.c.l.b16 %v1646
      %v1871 = vunpack.c.l.b16 %v1647
      %v1872 = vunpack.c.l.b16 %v1648
      %v1873 = vunpack.c.l.b16 %v1649
      %v1874 = vunpack.c.l.b16 %v1650
      %v1875 = vunpack.c.l.b16 %v1651
      %v1876 = vunpack.c.l.b16 %v1652
      %v1877 = vunpack.c.l.b16 %v1653
      %v1878 = vunpack.c.l.b16 %v1654
      %v1879 = vpack.c.b16 %v1768, %v1863
      %v1880 = vpack.c.b16 %v1771, %v1864
      %v1881 = vpack.c.b16 %v1774, %v1865
      %v1882 = vpack.c.b16 %v1777, %v1866
      %v1883 = vpack.c.b16 %v1780, %v1867
      %v1884 = vpack.c.b16 %v1783, %v1868
      %v1885 = vpack.c.b16 %v1786, %v1869
      %v1886 = vpack.c.b16 %v1789, %v1870
      %v1887 = vpack.c.b16 %v1792, %v1871
      %v1888 = vpack.c.b16 %v1795, %v1872
      %v1889 = vpack.c.b16 %v1798, %v1873
      %v1890 = vpack.c.b16 %v1801, %v1874
      %v1891 = vpack.c.b16 %v1804, %v1875
      %v1892 = vpack.c.b16 %v1807, %v1876
      %v1893 = vpack.c.b16 %v1810, %v1877
      %v1894 = vpack.c.b16 %v1813, %v1878
      %v1896 = vshrl.u32 %v1879, 16
      %v1898 = vshll.u32 %v1879, 16
      %v1900 = vrot.slane %v1898, 1
      %v1901 = vor.u32 %v1896, %v1900
      %v1903 = vshll.u32 %v1816, 16
      %v1905 = vrot.slane %v1903, 1
      %v1906 = vsel %vm414, %v1901, %v1905
      %v1907 = vshrl.u32 %v1816, 16
      %v1910 = vshrl.u32 %v1880, 16
      %v1912 = vshll.u32 %v1880, 16
      %v1914 = vrot.slane %v1912, 1
      %v1915 = vor.u32 %v1910, %v1914
      %v1917 = vshll.u32 %v1818, 16
      %v1919 = vrot.slane %v1917, 1
      %v1920 = vsel %vm414, %v1915, %v1919
      %v1921 = vshrl.u32 %v1818, 16
      %v1924 = vshrl.u32 %v1881, 16
      %v1926 = vshll.u32 %v1881, 16
      %v1928 = vrot.slane %v1926, 1
      %v1929 = vor.u32 %v1924, %v1928
      %v1931 = vshll.u32 %v1820, 16
      %v1933 = vrot.slane %v1931, 1
      %v1934 = vsel %vm414, %v1929, %v1933
      %v1935 = vshrl.u32 %v1820, 16
      %v1938 = vshrl.u32 %v1882, 16
      %v1940 = vshll.u32 %v1882, 16
      %v1942 = vrot.slane %v1940, 1
      %v1943 = vor.u32 %v1938, %v1942
      %v1945 = vshll.u32 %v1822, 16
      %v1947 = vrot.slane %v1945, 1
      %v1948 = vsel %vm414, %v1943, %v1947
      %v1949 = vshrl.u32 %v1822, 16
      %v1952 = vshrl.u32 %v1883, 16
      %v1954 = vshll.u32 %v1883, 16
      %v1956 = vrot.slane %v1954, 1
      %v1957 = vor.u32 %v1952, %v1956
      %v1959 = vshll.u32 %v1824, 16
      %v1961 = vrot.slane %v1959, 1
      %v1962 = vsel %vm414, %v1957, %v1961
      %v1963 = vshrl.u32 %v1824, 16
      %v1966 = vshrl.u32 %v1884, 16
      %v1968 = vshll.u32 %v1884, 16
      %v1970 = vrot.slane %v1968, 1
      %v1971 = vor.u32 %v1966, %v1970
      %v1973 = vshll.u32 %v1826, 16
      %v1975 = vrot.slane %v1973, 1
      %v1976 = vsel %vm414, %v1971, %v1975
      %v1977 = vshrl.u32 %v1826, 16
      %v1980 = vshrl.u32 %v1885, 16
      %v1982 = vshll.u32 %v1885, 16
      %v1984 = vrot.slane %v1982, 1
      %v1985 = vor.u32 %v1980, %v1984
      %v1987 = vshll.u32 %v1828, 16
      %v1989 = vrot.slane %v1987, 1
      %v1990 = vsel %vm414, %v1985, %v1989
      %v1991 = vshrl.u32 %v1828, 16
      %v1994 = vshrl.u32 %v1886, 16
      %v1996 = vshll.u32 %v1886, 16
      %v1998 = vrot.slane %v1996, 1
      %v1999 = vor.u32 %v1994, %v1998
      %v2001 = vshll.u32 %v1830, 16
      %v2003 = vrot.slane %v2001, 1
      %v2004 = vsel %vm414, %v1999, %v2003
      %v2005 = vshrl.u32 %v1830, 16
      %v2008 = vshrl.u32 %v1887, 16
      %v2010 = vshll.u32 %v1887, 16
      %v2012 = vrot.slane %v2010, 1
      %v2013 = vor.u32 %v2008, %v2012
      %v2015 = vshll.u32 %v1832, 16
      %v2017 = vrot.slane %v2015, 1
      %v2018 = vsel %vm414, %v2013, %v2017
      %v2019 = vshrl.u32 %v1832, 16
      %v2022 = vshrl.u32 %v1888, 16
      %v2024 = vshll.u32 %v1888, 16
      %v2026 = vrot.slane %v2024, 1
      %v2027 = vor.u32 %v2022, %v2026
      %v2029 = vshll.u32 %v1834, 16
      %v2031 = vrot.slane %v2029, 1
      %v2032 = vsel %vm414, %v2027, %v2031
      %v2033 = vshrl.u32 %v1834, 16
      %v2036 = vshrl.u32 %v1889, 16
      %v2038 = vshll.u32 %v1889, 16
      %v2040 = vrot.slane %v2038, 1
      %v2041 = vor.u32 %v2036, %v2040
      %v2043 = vshll.u32 %v1836, 16
      %v2045 = vrot.slane %v2043, 1
      %v2046 = vsel %vm414, %v2041, %v2045
      %v2047 = vshrl.u32 %v1836, 16
      %v2050 = vshrl.u32 %v1890, 16
      %v2052 = vshll.u32 %v1890, 16
      %v2054 = vrot.slane %v2052, 1
      %v2055 = vor.u32 %v2050, %v2054
      %v2057 = vshll.u32 %v1838, 16
      %v2059 = vrot.slane %v2057, 1
      %v2060 = vsel %vm414, %v2055, %v2059
      %v2061 = vshrl.u32 %v1838, 16
      %v2064 = vshrl.u32 %v1891, 16
      %v2066 = vshll.u32 %v1891, 16
      %v2068 = vrot.slane %v2066, 1
      %v2069 = vor.u32 %v2064, %v2068
      %v2071 = vshll.u32 %v1840, 16
      %v2073 = vrot.slane %v2071, 1
      %v2074 = vsel %vm414, %v2069, %v2073
      %v2075 = vshrl.u32 %v1840, 16
      %v2078 = vshrl.u32 %v1892, 16
      %v2080 = vshll.u32 %v1892, 16
      %v2082 = vrot.slane %v2080, 1
      %v2083 = vor.u32 %v2078, %v2082
      %v2085 = vshll.u32 %v1842, 16
      %v2087 = vrot.slane %v2085, 1
      %v2088 = vsel %vm414, %v2083, %v2087
      %v2089 = vshrl.u32 %v1842, 16
      %v2092 = vshrl.u32 %v1893, 16
      %v2094 = vshll.u32 %v1893, 16
      %v2096 = vrot.slane %v2094, 1
      %v2097 = vor.u32 %v2092, %v2096
      %v2099 = vshll.u32 %v1844, 16
      %v2101 = vrot.slane %v2099, 1
      %v2102 = vsel %vm414, %v2097, %v2101
      %v2103 = vshrl.u32 %v1844, 16
      %v2106 = vshrl.u32 %v1894, 16
      %v2108 = vshll.u32 %v1894, 16
      %v2110 = vrot.slane %v2108, 1
      %v2111 = vor.u32 %v2106, %v2110
      %v2113 = vshll.u32 %v1846, 16
      %v2115 = vrot.slane %v2113, 1
      %v2116 = vsel %vm414, %v2111, %v2115
      %v2117 = vshrl.u32 %v1846, 16
      %v2167 = vunpack.c.l.b16 %v1655
      %v2168 = vunpack.c.l.b16 %v1656
      %v2169 = vunpack.c.l.b16 %v1657
      %v2170 = vunpack.c.l.b16 %v1658
      %v2171 = vunpack.c.l.b16 %v1659
      %v2172 = vunpack.c.l.b16 %v1660
      %v2173 = vunpack.c.l.b16 %v1661
      %v2174 = vunpack.c.l.b16 %v1662
      %v2175 = vunpack.c.l.b16 %v1663
      %v2176 = vunpack.c.l.b16 %v1664
      %v2177 = vunpack.c.l.b16 %v1665
      %v2178 = vunpack.c.l.b16 %v1666
      %v2179 = vunpack.c.l.b16 %v1667
      %v2180 = vunpack.c.l.b16 %v1668
      %v2181 = vunpack.c.l.b16 %v1669
      %v2182 = vunpack.c.l.b16 %v1670
      %v2183 = vunpack.c.l.b16 %v1671
      %v2184 = vunpack.c.l.b16 %v1672
      %v2185 = vunpack.c.l.b16 %v1673
      %v2186 = vunpack.c.l.b16 %v1674
      %v2187 = vunpack.c.l.b16 %v1675
      %v2188 = vunpack.c.l.b16 %v1676
      %v2189 = vunpack.c.l.b16 %v1677
      %v2190 = vunpack.c.l.b16 %v1678
      %v2191 = vunpack.c.l.b16 %v1679
      %v2192 = vunpack.c.l.b16 %v1680
      %v2193 = vunpack.c.l.b16 %v1681
      %v2194 = vunpack.c.l.b16 %v1682
      %v2195 = vunpack.c.l.b16 %v1683
      %v2196 = vunpack.c.l.b16 %v1684
      %v2197 = vunpack.c.l.b16 %v1685
      %v2198 = vunpack.c.l.b16 %v1686
      %v2199 = vunpack.c.l.b16 %v1687
      %v2200 = vunpack.c.l.b16 %v1688
      %v2201 = vunpack.c.l.b16 %v1689
      %v2202 = vunpack.c.l.b16 %v1690
      %v2203 = vunpack.c.l.b16 %v1691
      %v2204 = vunpack.c.l.b16 %v1692
      %v2205 = vunpack.c.l.b16 %v1693
      %v2206 = vunpack.c.l.b16 %v1694
      %v2207 = vunpack.c.l.b16 %v1695
      %v2208 = vunpack.c.l.b16 %v1696
      %v2209 = vunpack.c.l.b16 %v1697
      %v2210 = vunpack.c.l.b16 %v1698
      %v2211 = vunpack.c.l.b16 %v1699
      %v2212 = vunpack.c.l.b16 %v1700
      %v2213 = vunpack.c.l.b16 %v1701
      %v2214 = vunpack.c.l.b16 %v1702
      %v2215 = vpack.c.b16 %v2168, %v2167
      %v2216 = vpack.c.b16 %v2169, %v2169
      %v2217 = vpack.c.b16 %v2171, %v2170
      %v2218 = vpack.c.b16 %v2172, %v2172
      %v2219 = vpack.c.b16 %v2174, %v2173
      %v2220 = vpack.c.b16 %v2175, %v2175
      %v2221 = vpack.c.b16 %v2177, %v2176
      %v2222 = vpack.c.b16 %v2178, %v2178
      %v2223 = vpack.c.b16 %v2180, %v2179
      %v2224 = vpack.c.b16 %v2181, %v2181
      %v2225 = vpack.c.b16 %v2183, %v2182
      %v2226 = vpack.c.b16 %v2184, %v2184
      %v2227 = vpack.c.b16 %v2186, %v2185
      %v2228 = vpack.c.b16 %v2187, %v2187
      %v2229 = vpack.c.b16 %v2189, %v2188
      %v2230 = vpack.c.b16 %v2190, %v2190
      %v2231 = vpack.c.b16 %v2192, %v2191
      %v2232 = vpack.c.b16 %v2193, %v2193
      %v2233 = vpack.c.b16 %v2195, %v2194
      %v2234 = vpack.c.b16 %v2196, %v2196
      %v2235 = vpack.c.b16 %v2198, %v2197
      %v2236 = vpack.c.b16 %v2199, %v2199
      %v2237 = vpack.c.b16 %v2201, %v2200
      %v2238 = vpack.c.b16 %v2202, %v2202
      %v2239 = vpack.c.b16 %v2204, %v2203
      %v2240 = vpack.c.b16 %v2205, %v2205
      %v2241 = vpack.c.b16 %v2207, %v2206
      %v2242 = vpack.c.b16 %v2208, %v2208
      %v2243 = vpack.c.b16 %v2210, %v2209
      %v2244 = vpack.c.b16 %v2211, %v2211
      %v2245 = vpack.c.b16 %v2213, %v2212
      %v2246 = vpack.c.b16 %v2214, %v2214
      %v2263 = vunpack.c.l.b16 %v1703
      %v2264 = vunpack.c.l.b16 %v1704
      %v2265 = vunpack.c.l.b16 %v1705
      %v2266 = vunpack.c.l.b16 %v1706
      %v2267 = vunpack.c.l.b16 %v1707
      %v2268 = vunpack.c.l.b16 %v1708
      %v2269 = vunpack.c.l.b16 %v1709
      %v2270 = vunpack.c.l.b16 %v1710
      %v2271 = vunpack.c.l.b16 %v1711
      %v2272 = vunpack.c.l.b16 %v1712
      %v2273 = vunpack.c.l.b16 %v1713
      %v2274 = vunpack.c.l.b16 %v1714
      %v2275 = vunpack.c.l.b16 %v1715
      %v2276 = vunpack.c.l.b16 %v1716
      %v2277 = vunpack.c.l.b16 %v1717
      %v2278 = vunpack.c.l.b16 %v1718
      %v2279 = vpack.c.b16 %v2168, %v2263
      %v2280 = vpack.c.b16 %v2171, %v2264
      %v2281 = vpack.c.b16 %v2174, %v2265
      %v2282 = vpack.c.b16 %v2177, %v2266
      %v2283 = vpack.c.b16 %v2180, %v2267
      %v2284 = vpack.c.b16 %v2183, %v2268
      %v2285 = vpack.c.b16 %v2186, %v2269
      %v2286 = vpack.c.b16 %v2189, %v2270
      %v2287 = vpack.c.b16 %v2192, %v2271
      %v2288 = vpack.c.b16 %v2195, %v2272
      %v2289 = vpack.c.b16 %v2198, %v2273
      %v2290 = vpack.c.b16 %v2201, %v2274
      %v2291 = vpack.c.b16 %v2204, %v2275
      %v2292 = vpack.c.b16 %v2207, %v2276
      %v2293 = vpack.c.b16 %v2210, %v2277
      %v2294 = vpack.c.b16 %v2213, %v2278
      %v2296 = vshrl.u32 %v2279, 16
      %v2298 = vshll.u32 %v2279, 16
      %v2300 = vrot.slane %v2298, 1
      %v2301 = vor.u32 %v2296, %v2300
      %v2303 = vshll.u32 %v2216, 16
      %v2305 = vrot.slane %v2303, 1
      %v2306 = vsel %vm414, %v2301, %v2305
      %v2307 = vshrl.u32 %v2216, 16
      %v2310 = vshrl.u32 %v2280, 16
      %v2312 = vshll.u32 %v2280, 16
      %v2314 = vrot.slane %v2312, 1
      %v2315 = vor.u32 %v2310, %v2314
      %v2317 = vshll.u32 %v2218, 16
      %v2319 = vrot.slane %v2317, 1
      %v2320 = vsel %vm414, %v2315, %v2319
      %v2321 = vshrl.u32 %v2218, 16
      %v2324 = vshrl.u32 %v2281, 16
      %v2326 = vshll.u32 %v2281, 16
      %v2328 = vrot.slane %v2326, 1
      %v2329 = vor.u32 %v2324, %v2328
      %v2331 = vshll.u32 %v2220, 16
      %v2333 = vrot.slane %v2331, 1
      %v2334 = vsel %vm414, %v2329, %v2333
      %v2335 = vshrl.u32 %v2220, 16
      %v2338 = vshrl.u32 %v2282, 16
      %v2340 = vshll.u32 %v2282, 16
      %v2342 = vrot.slane %v2340, 1
      %v2343 = vor.u32 %v2338, %v2342
      %v2345 = vshll.u32 %v2222, 16
      %v2347 = vrot.slane %v2345, 1
      %v2348 = vsel %vm414, %v2343, %v2347
      %v2349 = vshrl.u32 %v2222, 16
      %v2352 = vshrl.u32 %v2283, 16
      %v2354 = vshll.u32 %v2283, 16
      %v2356 = vrot.slane %v2354, 1
      %v2357 = vor.u32 %v2352, %v2356
      %v2359 = vshll.u32 %v2224, 16
      %v2361 = vrot.slane %v2359, 1
      %v2362 = vsel %vm414, %v2357, %v2361
      %v2363 = vshrl.u32 %v2224, 16
      %v2366 = vshrl.u32 %v2284, 16
      %v2368 = vshll.u32 %v2284, 16
      %v2370 = vrot.slane %v2368, 1
      %v2371 = vor.u32 %v2366, %v2370
      %v2373 = vshll.u32 %v2226, 16
      %v2375 = vrot.slane %v2373, 1
      %v2376 = vsel %vm414, %v2371, %v2375
      %v2377 = vshrl.u32 %v2226, 16
      %v2380 = vshrl.u32 %v2285, 16
      %v2382 = vshll.u32 %v2285, 16
      %v2384 = vrot.slane %v2382, 1
      %v2385 = vor.u32 %v2380, %v2384
      %v2387 = vshll.u32 %v2228, 16
      %v2389 = vrot.slane %v2387, 1
      %v2390 = vsel %vm414, %v2385, %v2389
      %v2391 = vshrl.u32 %v2228, 16
      %v2394 = vshrl.u32 %v2286, 16
      %v2396 = vshll.u32 %v2286, 16
      %v2398 = vrot.slane %v2396, 1
      %v2399 = vor.u32 %v2394, %v2398
      %v2401 = vshll.u32 %v2230, 16
      %v2403 = vrot.slane %v2401, 1
      %v2404 = vsel %vm414, %v2399, %v2403
      %v2405 = vshrl.u32 %v2230, 16
      %v2408 = vshrl.u32 %v2287, 16
      %v2410 = vshll.u32 %v2287, 16
      %v2412 = vrot.slane %v2410, 1
      %v2413 = vor.u32 %v2408, %v2412
      %v2415 = vshll.u32 %v2232, 16
      %v2417 = vrot.slane %v2415, 1
      %v2418 = vsel %vm414, %v2413, %v2417
      %v2419 = vshrl.u32 %v2232, 16
      %v2422 = vshrl.u32 %v2288, 16
      %v2424 = vshll.u32 %v2288, 16
      %v2426 = vrot.slane %v2424, 1
      %v2427 = vor.u32 %v2422, %v2426
      %v2429 = vshll.u32 %v2234, 16
      %v2431 = vrot.slane %v2429, 1
      %v2432 = vsel %vm414, %v2427, %v2431
      %v2433 = vshrl.u32 %v2234, 16
      %v2436 = vshrl.u32 %v2289, 16
      %v2438 = vshll.u32 %v2289, 16
      %v2440 = vrot.slane %v2438, 1
      %v2441 = vor.u32 %v2436, %v2440
      %v2443 = vshll.u32 %v2236, 16
      %v2445 = vrot.slane %v2443, 1
      %v2446 = vsel %vm414, %v2441, %v2445
      %v2447 = vshrl.u32 %v2236, 16
      %v2450 = vshrl.u32 %v2290, 16
      %v2452 = vshll.u32 %v2290, 16
      %v2454 = vrot.slane %v2452, 1
      %v2455 = vor.u32 %v2450, %v2454
      %v2457 = vshll.u32 %v2238, 16
      %v2459 = vrot.slane %v2457, 1
      %v2460 = vsel %vm414, %v2455, %v2459
      %v2461 = vshrl.u32 %v2238, 16
      %v2464 = vshrl.u32 %v2291, 16
      %v2466 = vshll.u32 %v2291, 16
      %v2468 = vrot.slane %v2466, 1
      %v2469 = vor.u32 %v2464, %v2468
      %v2471 = vshll.u32 %v2240, 16
      %v2473 = vrot.slane %v2471, 1
      %v2474 = vsel %vm414, %v2469, %v2473
      %v2475 = vshrl.u32 %v2240, 16
      %v2478 = vshrl.u32 %v2292, 16
      %v2480 = vshll.u32 %v2292, 16
      %v2482 = vrot.slane %v2480, 1
      %v2483 = vor.u32 %v2478, %v2482
      %v2485 = vshll.u32 %v2242, 16
      %v2487 = vrot.slane %v2485, 1
      %v2488 = vsel %vm414, %v2483, %v2487
      %v2489 = vshrl.u32 %v2242, 16
      %v2492 = vshrl.u32 %v2293, 16
      %v2494 = vshll.u32 %v2293, 16
      %v2496 = vrot.slane %v2494, 1
      %v2497 = vor.u32 %v2492, %v2496
      %v2499 = vshll.u32 %v2244, 16
      %v2501 = vrot.slane %v2499, 1
      %v2502 = vsel %vm414, %v2497, %v2501
      %v2503 = vshrl.u32 %v2244, 16
      %v2506 = vshrl.u32 %v2294, 16
      %v2508 = vshll.u32 %v2294, 16
      %v2510 = vrot.slane %v2508, 1
      %v2511 = vor.u32 %v2506, %v2510
      %v2513 = vshll.u32 %v2246, 16
      %v2515 = vrot.slane %v2513, 1
      %v2516 = vsel %vm414, %v2511, %v2515
      %v2517 = vshrl.u32 %v2246, 16
      %v2520 = vshrl.u32 %v1815, 16
      %v2522 = vshll.u32 %v1815, 16
      %v2524 = vrot.slane %v2522, 1
      %v2525 = vor.u32 %v2520, %v2524
      %v2526 = vsel %vm414, %v2525, %v1905
      %v2528 = vshrl.u32 %v1906, 16
      %v2530 = vshll.u32 %v1906, 16
      %v2532 = vrot.slane %v2530, 1
      %v2533 = vor.u32 %v2528, %v2532
      %v2535 = vshll.u32 %v1907, 16
      %v2537 = vrot.slane %v2535, 1
      %v2538 = vsel %vm414, %v2533, %v2537
      %v2540 = vshrl.u32 %v2215, 16
      %v2542 = vshll.u32 %v2215, 16
      %v2544 = vrot.slane %v2542, 1
      %v2545 = vor.u32 %v2540, %v2544
      %v2546 = vsel %vm414, %v2545, %v2305
      %v2548 = vshrl.u32 %v2306, 16
      %v2550 = vshll.u32 %v2306, 16
      %v2552 = vrot.slane %v2550, 1
      %v2553 = vor.u32 %v2548, %v2552
      %v2555 = vshll.u32 %v2307, 16
      %v2557 = vrot.slane %v2555, 1
      %v2558 = vsel %vm414, %v2553, %v2557
      %v2560 = vshrl.u32 %v1817, 16
      %v2562 = vshll.u32 %v1817, 16
      %v2564 = vrot.slane %v2562, 1
      %v2565 = vor.u32 %v2560, %v2564
      %v2566 = vsel %vm414, %v2565, %v1919
      %v2568 = vshrl.u32 %v1920, 16
      %v2570 = vshll.u32 %v1920, 16
      %v2572 = vrot.slane %v2570, 1
      %v2573 = vor.u32 %v2568, %v2572
      %v2575 = vshll.u32 %v1921, 16
      %v2577 = vrot.slane %v2575, 1
      %v2578 = vsel %vm414, %v2573, %v2577
      %v2580 = vshrl.u32 %v2217, 16
      %v2582 = vshll.u32 %v2217, 16
      %v2584 = vrot.slane %v2582, 1
      %v2585 = vor.u32 %v2580, %v2584
      %v2586 = vsel %vm414, %v2585, %v2319
      %v2588 = vshrl.u32 %v2320, 16
      %v2590 = vshll.u32 %v2320, 16
      %v2592 = vrot.slane %v2590, 1
      %v2593 = vor.u32 %v2588, %v2592
      %v2595 = vshll.u32 %v2321, 16
      %v2597 = vrot.slane %v2595, 1
      %v2598 = vsel %vm414, %v2593, %v2597
      %v2600 = vshrl.u32 %v1819, 16
      %v2602 = vshll.u32 %v1819, 16
      %v2604 = vrot.slane %v2602, 1
      %v2605 = vor.u32 %v2600, %v2604
      %v2606 = vsel %vm414, %v2605, %v1933
      %v2608 = vshrl.u32 %v1934, 16
      %v2610 = vshll.u32 %v1934, 16
      %v2612 = vrot.slane %v2610, 1
      %v2613 = vor.u32 %v2608, %v2612
      %v2615 = vshll.u32 %v1935, 16
      %v2617 = vrot.slane %v2615, 1
      %v2618 = vsel %vm414, %v2613, %v2617
      %v2620 = vshrl.u32 %v2219, 16
      %v2622 = vshll.u32 %v2219, 16
      %v2624 = vrot.slane %v2622, 1
      %v2625 = vor.u32 %v2620, %v2624
      %v2626 = vsel %vm414, %v2625, %v2333
      %v2628 = vshrl.u32 %v2334, 16
      %v2630 = vshll.u32 %v2334, 16
      %v2632 = vrot.slane %v2630, 1
      %v2633 = vor.u32 %v2628, %v2632
      %v2635 = vshll.u32 %v2335, 16
      %v2637 = vrot.slane %v2635, 1
      %v2638 = vsel %vm414, %v2633, %v2637
      %v2640 = vshrl.u32 %v1821, 16
      %v2642 = vshll.u32 %v1821, 16
      %v2644 = vrot.slane %v2642, 1
      %v2645 = vor.u32 %v2640, %v2644
      %v2646 = vsel %vm414, %v2645, %v1947
      %v2648 = vshrl.u32 %v1948, 16
      %v2650 = vshll.u32 %v1948, 16
      %v2652 = vrot.slane %v2650, 1
      %v2653 = vor.u32 %v2648, %v2652
      %v2655 = vshll.u32 %v1949, 16
      %v2657 = vrot.slane %v2655, 1
      %v2658 = vsel %vm414, %v2653, %v2657
      %v2660 = vshrl.u32 %v2221, 16
      %v2662 = vshll.u32 %v2221, 16
      %v2664 = vrot.slane %v2662, 1
      %v2665 = vor.u32 %v2660, %v2664
      %v2666 = vsel %vm414, %v2665, %v2347
      %v2668 = vshrl.u32 %v2348, 16
      %v2670 = vshll.u32 %v2348, 16
      %v2672 = vrot.slane %v2670, 1
      %v2673 = vor.u32 %v2668, %v2672
      %v2675 = vshll.u32 %v2349, 16
      %v2677 = vrot.slane %v2675, 1
      %v2678 = vsel %vm414, %v2673, %v2677
      %v2680 = vshrl.u32 %v1823, 16
      %v2682 = vshll.u32 %v1823, 16
      %v2684 = vrot.slane %v2682, 1
      %v2685 = vor.u32 %v2680, %v2684
      %v2686 = vsel %vm414, %v2685, %v1961
      %v2688 = vshrl.u32 %v1962, 16
      %v2690 = vshll.u32 %v1962, 16
      %v2692 = vrot.slane %v2690, 1
      %v2693 = vor.u32 %v2688, %v2692
      %v2695 = vshll.u32 %v1963, 16
      %v2697 = vrot.slane %v2695, 1
      %v2698 = vsel %vm414, %v2693, %v2697
      %v2700 = vshrl.u32 %v2223, 16
      %v2702 = vshll.u32 %v2223, 16
      %v2704 = vrot.slane %v2702, 1
      %v2705 = vor.u32 %v2700, %v2704
      %v2706 = vsel %vm414, %v2705, %v2361
      %v2708 = vshrl.u32 %v2362, 16
      %v2710 = vshll.u32 %v2362, 16
      %v2712 = vrot.slane %v2710, 1
      %v2713 = vor.u32 %v2708, %v2712
      %v2715 = vshll.u32 %v2363, 16
      %v2717 = vrot.slane %v2715, 1
      %v2718 = vsel %vm414, %v2713, %v2717
      %v2720 = vshrl.u32 %v1825, 16
      %v2722 = vshll.u32 %v1825, 16
      %v2724 = vrot.slane %v2722, 1
      %v2725 = vor.u32 %v2720, %v2724
      %v2726 = vsel %vm414, %v2725, %v1975
      %v2728 = vshrl.u32 %v1976, 16
      %v2730 = vshll.u32 %v1976, 16
      %v2732 = vrot.slane %v2730, 1
      %v2733 = vor.u32 %v2728, %v2732
      %v2735 = vshll.u32 %v1977, 16
      %v2737 = vrot.slane %v2735, 1
      %v2738 = vsel %vm414, %v2733, %v2737
      %v2740 = vshrl.u32 %v2225, 16
      %v2742 = vshll.u32 %v2225, 16
      %v2744 = vrot.slane %v2742, 1
      %v2745 = vor.u32 %v2740, %v2744
      %v2746 = vsel %vm414, %v2745, %v2375
      %v2748 = vshrl.u32 %v2376, 16
      %v2750 = vshll.u32 %v2376, 16
      %v2752 = vrot.slane %v2750, 1
      %v2753 = vor.u32 %v2748, %v2752
      %v2755 = vshll.u32 %v2377, 16
      %v2757 = vrot.slane %v2755, 1
      %v2758 = vsel %vm414, %v2753, %v2757
      %v2760 = vshrl.u32 %v1827, 16
      %v2762 = vshll.u32 %v1827, 16
      %v2764 = vrot.slane %v2762, 1
      %v2765 = vor.u32 %v2760, %v2764
      %v2766 = vsel %vm414, %v2765, %v1989
      %v2768 = vshrl.u32 %v1990, 16
      %v2770 = vshll.u32 %v1990, 16
      %v2772 = vrot.slane %v2770, 1
      %v2773 = vor.u32 %v2768, %v2772
      %v2775 = vshll.u32 %v1991, 16
      %v2777 = vrot.slane %v2775, 1
      %v2778 = vsel %vm414, %v2773, %v2777
      %v2780 = vshrl.u32 %v2227, 16
      %v2782 = vshll.u32 %v2227, 16
      %v2784 = vrot.slane %v2782, 1
      %v2785 = vor.u32 %v2780, %v2784
      %v2786 = vsel %vm414, %v2785, %v2389
      %v2788 = vshrl.u32 %v2390, 16
      %v2790 = vshll.u32 %v2390, 16
      %v2792 = vrot.slane %v2790, 1
      %v2793 = vor.u32 %v2788, %v2792
      %v2795 = vshll.u32 %v2391, 16
      %v2797 = vrot.slane %v2795, 1
      %v2798 = vsel %vm414, %v2793, %v2797
      %v2800 = vshrl.u32 %v1829, 16
      %v2802 = vshll.u32 %v1829, 16
      %v2804 = vrot.slane %v2802, 1
      %v2805 = vor.u32 %v2800, %v2804
      %v2806 = vsel %vm414, %v2805, %v2003
      %v2808 = vshrl.u32 %v2004, 16
      %v2810 = vshll.u32 %v2004, 16
      %v2812 = vrot.slane %v2810, 1
      %v2813 = vor.u32 %v2808, %v2812
      %v2815 = vshll.u32 %v2005, 16
      %v2817 = vrot.slane %v2815, 1
      %v2818 = vsel %vm414, %v2813, %v2817
      %v2820 = vshrl.u32 %v2229, 16
      %v2822 = vshll.u32 %v2229, 16
      %v2824 = vrot.slane %v2822, 1
      %v2825 = vor.u32 %v2820, %v2824
      %v2826 = vsel %vm414, %v2825, %v2403
      %v2828 = vshrl.u32 %v2404, 16
      %v2830 = vshll.u32 %v2404, 16
      %v2832 = vrot.slane %v2830, 1
      %v2833 = vor.u32 %v2828, %v2832
      %v2835 = vshll.u32 %v2405, 16
      %v2837 = vrot.slane %v2835, 1
      %v2838 = vsel %vm414, %v2833, %v2837
      %v2840 = vshrl.u32 %v1831, 16
      %v2842 = vshll.u32 %v1831, 16
      %v2844 = vrot.slane %v2842, 1
      %v2845 = vor.u32 %v2840, %v2844
      %v2846 = vsel %vm414, %v2845, %v2017
      %v2848 = vshrl.u32 %v2018, 16
      %v2850 = vshll.u32 %v2018, 16
      %v2852 = vrot.slane %v2850, 1
      %v2853 = vor.u32 %v2848, %v2852
      %v2855 = vshll.u32 %v2019, 16
      %v2857 = vrot.slane %v2855, 1
      %v2858 = vsel %vm414, %v2853, %v2857
      %v2860 = vshrl.u32 %v2231, 16
      %v2862 = vshll.u32 %v2231, 16
      %v2864 = vrot.slane %v2862, 1
      %v2865 = vor.u32 %v2860, %v2864
      %v2866 = vsel %vm414, %v2865, %v2417
      %v2868 = vshrl.u32 %v2418, 16
      %v2870 = vshll.u32 %v2418, 16
      %v2872 = vrot.slane %v2870, 1
      %v2873 = vor.u32 %v2868, %v2872
      %v2875 = vshll.u32 %v2419, 16
      %v2877 = vrot.slane %v2875, 1
      %v2878 = vsel %vm414, %v2873, %v2877
      %v2880 = vshrl.u32 %v1833, 16
      %v2882 = vshll.u32 %v1833, 16
      %v2884 = vrot.slane %v2882, 1
      %v2885 = vor.u32 %v2880, %v2884
      %v2886 = vsel %vm414, %v2885, %v2031
      %v2888 = vshrl.u32 %v2032, 16
      %v2890 = vshll.u32 %v2032, 16
      %v2892 = vrot.slane %v2890, 1
      %v2893 = vor.u32 %v2888, %v2892
      %v2895 = vshll.u32 %v2033, 16
      %v2897 = vrot.slane %v2895, 1
      %v2898 = vsel %vm414, %v2893, %v2897
      %v2900 = vshrl.u32 %v2233, 16
      %v2902 = vshll.u32 %v2233, 16
      %v2904 = vrot.slane %v2902, 1
      %v2905 = vor.u32 %v2900, %v2904
      %v2906 = vsel %vm414, %v2905, %v2431
      %v2908 = vshrl.u32 %v2432, 16
      %v2910 = vshll.u32 %v2432, 16
      %v2912 = vrot.slane %v2910, 1
      %v2913 = vor.u32 %v2908, %v2912
      %v2915 = vshll.u32 %v2433, 16
      %v2917 = vrot.slane %v2915, 1
      %v2918 = vsel %vm414, %v2913, %v2917
      %v2920 = vshrl.u32 %v1835, 16
      %v2922 = vshll.u32 %v1835, 16
      %v2924 = vrot.slane %v2922, 1
      %v2925 = vor.u32 %v2920, %v2924
      %v2926 = vsel %vm414, %v2925, %v2045
      %v2928 = vshrl.u32 %v2046, 16
      %v2930 = vshll.u32 %v2046, 16
      %v2932 = vrot.slane %v2930, 1
      %v2933 = vor.u32 %v2928, %v2932
      %v2935 = vshll.u32 %v2047, 16
      %v2937 = vrot.slane %v2935, 1
      %v2938 = vsel %vm414, %v2933, %v2937
      %v2940 = vshrl.u32 %v2235, 16
      %v2942 = vshll.u32 %v2235, 16
      %v2944 = vrot.slane %v2942, 1
      %v2945 = vor.u32 %v2940, %v2944
      %v2946 = vsel %vm414, %v2945, %v2445
      %v2948 = vshrl.u32 %v2446, 16
      %v2950 = vshll.u32 %v2446, 16
      %v2952 = vrot.slane %v2950, 1
      %v2953 = vor.u32 %v2948, %v2952
      %v2955 = vshll.u32 %v2447, 16
      %v2957 = vrot.slane %v2955, 1
      %v2958 = vsel %vm414, %v2953, %v2957
      %v2960 = vshrl.u32 %v1837, 16
      %v2962 = vshll.u32 %v1837, 16
      %v2964 = vrot.slane %v2962, 1
      %v2965 = vor.u32 %v2960, %v2964
      %v2966 = vsel %vm414, %v2965, %v2059
      %v2968 = vshrl.u32 %v2060, 16
      %v2970 = vshll.u32 %v2060, 16
      %v2972 = vrot.slane %v2970, 1
      %v2973 = vor.u32 %v2968, %v2972
      %v2975 = vshll.u32 %v2061, 16
      %v2977 = vrot.slane %v2975, 1
      %v2978 = vsel %vm414, %v2973, %v2977
      %v2980 = vshrl.u32 %v2237, 16
      %v2982 = vshll.u32 %v2237, 16
      %v2984 = vrot.slane %v2982, 1
      %v2985 = vor.u32 %v2980, %v2984
      %v2986 = vsel %vm414, %v2985, %v2459
      %v2988 = vshrl.u32 %v2460, 16
      %v2990 = vshll.u32 %v2460, 16
      %v2992 = vrot.slane %v2990, 1
      %v2993 = vor.u32 %v2988, %v2992
      %v2995 = vshll.u32 %v2461, 16
      %v2997 = vrot.slane %v2995, 1
      %v2998 = vsel %vm414, %v2993, %v2997
      %v3000 = vshrl.u32 %v1839, 16
      %v3002 = vshll.u32 %v1839, 16
      %v3004 = vrot.slane %v3002, 1
      %v3005 = vor.u32 %v3000, %v3004
      %v3006 = vsel %vm414, %v3005, %v2073
      %v3008 = vshrl.u32 %v2074, 16
      %v3010 = vshll.u32 %v2074, 16
      %v3012 = vrot.slane %v3010, 1
      %v3013 = vor.u32 %v3008, %v3012
      %v3015 = vshll.u32 %v2075, 16
      %v3017 = vrot.slane %v3015, 1
      %v3018 = vsel %vm414, %v3013, %v3017
      %v3020 = vshrl.u32 %v2239, 16
      %v3022 = vshll.u32 %v2239, 16
      %v3024 = vrot.slane %v3022, 1
      %v3025 = vor.u32 %v3020, %v3024
      %v3026 = vsel %vm414, %v3025, %v2473
      %v3028 = vshrl.u32 %v2474, 16
      %v3030 = vshll.u32 %v2474, 16
      %v3032 = vrot.slane %v3030, 1
      %v3033 = vor.u32 %v3028, %v3032
      %v3035 = vshll.u32 %v2475, 16
      %v3037 = vrot.slane %v3035, 1
      %v3038 = vsel %vm414, %v3033, %v3037
      %v3040 = vshrl.u32 %v1841, 16
      %v3042 = vshll.u32 %v1841, 16
      %v3044 = vrot.slane %v3042, 1
      %v3045 = vor.u32 %v3040, %v3044
      %v3046 = vsel %vm414, %v3045, %v2087
      %v3048 = vshrl.u32 %v2088, 16
      %v3050 = vshll.u32 %v2088, 16
      %v3052 = vrot.slane %v3050, 1
      %v3053 = vor.u32 %v3048, %v3052
      %v3055 = vshll.u32 %v2089, 16
      %v3057 = vrot.slane %v3055, 1
      %v3058 = vsel %vm414, %v3053, %v3057
      %v3060 = vshrl.u32 %v2241, 16
      %v3062 = vshll.u32 %v2241, 16
      %v3064 = vrot.slane %v3062, 1
      %v3065 = vor.u32 %v3060, %v3064
      %v3066 = vsel %vm414, %v3065, %v2487
      %v3068 = vshrl.u32 %v2488, 16
      %v3070 = vshll.u32 %v2488, 16
      %v3072 = vrot.slane %v3070, 1
      %v3073 = vor.u32 %v3068, %v3072
      %v3075 = vshll.u32 %v2489, 16
      %v3077 = vrot.slane %v3075, 1
      %v3078 = vsel %vm414, %v3073, %v3077
      %v3080 = vshrl.u32 %v1843, 16
      %v3082 = vshll.u32 %v1843, 16
      %v3084 = vrot.slane %v3082, 1
      %v3085 = vor.u32 %v3080, %v3084
      %v3086 = vsel %vm414, %v3085, %v2101
      %v3088 = vshrl.u32 %v2102, 16
      %v3090 = vshll.u32 %v2102, 16
      %v3092 = vrot.slane %v3090, 1
      %v3093 = vor.u32 %v3088, %v3092
      %v3095 = vshll.u32 %v2103, 16
      %v3097 = vrot.slane %v3095, 1
      %v3098 = vsel %vm414, %v3093, %v3097
      %v3100 = vshrl.u32 %v2243, 16
      %v3102 = vshll.u32 %v2243, 16
      %v3104 = vrot.slane %v3102, 1
      %v3105 = vor.u32 %v3100, %v3104
      %v3106 = vsel %vm414, %v3105, %v2501
      %v3108 = vshrl.u32 %v2502, 16
      %v3110 = vshll.u32 %v2502, 16
      %v3112 = vrot.slane %v3110, 1
      %v3113 = vor.u32 %v3108, %v3112
      %v3115 = vshll.u32 %v2503, 16
      %v3117 = vrot.slane %v3115, 1
      %v3118 = vsel %vm414, %v3113, %v3117
      %v3120 = vshrl.u32 %v1845, 16
      %v3122 = vshll.u32 %v1845, 16
      %v3124 = vrot.slane %v3122, 1
      %v3125 = vor.u32 %v3120, %v3124
      %v3126 = vsel %vm414, %v3125, %v2115
      %v3128 = vshrl.u32 %v2116, 16
      %v3130 = vshll.u32 %v2116, 16
      %v3132 = vrot.slane %v3130, 1
      %v3133 = vor.u32 %v3128, %v3132
      %v3135 = vshll.u32 %v2117, 16
      %v3137 = vrot.slane %v3135, 1
      %v3138 = vsel %vm414, %v3133, %v3137
      %v3140 = vshrl.u32 %v2245, 16
      %v3142 = vshll.u32 %v2245, 16
      %v3144 = vrot.slane %v3142, 1
      %v3145 = vor.u32 %v3140, %v3144
      %v3146 = vsel %vm414, %v3145, %v2515
      %v3148 = vshrl.u32 %v2516, 16
      %v3150 = vshll.u32 %v2516, 16
      %v3152 = vrot.slane %v3150, 1
      %v3153 = vor.u32 %v3148, %v3152
      %v3155 = vshll.u32 %v2517, 16
      %v3157 = vrot.slane %v3155, 1
      %v3158 = vsel %vm414, %v3153, %v3157
      %s3223 = scalar_lea.vmem %s1, 256
      %v3224 = vld [vmem:[%s3223] sm:$0xf]
      %v3225 = vld [vmem:[%s3223 + $0x4] sm:$0xf]
      %v3226 = vld [vmem:[%s3223 + $0x8] sm:$0xf]
      %v3227 = vld [vmem:[%s3223 + $0xc] sm:$0xf]
      %v3228 = vld [vmem:[%s3223 + $0x10] sm:$0xf]
      %v3229 = vld [vmem:[%s3223 + $0x14] sm:$0xf]
      %v3230 = vld [vmem:[%s3223 + $0x18] sm:$0xf]
      %v3231 = vld [vmem:[%s3223 + $0x1c] sm:$0xf]
      %v3232 = vld [vmem:[%s3223 + $0x20] sm:$0xf]
      %v3233 = vld [vmem:[%s3223 + $0x24] sm:$0xf]
      %v3234 = vld [vmem:[%s3223 + $0x28] sm:$0xf]
      %v3235 = vld [vmem:[%s3223 + $0x2c] sm:$0xf]
      %v3236 = vld [vmem:[%s3223 + $0x30] sm:$0xf]
      %v3237 = vld [vmem:[%s3223 + $0x34] sm:$0xf]
      %v3238 = vld [vmem:[%s3223 + $0x38] sm:$0xf]
      %v3239 = vld [vmem:[%s3223 + $0x3c] sm:$0xf]
      %v3240 = vld [vmem:[%s3223 + $0x40] sm:$0xf]
      %v3241 = vld [vmem:[%s3223 + $0x44] sm:$0xf]
      %v3242 = vld [vmem:[%s3223 + $0x48] sm:$0xf]
      %v3243 = vld [vmem:[%s3223 + $0x4c] sm:$0xf]
      %v3244 = vld [vmem:[%s3223 + $0x50] sm:$0xf]
      %v3245 = vld [vmem:[%s3223 + $0x54] sm:$0xf]
      %v3246 = vld [vmem:[%s3223 + $0x58] sm:$0xf]
      %v3247 = vld [vmem:[%s3223 + $0x5c] sm:$0xf]
      %v3248 = vld [vmem:[%s3223 + $0x60] sm:$0xf]
      %v3249 = vld [vmem:[%s3223 + $0x64] sm:$0xf]
      %v3250 = vld [vmem:[%s3223 + $0x68] sm:$0xf]
      %v3251 = vld [vmem:[%s3223 + $0x6c] sm:$0xf]
      %v3252 = vld [vmem:[%s3223 + $0x70] sm:$0xf]
      %v3253 = vld [vmem:[%s3223 + $0x74] sm:$0xf]
      %v3254 = vld [vmem:[%s3223 + $0x78] sm:$0xf]
      %v3255 = vld [vmem:[%s3223 + $0x7c] sm:$0xf]
      %v3256 = vld [vmem:[%s3223 + $0x80] sm:$0xf]
      %v3257 = vld [vmem:[%s3223 + $0x84] sm:$0xf]
      %v3258 = vld [vmem:[%s3223 + $0x88] sm:$0xf]
      %v3259 = vld [vmem:[%s3223 + $0x8c] sm:$0xf]
      %v3260 = vld [vmem:[%s3223 + $0x90] sm:$0xf]
      %v3261 = vld [vmem:[%s3223 + $0x94] sm:$0xf]
      %v3262 = vld [vmem:[%s3223 + $0x98] sm:$0xf]
      %v3263 = vld [vmem:[%s3223 + $0x9c] sm:$0xf]
      %v3264 = vld [vmem:[%s3223 + $0xa0] sm:$0xf]
      %v3265 = vld [vmem:[%s3223 + $0xa4] sm:$0xf]
      %v3266 = vld [vmem:[%s3223 + $0xa8] sm:$0xf]
      %v3267 = vld [vmem:[%s3223 + $0xac] sm:$0xf]
      %v3268 = vld [vmem:[%s3223 + $0xb0] sm:$0xf]
      %v3269 = vld [vmem:[%s3223 + $0xb4] sm:$0xf]
      %v3270 = vld [vmem:[%s3223 + $0xb8] sm:$0xf]
      %v3271 = vld [vmem:[%s3223 + $0xbc] sm:$0xf]
      %v3272 = vld [vmem:[%s3223 + $0xc0] sm:$0xf]
      %v3273 = vld [vmem:[%s3223 + $0xc4] sm:$0xf]
      %v3274 = vld [vmem:[%s3223 + $0xc8] sm:$0xf]
      %v3275 = vld [vmem:[%s3223 + $0xcc] sm:$0xf]
      %v3276 = vld [vmem:[%s3223 + $0xd0] sm:$0xf]
      %v3277 = vld [vmem:[%s3223 + $0xd4] sm:$0xf]
      %v3278 = vld [vmem:[%s3223 + $0xd8] sm:$0xf]
      %v3279 = vld [vmem:[%s3223 + $0xdc] sm:$0xf]
      %v3280 = vld [vmem:[%s3223 + $0xe0] sm:$0xf]
      %v3281 = vld [vmem:[%s3223 + $0xe4] sm:$0xf]
      %v3282 = vld [vmem:[%s3223 + $0xe8] sm:$0xf]
      %v3283 = vld [vmem:[%s3223 + $0xec] sm:$0xf]
      %v3284 = vld [vmem:[%s3223 + $0xf0] sm:$0xf]
      %v3285 = vld [vmem:[%s3223 + $0xf4] sm:$0xf]
      %v3286 = vld [vmem:[%s3223 + $0xf8] sm:$0xf]
      %v3287 = vld [vmem:[%s3223 + $0xfc] sm:$0xf]
      %v3352 = vunpack.c.l.b16 %v3224
      %v3353 = vunpack.c.l.b16 %v3225
      %v3354 = vunpack.c.l.b16 %v3226
      %v3355 = vunpack.c.l.b16 %v3227
      %v3356 = vunpack.c.l.b16 %v3228
      %v3357 = vunpack.c.l.b16 %v3229
      %v3358 = vunpack.c.l.b16 %v3230
      %v3359 = vunpack.c.l.b16 %v3231
      %v3360 = vunpack.c.l.b16 %v3232
      %v3361 = vunpack.c.l.b16 %v3233
      %v3362 = vunpack.c.l.b16 %v3234
      %v3363 = vunpack.c.l.b16 %v3235
      %v3364 = vunpack.c.l.b16 %v3236
      %v3365 = vunpack.c.l.b16 %v3237
      %v3366 = vunpack.c.l.b16 %v3238
      %v3367 = vunpack.c.l.b16 %v3239
      %v3368 = vunpack.c.l.b16 %v3240
      %v3369 = vunpack.c.l.b16 %v3241
      %v3370 = vunpack.c.l.b16 %v3242
      %v3371 = vunpack.c.l.b16 %v3243
      %v3372 = vunpack.c.l.b16 %v3244
      %v3373 = vunpack.c.l.b16 %v3245
      %v3374 = vunpack.c.l.b16 %v3246
      %v3375 = vunpack.c.l.b16 %v3247
      %v3376 = vunpack.c.l.b16 %v3248
      %v3377 = vunpack.c.l.b16 %v3249
      %v3378 = vunpack.c.l.b16 %v3250
      %v3379 = vunpack.c.l.b16 %v3251
      %v3380 = vunpack.c.l.b16 %v3252
      %v3381 = vunpack.c.l.b16 %v3253
      %v3382 = vunpack.c.l.b16 %v3254
      %v3383 = vunpack.c.l.b16 %v3255
      %v3384 = vunpack.c.l.b16 %v3256
      %v3385 = vunpack.c.l.b16 %v3257
      %v3386 = vunpack.c.l.b16 %v3258
      %v3387 = vunpack.c.l.b16 %v3259
      %v3388 = vunpack.c.l.b16 %v3260
      %v3389 = vunpack.c.l.b16 %v3261
      %v3390 = vunpack.c.l.b16 %v3262
      %v3391 = vunpack.c.l.b16 %v3263
      %v3392 = vunpack.c.l.b16 %v3264
      %v3393 = vunpack.c.l.b16 %v3265
      %v3394 = vunpack.c.l.b16 %v3266
      %v3395 = vunpack.c.l.b16 %v3267
      %v3396 = vunpack.c.l.b16 %v3268
      %v3397 = vunpack.c.l.b16 %v3269
      %v3398 = vunpack.c.l.b16 %v3270
      %v3399 = vunpack.c.l.b16 %v3271
      %v3400 = vunpack.c.l.b16 %v3272
      %v3401 = vunpack.c.l.b16 %v3273
      %v3402 = vunpack.c.l.b16 %v3274
      %v3403 = vunpack.c.l.b16 %v3275
      %v3404 = vunpack.c.l.b16 %v3276
      %v3405 = vunpack.c.l.b16 %v3277
      %v3406 = vunpack.c.l.b16 %v3278
      %v3407 = vunpack.c.l.b16 %v3279
      %v3408 = vunpack.c.l.b16 %v3280
      %v3409 = vunpack.c.l.b16 %v3281
      %v3410 = vunpack.c.l.b16 %v3282
      %v3411 = vunpack.c.l.b16 %v3283
      %v3412 = vunpack.c.l.b16 %v3284
      %v3413 = vunpack.c.l.b16 %v3285
      %v3414 = vunpack.c.l.b16 %v3286
      %v3415 = vunpack.c.l.b16 %v3287
      %v3416 = vpack.c.b16 %v3353, %v3352
      %v3417 = vpack.c.b16 %v3355, %v3354
      %v3418 = vpack.c.b16 %v3357, %v3356
      %v3419 = vpack.c.b16 %v3359, %v3358
      %v3420 = vpack.c.b16 %v3361, %v3360
      %v3421 = vpack.c.b16 %v3363, %v3362
      %v3422 = vpack.c.b16 %v3365, %v3364
      %v3423 = vpack.c.b16 %v3367, %v3366
      %v3424 = vpack.c.b16 %v3369, %v3368
      %v3425 = vpack.c.b16 %v3371, %v3370
      %v3426 = vpack.c.b16 %v3373, %v3372
      %v3427 = vpack.c.b16 %v3375, %v3374
      %v3428 = vpack.c.b16 %v3377, %v3376
      %v3429 = vpack.c.b16 %v3379, %v3378
      %v3430 = vpack.c.b16 %v3381, %v3380
      %v3431 = vpack.c.b16 %v3383, %v3382
      %v3432 = vpack.c.b16 %v3385, %v3384
      %v3433 = vpack.c.b16 %v3387, %v3386
      %v3434 = vpack.c.b16 %v3389, %v3388
      %v3435 = vpack.c.b16 %v3391, %v3390
      %v3436 = vpack.c.b16 %v3393, %v3392
      %v3437 = vpack.c.b16 %v3395, %v3394
      %v3438 = vpack.c.b16 %v3397, %v3396
      %v3439 = vpack.c.b16 %v3399, %v3398
      %v3440 = vpack.c.b16 %v3401, %v3400
      %v3441 = vpack.c.b16 %v3403, %v3402
      %v3442 = vpack.c.b16 %v3405, %v3404
      %v3443 = vpack.c.b16 %v3407, %v3406
      %v3444 = vpack.c.b16 %v3409, %v3408
      %v3445 = vpack.c.b16 %v3411, %v3410
      %v3446 = vpack.c.b16 %v3413, %v3412
      %v3447 = vpack.c.b16 %v3415, %v3414
      %3480 = vmatprep.subr.bf16.mxu0 0
      %3481 = vmatpush1.bf16.msra.mxu0 %v3423
      %3482 = vmatprep.subr.bf16.mxu0 0
      %3483 = vmatpush1.bf16.msra.mxu0 %v3422
      %3484 = vmatprep.subr.bf16.mxu0 0
      %3485 = vmatpush1.bf16.msra.mxu0 %v3421
      %3486 = vmatprep.subr.bf16.mxu0 0
      %3487 = vmatpush1.bf16.msra.mxu0 %v3420
      %3488 = vmatprep.subr.bf16.mxu0 0
      %3489 = vmatpush1.bf16.msra.mxu0 %v3419
      %3490 = vmatprep.subr.bf16.mxu0 0
      %3491 = vmatpush1.bf16.msra.mxu0 %v3418
      %3492 = vmatprep.subr.bf16.mxu0 0
      %3493 = vmatpush1.bf16.msra.mxu0 %v3417
      %3494 = vmatprep.subr.bf16.mxu0 0
      %3495 = vmatpush1.bf16.msra.mxu0 %v3416
      %3496 = vmatprep.subr.bf16.mxu0 0
      %3497 = vmatpush2.bf16.msra.mxu0 %v3431
      %3498 = vmatprep.subr.bf16.mxu0 0
      %3499 = vmatpush2.bf16.msra.mxu0 %v3430
      %3500 = vmatprep.subr.bf16.mxu0 0
      %3501 = vmatpush2.bf16.msra.mxu0 %v3429
      %3502 = vmatprep.subr.bf16.mxu0 0
      %3503 = vmatpush2.bf16.msra.mxu0 %v3428
      %3504 = vmatprep.subr.bf16.mxu0 0
      %3505 = vmatpush2.bf16.msra.mxu0 %v3427
      %3506 = vmatprep.subr.bf16.mxu0 0
      %3507 = vmatpush2.bf16.msra.mxu0 %v3426
      %3508 = vmatprep.subr.bf16.mxu0 0
      %3509 = vmatpush2.bf16.msra.mxu0 %v3425
      %3510 = vmatprep.subr.bf16.mxu0 0
      %3511 = vmatpush2.bf16.msra.mxu0 %v3424
      %3512 = vmatprep.mubr.bf16.mxu0 %v2538
      %3513 = vmatmul.mubr.bf16.gmra.mxu0 %v2526
      %v3514 = vpop.f32.mrf.mxu0
      %v3515 = vadd.f32 %v1043, %v3514
      %v3516 = vpop.f32.mrf.mxu0
      %v3517 = vpop.f32.mrf.mxu0
      %v3518 = vadd.f32 %v1043, %v3517
      %v3519 = vpop.f32.mrf.mxu0
      %3520 = vmatprep.mubr.bf16.mxu0 %v2578
      %3521 = vmatmul.mubr.bf16.gmra.mxu0 %v2566
      %v3522 = vpop.f32.mrf.mxu0
      %v3523 = vadd.f32 %v1043, %v3522
      %v3524 = vpop.f32.mrf.mxu0
      %v3525 = vpop.f32.mrf.mxu0
      %v3526 = vadd.f32 %v1043, %v3525
      %v3527 = vpop.f32.mrf.mxu0
      %3528 = vmatprep.mubr.bf16.mxu0 %v2618
      %3529 = vmatmul.mubr.bf16.gmra.mxu0 %v2606
      %v3530 = vpop.f32.mrf.mxu0
      %v3531 = vadd.f32 %v1043, %v3530
      %v3532 = vpop.f32.mrf.mxu0
      %v3533 = vpop.f32.mrf.mxu0
      %v3534 = vadd.f32 %v1043, %v3533
      %v3535 = vpop.f32.mrf.mxu0
      %3536 = vmatprep.mubr.bf16.mxu0 %v2658
      %3537 = vmatmul.mubr.bf16.gmra.mxu0 %v2646
      %v3538 = vpop.f32.mrf.mxu0
      %v3539 = vadd.f32 %v1043, %v3538
      %v3540 = vpop.f32.mrf.mxu0
      %v3541 = vpop.f32.mrf.mxu0
      %v3542 = vadd.f32 %v1043, %v3541
      %v3543 = vpop.f32.mrf.mxu0
      %3544 = vmatprep.mubr.bf16.mxu0 %v2698
      %3545 = vmatmul.mubr.bf16.gmra.mxu0 %v2686
      %v3546 = vpop.f32.mrf.mxu0
      %v3547 = vadd.f32 %v1043, %v3546
      %v3548 = vpop.f32.mrf.mxu0
      %v3549 = vpop.f32.mrf.mxu0
      %v3550 = vadd.f32 %v1043, %v3549
      %v3551 = vpop.f32.mrf.mxu0
      %3552 = vmatprep.mubr.bf16.mxu0 %v2738
      %3553 = vmatmul.mubr.bf16.gmra.mxu0 %v2726
      %v3554 = vpop.f32.mrf.mxu0
      %v3555 = vadd.f32 %v1043, %v3554
      %v3556 = vpop.f32.mrf.mxu0
      %v3557 = vpop.f32.mrf.mxu0
      %v3558 = vadd.f32 %v1043, %v3557
      %v3559 = vpop.f32.mrf.mxu0
      %3560 = vmatprep.mubr.bf16.mxu0 %v2778
      %3561 = vmatmul.mubr.bf16.gmra.mxu0 %v2766
      %v3562 = vpop.f32.mrf.mxu0
      %v3563 = vadd.f32 %v1043, %v3562
      %v3564 = vpop.f32.mrf.mxu0
      %v3565 = vpop.f32.mrf.mxu0
      %v3566 = vadd.f32 %v1043, %v3565
      %v3567 = vpop.f32.mrf.mxu0
      %3568 = vmatprep.mubr.bf16.mxu0 %v2818
      %3569 = vmatmul.mubr.bf16.gmra.mxu0 %v2806
      %v3570 = vpop.f32.mrf.mxu0
      %v3571 = vadd.f32 %v1043, %v3570
      %v3572 = vpop.f32.mrf.mxu0
      %v3573 = vpop.f32.mrf.mxu0
      %v3574 = vadd.f32 %v1043, %v3573
      %v3575 = vpop.f32.mrf.mxu0
      %3576 = vmatprep.mubr.bf16.mxu0 %v2858
      %3577 = vmatmul.mubr.bf16.gmra.mxu0 %v2846
      %v3578 = vpop.f32.mrf.mxu0
      %v3579 = vadd.f32 %v1043, %v3578
      %v3580 = vpop.f32.mrf.mxu0
      %v3581 = vpop.f32.mrf.mxu0
      %v3582 = vadd.f32 %v1043, %v3581
      %v3583 = vpop.f32.mrf.mxu0
      %3584 = vmatprep.mubr.bf16.mxu0 %v2898
      %3585 = vmatmul.mubr.bf16.gmra.mxu0 %v2886
      %v3586 = vpop.f32.mrf.mxu0
      %v3587 = vadd.f32 %v1043, %v3586
      %v3588 = vpop.f32.mrf.mxu0
      %v3589 = vpop.f32.mrf.mxu0
      %v3590 = vadd.f32 %v1043, %v3589
      %v3591 = vpop.f32.mrf.mxu0
      %3592 = vmatprep.mubr.bf16.mxu0 %v2938
      %3593 = vmatmul.mubr.bf16.gmra.mxu0 %v2926
      %v3594 = vpop.f32.mrf.mxu0
      %v3595 = vadd.f32 %v1043, %v3594
      %v3596 = vpop.f32.mrf.mxu0
      %v3597 = vpop.f32.mrf.mxu0
      %v3598 = vadd.f32 %v1043, %v3597
      %v3599 = vpop.f32.mrf.mxu0
      %3600 = vmatprep.mubr.bf16.mxu0 %v2978
      %3601 = vmatmul.mubr.bf16.gmra.mxu0 %v2966
      %v3602 = vpop.f32.mrf.mxu0
      %v3603 = vadd.f32 %v1043, %v3602
      %v3604 = vpop.f32.mrf.mxu0
      %v3605 = vpop.f32.mrf.mxu0
      %v3606 = vadd.f32 %v1043, %v3605
      %v3607 = vpop.f32.mrf.mxu0
      %3608 = vmatprep.mubr.bf16.mxu0 %v3018
      %3609 = vmatmul.mubr.bf16.gmra.mxu0 %v3006
      %v3610 = vpop.f32.mrf.mxu0
      %v3611 = vadd.f32 %v1043, %v3610
      %v3612 = vpop.f32.mrf.mxu0
      %v3613 = vpop.f32.mrf.mxu0
      %v3614 = vadd.f32 %v1043, %v3613
      %v3615 = vpop.f32.mrf.mxu0
      %3616 = vmatprep.mubr.bf16.mxu0 %v3058
      %3617 = vmatmul.mubr.bf16.gmra.mxu0 %v3046
      %v3618 = vpop.f32.mrf.mxu0
      %v3619 = vadd.f32 %v1043, %v3618
      %v3620 = vpop.f32.mrf.mxu0
      %v3621 = vpop.f32.mrf.mxu0
      %v3622 = vadd.f32 %v1043, %v3621
      %v3623 = vpop.f32.mrf.mxu0
      %3624 = vmatprep.mubr.bf16.mxu0 %v3098
      %3625 = vmatmul.mubr.bf16.gmra.mxu0 %v3086
      %v3626 = vpop.f32.mrf.mxu0
      %v3627 = vadd.f32 %v1043, %v3626
      %v3628 = vpop.f32.mrf.mxu0
      %v3629 = vpop.f32.mrf.mxu0
      %v3630 = vadd.f32 %v1043, %v3629
      %v3631 = vpop.f32.mrf.mxu0
      %3632 = vmatprep.mubr.bf16.mxu0 %v3138
      %3633 = vmatmul.mubr.bf16.gmra.mxu0 %v3126
      %v3634 = vpop.f32.mrf.mxu0
      %v3635 = vadd.f32 %v1043, %v3634
      %v3636 = vpop.f32.mrf.mxu0
      %v3637 = vpop.f32.mrf.mxu0
      %v3638 = vadd.f32 %v1043, %v3637
      %v3639 = vpop.f32.mrf.mxu0
      %3640 = vdwg.mxu0
      %3641 = vmatprep.subr.bf16.mxu0 0
      %3642 = vmatpush1.bf16.msra.mxu0 %v3439
      %3643 = vmatprep.subr.bf16.mxu0 0
      %3644 = vmatpush1.bf16.msra.mxu0 %v3438
      %3645 = vmatprep.subr.bf16.mxu0 0
      %3646 = vmatpush1.bf16.msra.mxu0 %v3437
      %3647 = vmatprep.subr.bf16.mxu0 0
      %3648 = vmatpush1.bf16.msra.mxu0 %v3436
      %3649 = vmatprep.subr.bf16.mxu0 0
      %3650 = vmatpush1.bf16.msra.mxu0 %v3435
      %3651 = vmatprep.subr.bf16.mxu0 0
      %3652 = vmatpush1.bf16.msra.mxu0 %v3434
      %3653 = vmatprep.subr.bf16.mxu0 0
      %3654 = vmatpush1.bf16.msra.mxu0 %v3433
      %3655 = vmatprep.subr.bf16.mxu0 0
      %3656 = vmatpush1.bf16.msra.mxu0 %v3432
      %3657 = vmatprep.subr.bf16.mxu0 0
      %3658 = vmatpush2.bf16.msra.mxu0 %v3447
      %3659 = vmatprep.subr.bf16.mxu0 0
      %3660 = vmatpush2.bf16.msra.mxu0 %v3446
      %3661 = vmatprep.subr.bf16.mxu0 0
      %3662 = vmatpush2.bf16.msra.mxu0 %v3445
      %3663 = vmatprep.subr.bf16.mxu0 0
      %3664 = vmatpush2.bf16.msra.mxu0 %v3444
      %3665 = vmatprep.subr.bf16.mxu0 0
      %3666 = vmatpush2.bf16.msra.mxu0 %v3443
      %3667 = vmatprep.subr.bf16.mxu0 0
      %3668 = vmatpush2.bf16.msra.mxu0 %v3442
      %3669 = vmatprep.subr.bf16.mxu0 0
      %3670 = vmatpush2.bf16.msra.mxu0 %v3441
      %3671 = vmatprep.subr.bf16.mxu0 0
      %3672 = vmatpush2.bf16.msra.mxu0 %v3440
      %3673 = vmatprep.mubr.bf16.mxu0 %v2558
      %3674 = vmatmul.mubr.bf16.gmra.mxu0 %v2546
      %v3675 = vpop.f32.mrf.mxu0
      %v3676 = vadd.f32 %v3515, %v3675
      %v3677 = vpop.f32.mrf.mxu0
      %v3678 = vpop.f32.mrf.mxu0
      %v3679 = vadd.f32 %v3518, %v3678
      %v3680 = vpop.f32.mrf.mxu0
      %3681 = vmatprep.mubr.bf16.mxu0 %v2598
      %3682 = vmatmul.mubr.bf16.gmra.mxu0 %v2586
      %v3683 = vpop.f32.mrf.mxu0
      %v3684 = vadd.f32 %v3523, %v3683
      %v3685 = vpop.f32.mrf.mxu0
      %v3686 = vpop.f32.mrf.mxu0
      %v3687 = vadd.f32 %v3526, %v3686
      %v3688 = vpop.f32.mrf.mxu0
      %3689 = vmatprep.mubr.bf16.mxu0 %v2638
      %3690 = vmatmul.mubr.bf16.gmra.mxu0 %v2626
      %v3691 = vpop.f32.mrf.mxu0
      %v3692 = vadd.f32 %v3531, %v3691
      %v3693 = vpop.f32.mrf.mxu0
      %v3694 = vpop.f32.mrf.mxu0
      %v3695 = vadd.f32 %v3534, %v3694
      %v3696 = vpop.f32.mrf.mxu0
      %3697 = vmatprep.mubr.bf16.mxu0 %v2678
      %3698 = vmatmul.mubr.bf16.gmra.mxu0 %v2666
      %v3699 = vpop.f32.mrf.mxu0
      %v3700 = vadd.f32 %v3539, %v3699
      %v3701 = vpop.f32.mrf.mxu0
      %v3702 = vpop.f32.mrf.mxu0
      %v3703 = vadd.f32 %v3542, %v3702
      %v3704 = vpop.f32.mrf.mxu0
      %3705 = vmatprep.mubr.bf16.mxu0 %v2718
      %3706 = vmatmul.mubr.bf16.gmra.mxu0 %v2706
      %v3707 = vpop.f32.mrf.mxu0
      %v3708 = vadd.f32 %v3547, %v3707
      %v3709 = vpop.f32.mrf.mxu0
      %v3710 = vpop.f32.mrf.mxu0
      %v3711 = vadd.f32 %v3550, %v3710
      %v3712 = vpop.f32.mrf.mxu0
      %3713 = vmatprep.mubr.bf16.mxu0 %v2758
      %3714 = vmatmul.mubr.bf16.gmra.mxu0 %v2746
      %v3715 = vpop.f32.mrf.mxu0
      %v3716 = vadd.f32 %v3555, %v3715
      %v3717 = vpop.f32.mrf.mxu0
      %v3718 = vpop.f32.mrf.mxu0
      %v3719 = vadd.f32 %v3558, %v3718
      %v3720 = vpop.f32.mrf.mxu0
      %3721 = vmatprep.mubr.bf16.mxu0 %v2798
      %3722 = vmatmul.mubr.bf16.gmra.mxu0 %v2786
      %v3723 = vpop.f32.mrf.mxu0
      %v3724 = vadd.f32 %v3563, %v3723
      %v3725 = vpop.f32.mrf.mxu0
      %v3726 = vpop.f32.mrf.mxu0
      %v3727 = vadd.f32 %v3566, %v3726
      %v3728 = vpop.f32.mrf.mxu0
      %3729 = vmatprep.mubr.bf16.mxu0 %v2838
      %3730 = vmatmul.mubr.bf16.gmra.mxu0 %v2826
      %v3731 = vpop.f32.mrf.mxu0
      %v3732 = vadd.f32 %v3571, %v3731
      %v3733 = vpop.f32.mrf.mxu0
      %v3734 = vpop.f32.mrf.mxu0
      %v3735 = vadd.f32 %v3574, %v3734
      %v3736 = vpop.f32.mrf.mxu0
      %3737 = vmatprep.mubr.bf16.mxu0 %v2878
      %3738 = vmatmul.mubr.bf16.gmra.mxu0 %v2866
      %v3739 = vpop.f32.mrf.mxu0
      %v3740 = vadd.f32 %v3579, %v3739
      %v3741 = vpop.f32.mrf.mxu0
      %v3742 = vpop.f32.mrf.mxu0
      %v3743 = vadd.f32 %v3582, %v3742
      %v3744 = vpop.f32.mrf.mxu0
      %3745 = vmatprep.mubr.bf16.mxu0 %v2918
      %3746 = vmatmul.mubr.bf16.gmra.mxu0 %v2906
      %v3747 = vpop.f32.mrf.mxu0
      %v3748 = vadd.f32 %v3587, %v3747
      %v3749 = vpop.f32.mrf.mxu0
      %v3750 = vpop.f32.mrf.mxu0
      %v3751 = vadd.f32 %v3590, %v3750
      %v3752 = vpop.f32.mrf.mxu0
      %3753 = vmatprep.mubr.bf16.mxu0 %v2958
      %3754 = vmatmul.mubr.bf16.gmra.mxu0 %v2946
      %v3755 = vpop.f32.mrf.mxu0
      %v3756 = vadd.f32 %v3595, %v3755
      %v3757 = vpop.f32.mrf.mxu0
      %v3758 = vpop.f32.mrf.mxu0
      %v3759 = vadd.f32 %v3598, %v3758
      %v3760 = vpop.f32.mrf.mxu0
      %3761 = vmatprep.mubr.bf16.mxu0 %v2998
      %3762 = vmatmul.mubr.bf16.gmra.mxu0 %v2986
      %v3763 = vpop.f32.mrf.mxu0
      %v3764 = vadd.f32 %v3603, %v3763
      %v3765 = vpop.f32.mrf.mxu0
      %v3766 = vpop.f32.mrf.mxu0
      %v3767 = vadd.f32 %v3606, %v3766
      %v3768 = vpop.f32.mrf.mxu0
      %3769 = vmatprep.mubr.bf16.mxu0 %v3038
      %3770 = vmatmul.mubr.bf16.gmra.mxu0 %v3026
      %v3771 = vpop.f32.mrf.mxu0
      %v3772 = vadd.f32 %v3611, %v3771
      %v3773 = vpop.f32.mrf.mxu0
      %v3774 = vpop.f32.mrf.mxu0
      %v3775 = vadd.f32 %v3614, %v3774
      %v3776 = vpop.f32.mrf.mxu0
      %3777 = vmatprep.mubr.bf16.mxu0 %v3078
      %3778 = vmatmul.mubr.bf16.gmra.mxu0 %v3066
      %v3779 = vpop.f32.mrf.mxu0
      %v3780 = vadd.f32 %v3619, %v3779
      %v3781 = vpop.f32.mrf.mxu0
      %v3782 = vpop.f32.mrf.mxu0
      %v3783 = vadd.f32 %v3622, %v3782
      %v3784 = vpop.f32.mrf.mxu0
      %3785 = vmatprep.mubr.bf16.mxu0 %v3118
      %3786 = vmatmul.mubr.bf16.gmra.mxu0 %v3106
      %v3787 = vpop.f32.mrf.mxu0
      %v3788 = vadd.f32 %v3627, %v3787
      %v3789 = vpop.f32.mrf.mxu0
      %v3790 = vpop.f32.mrf.mxu0
      %v3791 = vadd.f32 %v3630, %v3790
      %v3792 = vpop.f32.mrf.mxu0
      %3793 = vmatprep.mubr.bf16.mxu0 %v3158
      %3794 = vmatmul.mubr.bf16.gmra.mxu0 %v3146
      %v3795 = vpop.f32.mrf.mxu0
      %v3796 = vadd.f32 %v3635, %v3795
      %v3797 = vpop.f32.mrf.mxu0
      %v3798 = vpop.f32.mrf.mxu0
      %v3799 = vadd.f32 %v3638, %v3798
      %v3800 = vpop.f32.mrf.mxu0
      %3801 = vdwg.mxu0
      %3802 = vst [vmem:[%s170 + $0x8] sm:$0xff] %v3676
      %3803 = vst [vmem:[%s170 + $0x18] sm:$0xff] %v3679
      %3804 = vst [vmem:[%s170 + $0x48] sm:$0xff] %v3684
      %3805 = vst [vmem:[%s170 + $0x58] sm:$0xff] %v3687
      %3806 = vst [vmem:[%s170 + $0x88] sm:$0xff] %v3692
      %3807 = vst [vmem:[%s170 + $0x98] sm:$0xff] %v3695
      %3808 = vst [vmem:[%s170 + $0xc8] sm:$0xff] %v3700
      %3809 = vst [vmem:[%s170 + $0xd8] sm:$0xff] %v3703
      %3810 = vst [vmem:[%s170 + $0x108] sm:$0xff] %v3708
      %3811 = vst [vmem:[%s170 + $0x118] sm:$0xff] %v3711
      %3812 = vst [vmem:[%s170 + $0x148] sm:$0xff] %v3716
      %3813 = vst [vmem:[%s170 + $0x158] sm:$0xff] %v3719
      %3814 = vst [vmem:[%s170 + $0x188] sm:$0xff] %v3724
      %3815 = vst [vmem:[%s170 + $0x198] sm:$0xff] %v3727
      %3816 = vst [vmem:[%s170 + $0x1c8] sm:$0xff] %v3732
      %3817 = vst [vmem:[%s170 + $0x1d8] sm:$0xff] %v3735
      %3818 = vst [vmem:[%s170 + $0x208] sm:$0xff] %v3740
      %3819 = vst [vmem:[%s170 + $0x218] sm:$0xff] %v3743
      %3820 = vst [vmem:[%s170 + $0x248] sm:$0xff] %v3748
      %3821 = vst [vmem:[%s170 + $0x258] sm:$0xff] %v3751
      %3822 = vst [vmem:[%s170 + $0x288] sm:$0xff] %v3756
      %3823 = vst [vmem:[%s170 + $0x298] sm:$0xff] %v3759
      %3824 = vst [vmem:[%s170 + $0x2c8] sm:$0xff] %v3764
      %3825 = vst [vmem:[%s170 + $0x2d8] sm:$0xff] %v3767
      %3826 = vst [vmem:[%s170 + $0x308] sm:$0xff] %v3772
      %3827 = vst [vmem:[%s170 + $0x318] sm:$0xff] %v3775
      %3828 = vst [vmem:[%s170 + $0x348] sm:$0xff] %v3780
      %3829 = vst [vmem:[%s170 + $0x358] sm:$0xff] %v3783
      %3830 = vst [vmem:[%s170 + $0x388] sm:$0xff] %v3788
      %3831 = vst [vmem:[%s170 + $0x398] sm:$0xff] %v3791
      %3832 = vst [vmem:[%s170 + $0x3c8] sm:$0xff] %v3796
      %3833 = vst [vmem:[%s170 + $0x3d8] sm:$0xff] %v3799
      %v3834 = vld [vmem:[%s221] sm:$0xf]
      %v3835 = vld [vmem:[%s221 + $0x4] sm:$0xf]
      %v3836 = vld [vmem:[%s221 + $0xc] sm:$0xf]
      %v3837 = vld [vmem:[%s221 + $0x10] sm:$0xf]
      %v3838 = vld [vmem:[%s221 + $0x18] sm:$0xf]
      %v3839 = vld [vmem:[%s221 + $0x1c] sm:$0xf]
      %v3840 = vld [vmem:[%s221 + $0x24] sm:$0xf]
      %v3841 = vld [vmem:[%s221 + $0x28] sm:$0xf]
      %v3842 = vld [vmem:[%s221 + $0x30] sm:$0xf]
      %v3843 = vld [vmem:[%s221 + $0x34] sm:$0xf]
      %v3844 = vld [vmem:[%s221 + $0x3c] sm:$0xf]
      %v3845 = vld [vmem:[%s221 + $0x40] sm:$0xf]
      %v3846 = vld [vmem:[%s221 + $0x48] sm:$0xf]
      %v3847 = vld [vmem:[%s221 + $0x4c] sm:$0xf]
      %v3848 = vld [vmem:[%s221 + $0x54] sm:$0xf]
      %v3849 = vld [vmem:[%s221 + $0x58] sm:$0xf]
      %v3850 = vld [vmem:[%s221 + $0x60] sm:$0xf]
      %v3851 = vld [vmem:[%s221 + $0x64] sm:$0xf]
      %v3852 = vld [vmem:[%s221 + $0x6c] sm:$0xf]
      %v3853 = vld [vmem:[%s221 + $0x70] sm:$0xf]
      %v3854 = vld [vmem:[%s221 + $0x78] sm:$0xf]
      %v3855 = vld [vmem:[%s221 + $0x7c] sm:$0xf]
      %v3856 = vld [vmem:[%s221 + $0x84] sm:$0xf]
      %v3857 = vld [vmem:[%s221 + $0x88] sm:$0xf]
      %v3858 = vld [vmem:[%s221 + $0x90] sm:$0xf]
      %v3859 = vld [vmem:[%s221 + $0x94] sm:$0xf]
      %v3860 = vld [vmem:[%s221 + $0x9c] sm:$0xf]
      %v3861 = vld [vmem:[%s221 + $0xa0] sm:$0xf]
      %v3862 = vld [vmem:[%s221 + $0xa8] sm:$0xf]
      %v3863 = vld [vmem:[%s221 + $0xac] sm:$0xf]
      %v3864 = vld [vmem:[%s221 + $0xb4] sm:$0xf]
      %v3865 = vld [vmem:[%s221 + $0xb8] sm:$0xf]
      %v3866 = vld [vmem:[%s221 + $0x8] sm:$0x1]
      %v3867 = vld [vmem:[%s221 + $0x14] sm:$0x1]
      %v3868 = vld [vmem:[%s221 + $0x20] sm:$0x1]
      %v3869 = vld [vmem:[%s221 + $0x2c] sm:$0x1]
      %v3870 = vld [vmem:[%s221 + $0x38] sm:$0x1]
      %v3871 = vld [vmem:[%s221 + $0x44] sm:$0x1]
      %v3872 = vld [vmem:[%s221 + $0x50] sm:$0x1]
      %v3873 = vld [vmem:[%s221 + $0x5c] sm:$0x1]
      %v3874 = vld [vmem:[%s221 + $0x68] sm:$0x1]
      %v3875 = vld [vmem:[%s221 + $0x74] sm:$0x1]
      %v3876 = vld [vmem:[%s221 + $0x80] sm:$0x1]
      %v3877 = vld [vmem:[%s221 + $0x8c] sm:$0x1]
      %v3878 = vld [vmem:[%s221 + $0x98] sm:$0x1]
      %v3879 = vld [vmem:[%s221 + $0xa4] sm:$0x1]
      %v3880 = vld [vmem:[%s221 + $0xb0] sm:$0x1]
      %v3881 = vld [vmem:[%s221 + $0xbc] sm:$0x1]
      %s3882 = scalar_lea.vmem %s165, 24
      %v3883 = vld [vmem:[%s3882] sm:$0xf]
      %v3884 = vld [vmem:[%s3882 + $0x4] sm:$0xf]
      %v3885 = vld [vmem:[%s3882 + $0xc] sm:$0xf]
      %v3886 = vld [vmem:[%s3882 + $0x10] sm:$0xf]
      %v3887 = vld [vmem:[%s3882 + $0x18] sm:$0xf]
      %v3888 = vld [vmem:[%s3882 + $0x1c] sm:$0xf]
      %v3889 = vld [vmem:[%s3882 + $0x24] sm:$0xf]
      %v3890 = vld [vmem:[%s3882 + $0x28] sm:$0xf]
      %v3891 = vld [vmem:[%s3882 + $0x30] sm:$0xf]
      %v3892 = vld [vmem:[%s3882 + $0x34] sm:$0xf]
      %v3893 = vld [vmem:[%s3882 + $0x3c] sm:$0xf]
      %v3894 = vld [vmem:[%s3882 + $0x40] sm:$0xf]
      %v3895 = vld [vmem:[%s3882 + $0x48] sm:$0xf]
      %v3896 = vld [vmem:[%s3882 + $0x4c] sm:$0xf]
      %v3897 = vld [vmem:[%s3882 + $0x54] sm:$0xf]
      %v3898 = vld [vmem:[%s3882 + $0x58] sm:$0xf]
      %v3899 = vld [vmem:[%s3882 + $0x60] sm:$0xf]
      %v3900 = vld [vmem:[%s3882 + $0x64] sm:$0xf]
      %v3901 = vld [vmem:[%s3882 + $0x6c] sm:$0xf]
      %v3902 = vld [vmem:[%s3882 + $0x70] sm:$0xf]
      %v3903 = vld [vmem:[%s3882 + $0x78] sm:$0xf]
      %v3904 = vld [vmem:[%s3882 + $0x7c] sm:$0xf]
      %v3905 = vld [vmem:[%s3882 + $0x84] sm:$0xf]
      %v3906 = vld [vmem:[%s3882 + $0x88] sm:$0xf]
      %v3907 = vld [vmem:[%s3882 + $0x90] sm:$0xf]
      %v3908 = vld [vmem:[%s3882 + $0x94] sm:$0xf]
      %v3909 = vld [vmem:[%s3882 + $0x9c] sm:$0xf]
      %v3910 = vld [vmem:[%s3882 + $0xa0] sm:$0xf]
      %v3911 = vld [vmem:[%s3882 + $0xa8] sm:$0xf]
      %v3912 = vld [vmem:[%s3882 + $0xac] sm:$0xf]
      %v3913 = vld [vmem:[%s3882 + $0xb4] sm:$0xf]
      %v3914 = vld [vmem:[%s3882 + $0xb8] sm:$0xf]
      %v3915 = vld [vmem:[%s3882 + $0x8] sm:$0x1]
      %v3916 = vld [vmem:[%s3882 + $0x14] sm:$0x1]
      %v3917 = vld [vmem:[%s3882 + $0x20] sm:$0x1]
      %v3918 = vld [vmem:[%s3882 + $0x2c] sm:$0x1]
      %v3919 = vld [vmem:[%s3882 + $0x38] sm:$0x1]
      %v3920 = vld [vmem:[%s3882 + $0x44] sm:$0x1]
      %v3921 = vld [vmem:[%s3882 + $0x50] sm:$0x1]
      %v3922 = vld [vmem:[%s3882 + $0x5c] sm:$0x1]
      %v3923 = vld [vmem:[%s3882 + $0x68] sm:$0x1]
      %v3924 = vld [vmem:[%s3882 + $0x74] sm:$0x1]
      %v3925 = vld [vmem:[%s3882 + $0x80] sm:$0x1]
      %v3926 = vld [vmem:[%s3882 + $0x8c] sm:$0x1]
      %v3927 = vld [vmem:[%s3882 + $0x98] sm:$0x1]
      %v3928 = vld [vmem:[%s3882 + $0xa4] sm:$0x1]
      %v3929 = vld [vmem:[%s3882 + $0xb0] sm:$0x1]
      %v3930 = vld [vmem:[%s3882 + $0xbc] sm:$0x1]
      %v3963 = vunpack.c.l.b16 %v3834
      %v3964 = vunpack.c.l.b16 %v3835
      %v3965 = vunpack.c.l.b16 %v3836
      %v3966 = vunpack.c.l.b16 %v3837
      %v3967 = vunpack.c.l.b16 %v3838
      %v3968 = vunpack.c.l.b16 %v3839
      %v3969 = vunpack.c.l.b16 %v3840
      %v3970 = vunpack.c.l.b16 %v3841
      %v3971 = vunpack.c.l.b16 %v3842
      %v3972 = vunpack.c.l.b16 %v3843
      %v3973 = vunpack.c.l.b16 %v3844
      %v3974 = vunpack.c.l.b16 %v3845
      %v3975 = vunpack.c.l.b16 %v3846
      %v3976 = vunpack.c.l.b16 %v3847
      %v3977 = vunpack.c.l.b16 %v3848
      %v3978 = vunpack.c.l.b16 %v3849
      %v3979 = vunpack.c.l.b16 %v3850
      %v3980 = vunpack.c.l.b16 %v3851
      %v3981 = vunpack.c.l.b16 %v3852
      %v3982 = vunpack.c.l.b16 %v3853
      %v3983 = vunpack.c.l.b16 %v3854
      %v3984 = vunpack.c.l.b16 %v3855
      %v3985 = vunpack.c.l.b16 %v3856
      %v3986 = vunpack.c.l.b16 %v3857
      %v3987 = vunpack.c.l.b16 %v3858
      %v3988 = vunpack.c.l.b16 %v3859
      %v3989 = vunpack.c.l.b16 %v3860
      %v3990 = vunpack.c.l.b16 %v3861
      %v3991 = vunpack.c.l.b16 %v3862
      %v3992 = vunpack.c.l.b16 %v3863
      %v3993 = vunpack.c.l.b16 %v3864
      %v3994 = vunpack.c.l.b16 %v3865
      %v3995 = vpack.c.b16 %v3964, %v3963
      %v3996 = vpack.c.b16 %v3966, %v3965
      %v3997 = vpack.c.b16 %v3968, %v3967
      %v3998 = vpack.c.b16 %v3970, %v3969
      %v3999 = vpack.c.b16 %v3972, %v3971
      %v4000 = vpack.c.b16 %v3974, %v3973
      %v4001 = vpack.c.b16 %v3976, %v3975
      %v4002 = vpack.c.b16 %v3978, %v3977
      %v4003 = vpack.c.b16 %v3980, %v3979
      %v4004 = vpack.c.b16 %v3982, %v3981
      %v4005 = vpack.c.b16 %v3984, %v3983
      %v4006 = vpack.c.b16 %v3986, %v3985
      %v4007 = vpack.c.b16 %v3988, %v3987
      %v4008 = vpack.c.b16 %v3990, %v3989
      %v4009 = vpack.c.b16 %v3992, %v3991
      %v4010 = vpack.c.b16 %v3994, %v3993
      %v4043 = vunpack.c.l.b16 %v3866
      %v4044 = vunpack.c.l.b16 %v3867
      %v4045 = vunpack.c.l.b16 %v3868
      %v4046 = vunpack.c.l.b16 %v3869
      %v4047 = vunpack.c.l.b16 %v3870
      %v4048 = vunpack.c.l.b16 %v3871
      %v4049 = vunpack.c.l.b16 %v3872
      %v4050 = vunpack.c.l.b16 %v3873
      %v4051 = vunpack.c.l.b16 %v3874
      %v4052 = vunpack.c.l.b16 %v3875
      %v4053 = vunpack.c.l.b16 %v3876
      %v4054 = vunpack.c.l.b16 %v3877
      %v4055 = vunpack.c.l.b16 %v3878
      %v4056 = vunpack.c.l.b16 %v3879
      %v4057 = vunpack.c.l.b16 %v3880
      %v4058 = vunpack.c.l.b16 %v3881
      %v4059 = vpack.c.b16 %v4043, %v4043
      %v4060 = vpack.c.b16 %v4044, %v4044
      %v4061 = vpack.c.b16 %v4045, %v4045
      %v4062 = vpack.c.b16 %v4046, %v4046
      %v4063 = vpack.c.b16 %v4047, %v4047
      %v4064 = vpack.c.b16 %v4048, %v4048
      %v4065 = vpack.c.b16 %v4049, %v4049
      %v4066 = vpack.c.b16 %v4050, %v4050
      %v4067 = vpack.c.b16 %v4051, %v4051
      %v4068 = vpack.c.b16 %v4052, %v4052
      %v4069 = vpack.c.b16 %v4053, %v4053
      %v4070 = vpack.c.b16 %v4054, %v4054
      %v4071 = vpack.c.b16 %v4055, %v4055
      %v4072 = vpack.c.b16 %v4056, %v4056
      %v4073 = vpack.c.b16 %v4057, %v4057
      %v4074 = vpack.c.b16 %v4058, %v4058
      %v4076 = vshrl.u32 %v3995, 16
      %v4078 = vshll.u32 %v3995, 16
      %v4080 = vrot.slane %v4078, 1
      %v4081 = vor.u32 %v4076, %v4080
      %v4083 = vshll.u32 %v4059, 16
      %v4085 = vrot.slane %v4083, 1
      %v4086 = vsel %vm414, %v4081, %v4085
      %v4088 = vshrl.u32 %v3996, 16
      %v4090 = vshll.u32 %v3996, 16
      %v4092 = vrot.slane %v4090, 1
      %v4093 = vor.u32 %v4088, %v4092
      %v4095 = vshll.u32 %v4060, 16
      %v4097 = vrot.slane %v4095, 1
      %v4098 = vsel %vm414, %v4093, %v4097
      %v4100 = vshrl.u32 %v3997, 16
      %v4102 = vshll.u32 %v3997, 16
      %v4104 = vrot.slane %v4102, 1
      %v4105 = vor.u32 %v4100, %v4104
      %v4107 = vshll.u32 %v4061, 16
      %v4109 = vrot.slane %v4107, 1
      %v4110 = vsel %vm414, %v4105, %v4109
      %v4112 = vshrl.u32 %v3998, 16
      %v4114 = vshll.u32 %v3998, 16
      %v4116 = vrot.slane %v4114, 1
      %v4117 = vor.u32 %v4112, %v4116
      %v4119 = vshll.u32 %v4062, 16
      %v4121 = vrot.slane %v4119, 1
      %v4122 = vsel %vm414, %v4117, %v4121
      %v4124 = vshrl.u32 %v3999, 16
      %v4126 = vshll.u32 %v3999, 16
      %v4128 = vrot.slane %v4126, 1
      %v4129 = vor.u32 %v4124, %v4128
      %v4131 = vshll.u32 %v4063, 16
      %v4133 = vrot.slane %v4131, 1
      %v4134 = vsel %vm414, %v4129, %v4133
      %v4136 = vshrl.u32 %v4000, 16
      %v4138 = vshll.u32 %v4000, 16
      %v4140 = vrot.slane %v4138, 1
      %v4141 = vor.u32 %v4136, %v4140
      %v4143 = vshll.u32 %v4064, 16
      %v4145 = vrot.slane %v4143, 1
      %v4146 = vsel %vm414, %v4141, %v4145
      %v4148 = vshrl.u32 %v4001, 16
      %v4150 = vshll.u32 %v4001, 16
      %v4152 = vrot.slane %v4150, 1
      %v4153 = vor.u32 %v4148, %v4152
      %v4155 = vshll.u32 %v4065, 16
      %v4157 = vrot.slane %v4155, 1
      %v4158 = vsel %vm414, %v4153, %v4157
      %v4160 = vshrl.u32 %v4002, 16
      %v4162 = vshll.u32 %v4002, 16
      %v4164 = vrot.slane %v4162, 1
      %v4165 = vor.u32 %v4160, %v4164
      %v4167 = vshll.u32 %v4066, 16
      %v4169 = vrot.slane %v4167, 1
      %v4170 = vsel %vm414, %v4165, %v4169
      %v4172 = vshrl.u32 %v4003, 16
      %v4174 = vshll.u32 %v4003, 16
      %v4176 = vrot.slane %v4174, 1
      %v4177 = vor.u32 %v4172, %v4176
      %v4179 = vshll.u32 %v4067, 16
      %v4181 = vrot.slane %v4179, 1
      %v4182 = vsel %vm414, %v4177, %v4181
      %v4184 = vshrl.u32 %v4004, 16
      %v4186 = vshll.u32 %v4004, 16
      %v4188 = vrot.slane %v4186, 1
      %v4189 = vor.u32 %v4184, %v4188
      %v4191 = vshll.u32 %v4068, 16
      %v4193 = vrot.slane %v4191, 1
      %v4194 = vsel %vm414, %v4189, %v4193
      %v4196 = vshrl.u32 %v4005, 16
      %v4198 = vshll.u32 %v4005, 16
      %v4200 = vrot.slane %v4198, 1
      %v4201 = vor.u32 %v4196, %v4200
      %v4203 = vshll.u32 %v4069, 16
      %v4205 = vrot.slane %v4203, 1
      %v4206 = vsel %vm414, %v4201, %v4205
      %v4208 = vshrl.u32 %v4006, 16
      %v4210 = vshll.u32 %v4006, 16
      %v4212 = vrot.slane %v4210, 1
      %v4213 = vor.u32 %v4208, %v4212
      %v4215 = vshll.u32 %v4070, 16
      %v4217 = vrot.slane %v4215, 1
      %v4218 = vsel %vm414, %v4213, %v4217
      %v4220 = vshrl.u32 %v4007, 16
      %v4222 = vshll.u32 %v4007, 16
      %v4224 = vrot.slane %v4222, 1
      %v4225 = vor.u32 %v4220, %v4224
      %v4227 = vshll.u32 %v4071, 16
      %v4229 = vrot.slane %v4227, 1
      %v4230 = vsel %vm414, %v4225, %v4229
      %v4232 = vshrl.u32 %v4008, 16
      %v4234 = vshll.u32 %v4008, 16
      %v4236 = vrot.slane %v4234, 1
      %v4237 = vor.u32 %v4232, %v4236
      %v4239 = vshll.u32 %v4072, 16
      %v4241 = vrot.slane %v4239, 1
      %v4242 = vsel %vm414, %v4237, %v4241
      %v4244 = vshrl.u32 %v4009, 16
      %v4246 = vshll.u32 %v4009, 16
      %v4248 = vrot.slane %v4246, 1
      %v4249 = vor.u32 %v4244, %v4248
      %v4251 = vshll.u32 %v4073, 16
      %v4253 = vrot.slane %v4251, 1
      %v4254 = vsel %vm414, %v4249, %v4253
      %v4256 = vshrl.u32 %v4010, 16
      %v4258 = vshll.u32 %v4010, 16
      %v4260 = vrot.slane %v4258, 1
      %v4261 = vor.u32 %v4256, %v4260
      %v4263 = vshll.u32 %v4074, 16
      %v4265 = vrot.slane %v4263, 1
      %v4266 = vsel %vm414, %v4261, %v4265
      %v4315 = vunpack.c.l.b16 %v3883
      %v4316 = vunpack.c.l.b16 %v3884
      %v4317 = vunpack.c.l.b16 %v3885
      %v4318 = vunpack.c.l.b16 %v3886
      %v4319 = vunpack.c.l.b16 %v3887
      %v4320 = vunpack.c.l.b16 %v3888
      %v4321 = vunpack.c.l.b16 %v3889
      %v4322 = vunpack.c.l.b16 %v3890
      %v4323 = vunpack.c.l.b16 %v3891
      %v4324 = vunpack.c.l.b16 %v3892
      %v4325 = vunpack.c.l.b16 %v3893
      %v4326 = vunpack.c.l.b16 %v3894
      %v4327 = vunpack.c.l.b16 %v3895
      %v4328 = vunpack.c.l.b16 %v3896
      %v4329 = vunpack.c.l.b16 %v3897
      %v4330 = vunpack.c.l.b16 %v3898
      %v4331 = vunpack.c.l.b16 %v3899
      %v4332 = vunpack.c.l.b16 %v3900
      %v4333 = vunpack.c.l.b16 %v3901
      %v4334 = vunpack.c.l.b16 %v3902
      %v4335 = vunpack.c.l.b16 %v3903
      %v4336 = vunpack.c.l.b16 %v3904
      %v4337 = vunpack.c.l.b16 %v3905
      %v4338 = vunpack.c.l.b16 %v3906
      %v4339 = vunpack.c.l.b16 %v3907
      %v4340 = vunpack.c.l.b16 %v3908
      %v4341 = vunpack.c.l.b16 %v3909
      %v4342 = vunpack.c.l.b16 %v3910
      %v4343 = vunpack.c.l.b16 %v3911
      %v4344 = vunpack.c.l.b16 %v3912
      %v4345 = vunpack.c.l.b16 %v3913
      %v4346 = vunpack.c.l.b16 %v3914
      %v4347 = vpack.c.b16 %v4316, %v4315
      %v4348 = vpack.c.b16 %v4318, %v4317
      %v4349 = vpack.c.b16 %v4320, %v4319
      %v4350 = vpack.c.b16 %v4322, %v4321
      %v4351 = vpack.c.b16 %v4324, %v4323
      %v4352 = vpack.c.b16 %v4326, %v4325
      %v4353 = vpack.c.b16 %v4328, %v4327
      %v4354 = vpack.c.b16 %v4330, %v4329
      %v4355 = vpack.c.b16 %v4332, %v4331
      %v4356 = vpack.c.b16 %v4334, %v4333
      %v4357 = vpack.c.b16 %v4336, %v4335
      %v4358 = vpack.c.b16 %v4338, %v4337
      %v4359 = vpack.c.b16 %v4340, %v4339
      %v4360 = vpack.c.b16 %v4342, %v4341
      %v4361 = vpack.c.b16 %v4344, %v4343
      %v4362 = vpack.c.b16 %v4346, %v4345
      %v4395 = vunpack.c.l.b16 %v3915
      %v4396 = vunpack.c.l.b16 %v3916
      %v4397 = vunpack.c.l.b16 %v3917
      %v4398 = vunpack.c.l.b16 %v3918
      %v4399 = vunpack.c.l.b16 %v3919
      %v4400 = vunpack.c.l.b16 %v3920
      %v4401 = vunpack.c.l.b16 %v3921
      %v4402 = vunpack.c.l.b16 %v3922
      %v4403 = vunpack.c.l.b16 %v3923
      %v4404 = vunpack.c.l.b16 %v3924
      %v4405 = vunpack.c.l.b16 %v3925
      %v4406 = vunpack.c.l.b16 %v3926
      %v4407 = vunpack.c.l.b16 %v3927
      %v4408 = vunpack.c.l.b16 %v3928
      %v4409 = vunpack.c.l.b16 %v3929
      %v4410 = vunpack.c.l.b16 %v3930
      %v4411 = vpack.c.b16 %v4395, %v4395
      %v4412 = vpack.c.b16 %v4396, %v4396
      %v4413 = vpack.c.b16 %v4397, %v4397
      %v4414 = vpack.c.b16 %v4398, %v4398
      %v4415 = vpack.c.b16 %v4399, %v4399
      %v4416 = vpack.c.b16 %v4400, %v4400
      %v4417 = vpack.c.b16 %v4401, %v4401
      %v4418 = vpack.c.b16 %v4402, %v4402
      %v4419 = vpack.c.b16 %v4403, %v4403
      %v4420 = vpack.c.b16 %v4404, %v4404
      %v4421 = vpack.c.b16 %v4405, %v4405
      %v4422 = vpack.c.b16 %v4406, %v4406
      %v4423 = vpack.c.b16 %v4407, %v4407
      %v4424 = vpack.c.b16 %v4408, %v4408
      %v4425 = vpack.c.b16 %v4409, %v4409
      %v4426 = vpack.c.b16 %v4410, %v4410
      %v4428 = vshrl.u32 %v4347, 16
      %v4430 = vshll.u32 %v4347, 16
      %v4432 = vrot.slane %v4430, 1
      %v4433 = vor.u32 %v4428, %v4432
      %v4435 = vshll.u32 %v4411, 16
      %v4437 = vrot.slane %v4435, 1
      %v4438 = vsel %vm414, %v4433, %v4437
      %v4440 = vshrl.u32 %v4348, 16
      %v4442 = vshll.u32 %v4348, 16
      %v4444 = vrot.slane %v4442, 1
      %v4445 = vor.u32 %v4440, %v4444
      %v4447 = vshll.u32 %v4412, 16
      %v4449 = vrot.slane %v4447, 1
      %v4450 = vsel %vm414, %v4445, %v4449
      %v4452 = vshrl.u32 %v4349, 16
      %v4454 = vshll.u32 %v4349, 16
      %v4456 = vrot.slane %v4454, 1
      %v4457 = vor.u32 %v4452, %v4456
      %v4459 = vshll.u32 %v4413, 16
      %v4461 = vrot.slane %v4459, 1
      %v4462 = vsel %vm414, %v4457, %v4461
      %v4464 = vshrl.u32 %v4350, 16
      %v4466 = vshll.u32 %v4350, 16
      %v4468 = vrot.slane %v4466, 1
      %v4469 = vor.u32 %v4464, %v4468
      %v4471 = vshll.u32 %v4414, 16
      %v4473 = vrot.slane %v4471, 1
      %v4474 = vsel %vm414, %v4469, %v4473
      %v4476 = vshrl.u32 %v4351, 16
      %v4478 = vshll.u32 %v4351, 16
      %v4480 = vrot.slane %v4478, 1
      %v4481 = vor.u32 %v4476, %v4480
      %v4483 = vshll.u32 %v4415, 16
      %v4485 = vrot.slane %v4483, 1
      %v4486 = vsel %vm414, %v4481, %v4485
      %v4488 = vshrl.u32 %v4352, 16
      %v4490 = vshll.u32 %v4352, 16
      %v4492 = vrot.slane %v4490, 1
      %v4493 = vor.u32 %v4488, %v4492
      %v4495 = vshll.u32 %v4416, 16
      %v4497 = vrot.slane %v4495, 1
      %v4498 = vsel %vm414, %v4493, %v4497
      %v4500 = vshrl.u32 %v4353, 16
      %v4502 = vshll.u32 %v4353, 16
      %v4504 = vrot.slane %v4502, 1
      %v4505 = vor.u32 %v4500, %v4504
      %v4507 = vshll.u32 %v4417, 16
      %v4509 = vrot.slane %v4507, 1
      %v4510 = vsel %vm414, %v4505, %v4509
      %v4512 = vshrl.u32 %v4354, 16
      %v4514 = vshll.u32 %v4354, 16
      %v4516 = vrot.slane %v4514, 1
      %v4517 = vor.u32 %v4512, %v4516
      %v4519 = vshll.u32 %v4418, 16
      %v4521 = vrot.slane %v4519, 1
      %v4522 = vsel %vm414, %v4517, %v4521
      %v4524 = vshrl.u32 %v4355, 16
      %v4526 = vshll.u32 %v4355, 16
      %v4528 = vrot.slane %v4526, 1
      %v4529 = vor.u32 %v4524, %v4528
      %v4531 = vshll.u32 %v4419, 16
      %v4533 = vrot.slane %v4531, 1
      %v4534 = vsel %vm414, %v4529, %v4533
      %v4536 = vshrl.u32 %v4356, 16
      %v4538 = vshll.u32 %v4356, 16
      %v4540 = vrot.slane %v4538, 1
      %v4541 = vor.u32 %v4536, %v4540
      %v4543 = vshll.u32 %v4420, 16
      %v4545 = vrot.slane %v4543, 1
      %v4546 = vsel %vm414, %v4541, %v4545
      %v4548 = vshrl.u32 %v4357, 16
      %v4550 = vshll.u32 %v4357, 16
      %v4552 = vrot.slane %v4550, 1
      %v4553 = vor.u32 %v4548, %v4552
      %v4555 = vshll.u32 %v4421, 16
      %v4557 = vrot.slane %v4555, 1
      %v4558 = vsel %vm414, %v4553, %v4557
      %v4560 = vshrl.u32 %v4358, 16
      %v4562 = vshll.u32 %v4358, 16
      %v4564 = vrot.slane %v4562, 1
      %v4565 = vor.u32 %v4560, %v4564
      %v4567 = vshll.u32 %v4422, 16
      %v4569 = vrot.slane %v4567, 1
      %v4570 = vsel %vm414, %v4565, %v4569
      %v4572 = vshrl.u32 %v4359, 16
      %v4574 = vshll.u32 %v4359, 16
      %v4576 = vrot.slane %v4574, 1
      %v4577 = vor.u32 %v4572, %v4576
      %v4579 = vshll.u32 %v4423, 16
      %v4581 = vrot.slane %v4579, 1
      %v4582 = vsel %vm414, %v4577, %v4581
      %v4584 = vshrl.u32 %v4360, 16
      %v4586 = vshll.u32 %v4360, 16
      %v4588 = vrot.slane %v4586, 1
      %v4589 = vor.u32 %v4584, %v4588
      %v4591 = vshll.u32 %v4424, 16
      %v4593 = vrot.slane %v4591, 1
      %v4594 = vsel %vm414, %v4589, %v4593
      %v4596 = vshrl.u32 %v4361, 16
      %v4598 = vshll.u32 %v4361, 16
      %v4600 = vrot.slane %v4598, 1
      %v4601 = vor.u32 %v4596, %v4600
      %v4603 = vshll.u32 %v4425, 16
      %v4605 = vrot.slane %v4603, 1
      %v4606 = vsel %vm414, %v4601, %v4605
      %v4608 = vshrl.u32 %v4362, 16
      %v4610 = vshll.u32 %v4362, 16
      %v4612 = vrot.slane %v4610, 1
      %v4613 = vor.u32 %v4608, %v4612
      %v4615 = vshll.u32 %v4426, 16
      %v4617 = vrot.slane %v4615, 1
      %v4618 = vsel %vm414, %v4613, %v4617
      %s4635 = scalar_lea.vmem %s1, 512
      %v4636 = vld [vmem:[%s4635] sm:$0xf]
      %v4637 = vld [vmem:[%s4635 + $0x4] sm:$0xf]
      %v4638 = vld [vmem:[%s4635 + $0x8] sm:$0xf]
      %v4639 = vld [vmem:[%s4635 + $0xc] sm:$0xf]
      %v4640 = vld [vmem:[%s4635 + $0x10] sm:$0xf]
      %v4641 = vld [vmem:[%s4635 + $0x14] sm:$0xf]
      %v4642 = vld [vmem:[%s4635 + $0x18] sm:$0xf]
      %v4643 = vld [vmem:[%s4635 + $0x1c] sm:$0xf]
      %v4644 = vld [vmem:[%s4635 + $0x20] sm:$0xf]
      %v4645 = vld [vmem:[%s4635 + $0x24] sm:$0xf]
      %v4646 = vld [vmem:[%s4635 + $0x28] sm:$0xf]
      %v4647 = vld [vmem:[%s4635 + $0x2c] sm:$0xf]
      %v4648 = vld [vmem:[%s4635 + $0x30] sm:$0xf]
      %v4649 = vld [vmem:[%s4635 + $0x34] sm:$0xf]
      %v4650 = vld [vmem:[%s4635 + $0x38] sm:$0xf]
      %v4651 = vld [vmem:[%s4635 + $0x3c] sm:$0xf]
      %v4652 = vld [vmem:[%s4635 + $0x40] sm:$0xf]
      %v4653 = vld [vmem:[%s4635 + $0x44] sm:$0xf]
      %v4654 = vld [vmem:[%s4635 + $0x48] sm:$0xf]
      %v4655 = vld [vmem:[%s4635 + $0x4c] sm:$0xf]
      %v4656 = vld [vmem:[%s4635 + $0x50] sm:$0xf]
      %v4657 = vld [vmem:[%s4635 + $0x54] sm:$0xf]
      %v4658 = vld [vmem:[%s4635 + $0x58] sm:$0xf]
      %v4659 = vld [vmem:[%s4635 + $0x5c] sm:$0xf]
      %v4660 = vld [vmem:[%s4635 + $0x60] sm:$0xf]
      %v4661 = vld [vmem:[%s4635 + $0x64] sm:$0xf]
      %v4662 = vld [vmem:[%s4635 + $0x68] sm:$0xf]
      %v4663 = vld [vmem:[%s4635 + $0x6c] sm:$0xf]
      %v4664 = vld [vmem:[%s4635 + $0x70] sm:$0xf]
      %v4665 = vld [vmem:[%s4635 + $0x74] sm:$0xf]
      %v4666 = vld [vmem:[%s4635 + $0x78] sm:$0xf]
      %v4667 = vld [vmem:[%s4635 + $0x7c] sm:$0xf]
      %v4668 = vld [vmem:[%s4635 + $0x80] sm:$0xf]
      %v4669 = vld [vmem:[%s4635 + $0x84] sm:$0xf]
      %v4670 = vld [vmem:[%s4635 + $0x88] sm:$0xf]
      %v4671 = vld [vmem:[%s4635 + $0x8c] sm:$0xf]
      %v4672 = vld [vmem:[%s4635 + $0x90] sm:$0xf]
      %v4673 = vld [vmem:[%s4635 + $0x94] sm:$0xf]
      %v4674 = vld [vmem:[%s4635 + $0x98] sm:$0xf]
      %v4675 = vld [vmem:[%s4635 + $0x9c] sm:$0xf]
      %v4676 = vld [vmem:[%s4635 + $0xa0] sm:$0xf]
      %v4677 = vld [vmem:[%s4635 + $0xa4] sm:$0xf]
      %v4678 = vld [vmem:[%s4635 + $0xa8] sm:$0xf]
      %v4679 = vld [vmem:[%s4635 + $0xac] sm:$0xf]
      %v4680 = vld [vmem:[%s4635 + $0xb0] sm:$0xf]
      %v4681 = vld [vmem:[%s4635 + $0xb4] sm:$0xf]
      %v4682 = vld [vmem:[%s4635 + $0xb8] sm:$0xf]
      %v4683 = vld [vmem:[%s4635 + $0xbc] sm:$0xf]
      %v4684 = vld [vmem:[%s4635 + $0xc0] sm:$0xf]
      %v4685 = vld [vmem:[%s4635 + $0xc4] sm:$0xf]
      %v4686 = vld [vmem:[%s4635 + $0xc8] sm:$0xf]
      %v4687 = vld [vmem:[%s4635 + $0xcc] sm:$0xf]
      %v4688 = vld [vmem:[%s4635 + $0xd0] sm:$0xf]
      %v4689 = vld [vmem:[%s4635 + $0xd4] sm:$0xf]
      %v4690 = vld [vmem:[%s4635 + $0xd8] sm:$0xf]
      %v4691 = vld [vmem:[%s4635 + $0xdc] sm:$0xf]
      %v4692 = vld [vmem:[%s4635 + $0xe0] sm:$0xf]
      %v4693 = vld [vmem:[%s4635 + $0xe4] sm:$0xf]
      %v4694 = vld [vmem:[%s4635 + $0xe8] sm:$0xf]
      %v4695 = vld [vmem:[%s4635 + $0xec] sm:$0xf]
      %v4696 = vld [vmem:[%s4635 + $0xf0] sm:$0xf]
      %v4697 = vld [vmem:[%s4635 + $0xf4] sm:$0xf]
      %v4698 = vld [vmem:[%s4635 + $0xf8] sm:$0xf]
      %v4699 = vld [vmem:[%s4635 + $0xfc] sm:$0xf]
      %v4764 = vunpack.c.l.b16 %v4636
      %v4765 = vunpack.c.l.b16 %v4637
      %v4766 = vunpack.c.l.b16 %v4638
      %v4767 = vunpack.c.l.b16 %v4639
      %v4768 = vunpack.c.l.b16 %v4640
      %v4769 = vunpack.c.l.b16 %v4641
      %v4770 = vunpack.c.l.b16 %v4642
      %v4771 = vunpack.c.l.b16 %v4643
      %v4772 = vunpack.c.l.b16 %v4644
      %v4773 = vunpack.c.l.b16 %v4645
      %v4774 = vunpack.c.l.b16 %v4646
      %v4775 = vunpack.c.l.b16 %v4647
      %v4776 = vunpack.c.l.b16 %v4648
      %v4777 = vunpack.c.l.b16 %v4649
      %v4778 = vunpack.c.l.b16 %v4650
      %v4779 = vunpack.c.l.b16 %v4651
      %v4780 = vunpack.c.l.b16 %v4652
      %v4781 = vunpack.c.l.b16 %v4653
      %v4782 = vunpack.c.l.b16 %v4654
      %v4783 = vunpack.c.l.b16 %v4655
      %v4784 = vunpack.c.l.b16 %v4656
      %v4785 = vunpack.c.l.b16 %v4657
      %v4786 = vunpack.c.l.b16 %v4658
      %v4787 = vunpack.c.l.b16 %v4659
      %v4788 = vunpack.c.l.b16 %v4660
      %v4789 = vunpack.c.l.b16 %v4661
      %v4790 = vunpack.c.l.b16 %v4662
      %v4791 = vunpack.c.l.b16 %v4663
      %v4792 = vunpack.c.l.b16 %v4664
      %v4793 = vunpack.c.l.b16 %v4665
      %v4794 = vunpack.c.l.b16 %v4666
      %v4795 = vunpack.c.l.b16 %v4667
      %v4796 = vunpack.c.l.b16 %v4668
      %v4797 = vunpack.c.l.b16 %v4669
      %v4798 = vunpack.c.l.b16 %v4670
      %v4799 = vunpack.c.l.b16 %v4671
      %v4800 = vunpack.c.l.b16 %v4672
      %v4801 = vunpack.c.l.b16 %v4673
      %v4802 = vunpack.c.l.b16 %v4674
      %v4803 = vunpack.c.l.b16 %v4675
      %v4804 = vunpack.c.l.b16 %v4676
      %v4805 = vunpack.c.l.b16 %v4677
      %v4806 = vunpack.c.l.b16 %v4678
      %v4807 = vunpack.c.l.b16 %v4679
      %v4808 = vunpack.c.l.b16 %v4680
      %v4809 = vunpack.c.l.b16 %v4681
      %v4810 = vunpack.c.l.b16 %v4682
      %v4811 = vunpack.c.l.b16 %v4683
      %v4812 = vunpack.c.l.b16 %v4684
      %v4813 = vunpack.c.l.b16 %v4685
      %v4814 = vunpack.c.l.b16 %v4686
      %v4815 = vunpack.c.l.b16 %v4687
      %v4816 = vunpack.c.l.b16 %v4688
      %v4817 = vunpack.c.l.b16 %v4689
      %v4818 = vunpack.c.l.b16 %v4690
      %v4819 = vunpack.c.l.b16 %v4691
      %v4820 = vunpack.c.l.b16 %v4692
      %v4821 = vunpack.c.l.b16 %v4693
      %v4822 = vunpack.c.l.b16 %v4694
      %v4823 = vunpack.c.l.b16 %v4695
      %v4824 = vunpack.c.l.b16 %v4696
      %v4825 = vunpack.c.l.b16 %v4697
      %v4826 = vunpack.c.l.b16 %v4698
      %v4827 = vunpack.c.l.b16 %v4699
      %v4828 = vpack.c.b16 %v4765, %v4764
      %v4829 = vpack.c.b16 %v4767, %v4766
      %v4830 = vpack.c.b16 %v4769, %v4768
      %v4831 = vpack.c.b16 %v4771, %v4770
      %v4832 = vpack.c.b16 %v4773, %v4772
      %v4833 = vpack.c.b16 %v4775, %v4774
      %v4834 = vpack.c.b16 %v4777, %v4776
      %v4835 = vpack.c.b16 %v4779, %v4778
      %v4836 = vpack.c.b16 %v4781, %v4780
      %v4837 = vpack.c.b16 %v4783, %v4782
      %v4838 = vpack.c.b16 %v4785, %v4784
      %v4839 = vpack.c.b16 %v4787, %v4786
      %v4840 = vpack.c.b16 %v4789, %v4788
      %v4841 = vpack.c.b16 %v4791, %v4790
      %v4842 = vpack.c.b16 %v4793, %v4792
      %v4843 = vpack.c.b16 %v4795, %v4794
      %v4844 = vpack.c.b16 %v4797, %v4796
      %v4845 = vpack.c.b16 %v4799, %v4798
      %v4846 = vpack.c.b16 %v4801, %v4800
      %v4847 = vpack.c.b16 %v4803, %v4802
      %v4848 = vpack.c.b16 %v4805, %v4804
      %v4849 = vpack.c.b16 %v4807, %v4806
      %v4850 = vpack.c.b16 %v4809, %v4808
      %v4851 = vpack.c.b16 %v4811, %v4810
      %v4852 = vpack.c.b16 %v4813, %v4812
      %v4853 = vpack.c.b16 %v4815, %v4814
      %v4854 = vpack.c.b16 %v4817, %v4816
      %v4855 = vpack.c.b16 %v4819, %v4818
      %v4856 = vpack.c.b16 %v4821, %v4820
      %v4857 = vpack.c.b16 %v4823, %v4822
      %v4858 = vpack.c.b16 %v4825, %v4824
      %v4859 = vpack.c.b16 %v4827, %v4826
      %4892 = vmatprep.subr.bf16.mxu0 0
      %4893 = vmatpush1.bf16.msra.mxu0 %v4835
      %4894 = vmatprep.subr.bf16.mxu0 0
      %4895 = vmatpush1.bf16.msra.mxu0 %v4834
      %4896 = vmatprep.subr.bf16.mxu0 0
      %4897 = vmatpush1.bf16.msra.mxu0 %v4833
      %4898 = vmatprep.subr.bf16.mxu0 0
      %4899 = vmatpush1.bf16.msra.mxu0 %v4832
      %4900 = vmatprep.subr.bf16.mxu0 0
      %4901 = vmatpush1.bf16.msra.mxu0 %v4831
      %4902 = vmatprep.subr.bf16.mxu0 0
      %4903 = vmatpush1.bf16.msra.mxu0 %v4830
      %4904 = vmatprep.subr.bf16.mxu0 0
      %4905 = vmatpush1.bf16.msra.mxu0 %v4829
      %4906 = vmatprep.subr.bf16.mxu0 0
      %4907 = vmatpush1.bf16.msra.mxu0 %v4828
      %4908 = vmatprep.subr.bf16.mxu0 0
      %4909 = vmatpush2.bf16.msra.mxu0 %v4843
      %4910 = vmatprep.subr.bf16.mxu0 0
      %4911 = vmatpush2.bf16.msra.mxu0 %v4842
      %4912 = vmatprep.subr.bf16.mxu0 0
      %4913 = vmatpush2.bf16.msra.mxu0 %v4841
      %4914 = vmatprep.subr.bf16.mxu0 0
      %4915 = vmatpush2.bf16.msra.mxu0 %v4840
      %4916 = vmatprep.subr.bf16.mxu0 0
      %4917 = vmatpush2.bf16.msra.mxu0 %v4839
      %4918 = vmatprep.subr.bf16.mxu0 0
      %4919 = vmatpush2.bf16.msra.mxu0 %v4838
      %4920 = vmatprep.subr.bf16.mxu0 0
      %4921 = vmatpush2.bf16.msra.mxu0 %v4837
      %4922 = vmatprep.subr.bf16.mxu0 0
      %4923 = vmatpush2.bf16.msra.mxu0 %v4836
      %4924 = vmatprep.mubr.bf16.mxu0 %v4086
      %4925 = vmatmul.mubr.bf16.gmra.mxu0 %v3995
      %v4926 = vpop.f32.mrf.mxu0
      %v4927 = vadd.f32 %v1043, %v4926
      %v4928 = vpop.f32.mrf.mxu0
      %v4929 = vpop.f32.mrf.mxu0
      %v4930 = vadd.f32 %v1043, %v4929
      %v4931 = vpop.f32.mrf.mxu0
      %4932 = vmatprep.mubr.bf16.mxu0 %v4098
      %4933 = vmatmul.mubr.bf16.gmra.mxu0 %v3996
      %v4934 = vpop.f32.mrf.mxu0
      %v4935 = vadd.f32 %v1043, %v4934
      %v4936 = vpop.f32.mrf.mxu0
      %v4937 = vpop.f32.mrf.mxu0
      %v4938 = vadd.f32 %v1043, %v4937
      %v4939 = vpop.f32.mrf.mxu0
      %4940 = vmatprep.mubr.bf16.mxu0 %v4110
      %4941 = vmatmul.mubr.bf16.gmra.mxu0 %v3997
      %v4942 = vpop.f32.mrf.mxu0
      %v4943 = vadd.f32 %v1043, %v4942
      %v4944 = vpop.f32.mrf.mxu0
      %v4945 = vpop.f32.mrf.mxu0
      %v4946 = vadd.f32 %v1043, %v4945
      %v4947 = vpop.f32.mrf.mxu0
      %4948 = vmatprep.mubr.bf16.mxu0 %v4122
      %4949 = vmatmul.mubr.bf16.gmra.mxu0 %v3998
      %v4950 = vpop.f32.mrf.mxu0
      %v4951 = vadd.f32 %v1043, %v4950
      %v4952 = vpop.f32.mrf.mxu0
      %v4953 = vpop.f32.mrf.mxu0
      %v4954 = vadd.f32 %v1043, %v4953
      %v4955 = vpop.f32.mrf.mxu0
      %4956 = vmatprep.mubr.bf16.mxu0 %v4134
      %4957 = vmatmul.mubr.bf16.gmra.mxu0 %v3999
      %v4958 = vpop.f32.mrf.mxu0
      %v4959 = vadd.f32 %v1043, %v4958
      %v4960 = vpop.f32.mrf.mxu0
      %v4961 = vpop.f32.mrf.mxu0
      %v4962 = vadd.f32 %v1043, %v4961
      %v4963 = vpop.f32.mrf.mxu0
      %4964 = vmatprep.mubr.bf16.mxu0 %v4146
      %4965 = vmatmul.mubr.bf16.gmra.mxu0 %v4000
      %v4966 = vpop.f32.mrf.mxu0
      %v4967 = vadd.f32 %v1043, %v4966
      %v4968 = vpop.f32.mrf.mxu0
      %v4969 = vpop.f32.mrf.mxu0
      %v4970 = vadd.f32 %v1043, %v4969
      %v4971 = vpop.f32.mrf.mxu0
      %4972 = vmatprep.mubr.bf16.mxu0 %v4158
      %4973 = vmatmul.mubr.bf16.gmra.mxu0 %v4001
      %v4974 = vpop.f32.mrf.mxu0
      %v4975 = vadd.f32 %v1043, %v4974
      %v4976 = vpop.f32.mrf.mxu0
      %v4977 = vpop.f32.mrf.mxu0
      %v4978 = vadd.f32 %v1043, %v4977
      %v4979 = vpop.f32.mrf.mxu0
      %4980 = vmatprep.mubr.bf16.mxu0 %v4170
      %4981 = vmatmul.mubr.bf16.gmra.mxu0 %v4002
      %v4982 = vpop.f32.mrf.mxu0
      %v4983 = vadd.f32 %v1043, %v4982
      %v4984 = vpop.f32.mrf.mxu0
      %v4985 = vpop.f32.mrf.mxu0
      %v4986 = vadd.f32 %v1043, %v4985
      %v4987 = vpop.f32.mrf.mxu0
      %4988 = vmatprep.mubr.bf16.mxu0 %v4182
      %4989 = vmatmul.mubr.bf16.gmra.mxu0 %v4003
      %v4990 = vpop.f32.mrf.mxu0
      %v4991 = vadd.f32 %v1043, %v4990
      %v4992 = vpop.f32.mrf.mxu0
      %v4993 = vpop.f32.mrf.mxu0
      %v4994 = vadd.f32 %v1043, %v4993
      %v4995 = vpop.f32.mrf.mxu0
      %4996 = vmatprep.mubr.bf16.mxu0 %v4194
      %4997 = vmatmul.mubr.bf16.gmra.mxu0 %v4004
      %v4998 = vpop.f32.mrf.mxu0
      %v4999 = vadd.f32 %v1043, %v4998
      %v5000 = vpop.f32.mrf.mxu0
      %v5001 = vpop.f32.mrf.mxu0
      %v5002 = vadd.f32 %v1043, %v5001
      %v5003 = vpop.f32.mrf.mxu0
      %5004 = vmatprep.mubr.bf16.mxu0 %v4206
      %5005 = vmatmul.mubr.bf16.gmra.mxu0 %v4005
      %v5006 = vpop.f32.mrf.mxu0
      %v5007 = vadd.f32 %v1043, %v5006
      %v5008 = vpop.f32.mrf.mxu0
      %v5009 = vpop.f32.mrf.mxu0
      %v5010 = vadd.f32 %v1043, %v5009
      %v5011 = vpop.f32.mrf.mxu0
      %5012 = vmatprep.mubr.bf16.mxu0 %v4218
      %5013 = vmatmul.mubr.bf16.gmra.mxu0 %v4006
      %v5014 = vpop.f32.mrf.mxu0
      %v5015 = vadd.f32 %v1043, %v5014
      %v5016 = vpop.f32.mrf.mxu0
      %v5017 = vpop.f32.mrf.mxu0
      %v5018 = vadd.f32 %v1043, %v5017
      %v5019 = vpop.f32.mrf.mxu0
      %5020 = vmatprep.mubr.bf16.mxu0 %v4230
      %5021 = vmatmul.mubr.bf16.gmra.mxu0 %v4007
      %v5022 = vpop.f32.mrf.mxu0
      %v5023 = vadd.f32 %v1043, %v5022
      %v5024 = vpop.f32.mrf.mxu0
      %v5025 = vpop.f32.mrf.mxu0
      %v5026 = vadd.f32 %v1043, %v5025
      %v5027 = vpop.f32.mrf.mxu0
      %5028 = vmatprep.mubr.bf16.mxu0 %v4242
      %5029 = vmatmul.mubr.bf16.gmra.mxu0 %v4008
      %v5030 = vpop.f32.mrf.mxu0
      %v5031 = vadd.f32 %v1043, %v5030
      %v5032 = vpop.f32.mrf.mxu0
      %v5033 = vpop.f32.mrf.mxu0
      %v5034 = vadd.f32 %v1043, %v5033
      %v5035 = vpop.f32.mrf.mxu0
      %5036 = vmatprep.mubr.bf16.mxu0 %v4254
      %5037 = vmatmul.mubr.bf16.gmra.mxu0 %v4009
      %v5038 = vpop.f32.mrf.mxu0
      %v5039 = vadd.f32 %v1043, %v5038
      %v5040 = vpop.f32.mrf.mxu0
      %v5041 = vpop.f32.mrf.mxu0
      %v5042 = vadd.f32 %v1043, %v5041
      %v5043 = vpop.f32.mrf.mxu0
      %5044 = vmatprep.mubr.bf16.mxu0 %v4266
      %5045 = vmatmul.mubr.bf16.gmra.mxu0 %v4010
      %v5046 = vpop.f32.mrf.mxu0
      %v5047 = vadd.f32 %v1043, %v5046
      %v5048 = vpop.f32.mrf.mxu0
      %v5049 = vpop.f32.mrf.mxu0
      %v5050 = vadd.f32 %v1043, %v5049
      %v5051 = vpop.f32.mrf.mxu0
      %5052 = vdwg.mxu0
      %5053 = vmatprep.subr.bf16.mxu0 0
      %5054 = vmatpush1.bf16.msra.mxu0 %v4851
      %5055 = vmatprep.subr.bf16.mxu0 0
      %5056 = vmatpush1.bf16.msra.mxu0 %v4850
      %5057 = vmatprep.subr.bf16.mxu0 0
      %5058 = vmatpush1.bf16.msra.mxu0 %v4849
      %5059 = vmatprep.subr.bf16.mxu0 0
      %5060 = vmatpush1.bf16.msra.mxu0 %v4848
      %5061 = vmatprep.subr.bf16.mxu0 0
      %5062 = vmatpush1.bf16.msra.mxu0 %v4847
      %5063 = vmatprep.subr.bf16.mxu0 0
      %5064 = vmatpush1.bf16.msra.mxu0 %v4846
      %5065 = vmatprep.subr.bf16.mxu0 0
      %5066 = vmatpush1.bf16.msra.mxu0 %v4845
      %5067 = vmatprep.subr.bf16.mxu0 0
      %5068 = vmatpush1.bf16.msra.mxu0 %v4844
      %5069 = vmatprep.subr.bf16.mxu0 0
      %5070 = vmatpush2.bf16.msra.mxu0 %v4859
      %5071 = vmatprep.subr.bf16.mxu0 0
      %5072 = vmatpush2.bf16.msra.mxu0 %v4858
      %5073 = vmatprep.subr.bf16.mxu0 0
      %5074 = vmatpush2.bf16.msra.mxu0 %v4857
      %5075 = vmatprep.subr.bf16.mxu0 0
      %5076 = vmatpush2.bf16.msra.mxu0 %v4856
      %5077 = vmatprep.subr.bf16.mxu0 0
      %5078 = vmatpush2.bf16.msra.mxu0 %v4855
      %5079 = vmatprep.subr.bf16.mxu0 0
      %5080 = vmatpush2.bf16.msra.mxu0 %v4854
      %5081 = vmatprep.subr.bf16.mxu0 0
      %5082 = vmatpush2.bf16.msra.mxu0 %v4853
      %5083 = vmatprep.subr.bf16.mxu0 0
      %5084 = vmatpush2.bf16.msra.mxu0 %v4852
      %5085 = vmatprep.mubr.bf16.mxu0 %v4438
      %5086 = vmatmul.mubr.bf16.gmra.mxu0 %v4347
      %v5087 = vpop.f32.mrf.mxu0
      %v5088 = vadd.f32 %v4927, %v5087
      %v5089 = vpop.f32.mrf.mxu0
      %v5090 = vpop.f32.mrf.mxu0
      %v5091 = vadd.f32 %v4930, %v5090
      %v5092 = vpop.f32.mrf.mxu0
      %5093 = vmatprep.mubr.bf16.mxu0 %v4450
      %5094 = vmatmul.mubr.bf16.gmra.mxu0 %v4348
      %v5095 = vpop.f32.mrf.mxu0
      %v5096 = vadd.f32 %v4935, %v5095
      %v5097 = vpop.f32.mrf.mxu0
      %v5098 = vpop.f32.mrf.mxu0
      %v5099 = vadd.f32 %v4938, %v5098
      %v5100 = vpop.f32.mrf.mxu0
      %5101 = vmatprep.mubr.bf16.mxu0 %v4462
      %5102 = vmatmul.mubr.bf16.gmra.mxu0 %v4349
      %v5103 = vpop.f32.mrf.mxu0
      %v5104 = vadd.f32 %v4943, %v5103
      %v5105 = vpop.f32.mrf.mxu0
      %v5106 = vpop.f32.mrf.mxu0
      %v5107 = vadd.f32 %v4946, %v5106
      %v5108 = vpop.f32.mrf.mxu0
      %5109 = vmatprep.mubr.bf16.mxu0 %v4474
      %5110 = vmatmul.mubr.bf16.gmra.mxu0 %v4350
      %v5111 = vpop.f32.mrf.mxu0
      %v5112 = vadd.f32 %v4951, %v5111
      %v5113 = vpop.f32.mrf.mxu0
      %v5114 = vpop.f32.mrf.mxu0
      %v5115 = vadd.f32 %v4954, %v5114
      %v5116 = vpop.f32.mrf.mxu0
      %5117 = vmatprep.mubr.bf16.mxu0 %v4486
      %5118 = vmatmul.mubr.bf16.gmra.mxu0 %v4351
      %v5119 = vpop.f32.mrf.mxu0
      %v5120 = vadd.f32 %v4959, %v5119
      %v5121 = vpop.f32.mrf.mxu0
      %v5122 = vpop.f32.mrf.mxu0
      %v5123 = vadd.f32 %v4962, %v5122
      %v5124 = vpop.f32.mrf.mxu0
      %5125 = vmatprep.mubr.bf16.mxu0 %v4498
      %5126 = vmatmul.mubr.bf16.gmra.mxu0 %v4352
      %v5127 = vpop.f32.mrf.mxu0
      %v5128 = vadd.f32 %v4967, %v5127
      %v5129 = vpop.f32.mrf.mxu0
      %v5130 = vpop.f32.mrf.mxu0
      %v5131 = vadd.f32 %v4970, %v5130
      %v5132 = vpop.f32.mrf.mxu0
      %5133 = vmatprep.mubr.bf16.mxu0 %v4510
      %5134 = vmatmul.mubr.bf16.gmra.mxu0 %v4353
      %v5135 = vpop.f32.mrf.mxu0
      %v5136 = vadd.f32 %v4975, %v5135
      %v5137 = vpop.f32.mrf.mxu0
      %v5138 = vpop.f32.mrf.mxu0
      %v5139 = vadd.f32 %v4978, %v5138
      %v5140 = vpop.f32.mrf.mxu0
      %5141 = vmatprep.mubr.bf16.mxu0 %v4522
      %5142 = vmatmul.mubr.bf16.gmra.mxu0 %v4354
      %v5143 = vpop.f32.mrf.mxu0
      %v5144 = vadd.f32 %v4983, %v5143
      %v5145 = vpop.f32.mrf.mxu0
      %v5146 = vpop.f32.mrf.mxu0
      %v5147 = vadd.f32 %v4986, %v5146
      %v5148 = vpop.f32.mrf.mxu0
      %5149 = vmatprep.mubr.bf16.mxu0 %v4534
      %5150 = vmatmul.mubr.bf16.gmra.mxu0 %v4355
      %v5151 = vpop.f32.mrf.mxu0
      %v5152 = vadd.f32 %v4991, %v5151
      %v5153 = vpop.f32.mrf.mxu0
      %v5154 = vpop.f32.mrf.mxu0
      %v5155 = vadd.f32 %v4994, %v5154
      %v5156 = vpop.f32.mrf.mxu0
      %5157 = vmatprep.mubr.bf16.mxu0 %v4546
      %5158 = vmatmul.mubr.bf16.gmra.mxu0 %v4356
      %v5159 = vpop.f32.mrf.mxu0
      %v5160 = vadd.f32 %v4999, %v5159
      %v5161 = vpop.f32.mrf.mxu0
      %v5162 = vpop.f32.mrf.mxu0
      %v5163 = vadd.f32 %v5002, %v5162
      %v5164 = vpop.f32.mrf.mxu0
      %5165 = vmatprep.mubr.bf16.mxu0 %v4558
      %5166 = vmatmul.mubr.bf16.gmra.mxu0 %v4357
      %v5167 = vpop.f32.mrf.mxu0
      %v5168 = vadd.f32 %v5007, %v5167
      %v5169 = vpop.f32.mrf.mxu0
      %v5170 = vpop.f32.mrf.mxu0
      %v5171 = vadd.f32 %v5010, %v5170
      %v5172 = vpop.f32.mrf.mxu0
      %5173 = vmatprep.mubr.bf16.mxu0 %v4570
      %5174 = vmatmul.mubr.bf16.gmra.mxu0 %v4358
      %v5175 = vpop.f32.mrf.mxu0
      %v5176 = vadd.f32 %v5015, %v5175
      %v5177 = vpop.f32.mrf.mxu0
      %v5178 = vpop.f32.mrf.mxu0
      %v5179 = vadd.f32 %v5018, %v5178
      %v5180 = vpop.f32.mrf.mxu0
      %5181 = vmatprep.mubr.bf16.mxu0 %v4582
      %5182 = vmatmul.mubr.bf16.gmra.mxu0 %v4359
      %v5183 = vpop.f32.mrf.mxu0
      %v5184 = vadd.f32 %v5023, %v5183
      %v5185 = vpop.f32.mrf.mxu0
      %v5186 = vpop.f32.mrf.mxu0
      %v5187 = vadd.f32 %v5026, %v5186
      %v5188 = vpop.f32.mrf.mxu0
      %5189 = vmatprep.mubr.bf16.mxu0 %v4594
      %5190 = vmatmul.mubr.bf16.gmra.mxu0 %v4360
      %v5191 = vpop.f32.mrf.mxu0
      %v5192 = vadd.f32 %v5031, %v5191
      %v5193 = vpop.f32.mrf.mxu0
      %v5194 = vpop.f32.mrf.mxu0
      %v5195 = vadd.f32 %v5034, %v5194
      %v5196 = vpop.f32.mrf.mxu0
      %5197 = vmatprep.mubr.bf16.mxu0 %v4606
      %5198 = vmatmul.mubr.bf16.gmra.mxu0 %v4361
      %v5199 = vpop.f32.mrf.mxu0
      %v5200 = vadd.f32 %v5039, %v5199
      %v5201 = vpop.f32.mrf.mxu0
      %v5202 = vpop.f32.mrf.mxu0
      %v5203 = vadd.f32 %v5042, %v5202
      %v5204 = vpop.f32.mrf.mxu0
      %5205 = vmatprep.mubr.bf16.mxu0 %v4618
      %5206 = vmatmul.mubr.bf16.gmra.mxu0 %v4362
      %v5207 = vpop.f32.mrf.mxu0
      %v5208 = vadd.f32 %v5047, %v5207
      %v5209 = vpop.f32.mrf.mxu0
      %v5210 = vpop.f32.mrf.mxu0
      %v5211 = vadd.f32 %v5050, %v5210
      %v5212 = vpop.f32.mrf.mxu0
      %5213 = vdwg.mxu0
      %s5214 = scalar_lea.vmem %s170, 32
      %5215 = vst [vmem:[%s5214] sm:$0xff] %v5088
      %5216 = vst [vmem:[%s5214 + $0x10] sm:$0xff] %v5091
      %5217 = vst [vmem:[%s5214 + $0x40] sm:$0xff] %v5096
      %5218 = vst [vmem:[%s5214 + $0x50] sm:$0xff] %v5099
      %5219 = vst [vmem:[%s5214 + $0x80] sm:$0xff] %v5104
      %5220 = vst [vmem:[%s5214 + $0x90] sm:$0xff] %v5107
      %5221 = vst [vmem:[%s5214 + $0xc0] sm:$0xff] %v5112
      %5222 = vst [vmem:[%s5214 + $0xd0] sm:$0xff] %v5115
      %5223 = vst [vmem:[%s5214 + $0x100] sm:$0xff] %v5120
      %5224 = vst [vmem:[%s5214 + $0x110] sm:$0xff] %v5123
      %5225 = vst [vmem:[%s5214 + $0x140] sm:$0xff] %v5128
      %5226 = vst [vmem:[%s5214 + $0x150] sm:$0xff] %v5131
      %5227 = vst [vmem:[%s5214 + $0x180] sm:$0xff] %v5136
      %5228 = vst [vmem:[%s5214 + $0x190] sm:$0xff] %v5139
      %5229 = vst [vmem:[%s5214 + $0x1c0] sm:$0xff] %v5144
      %5230 = vst [vmem:[%s5214 + $0x1d0] sm:$0xff] %v5147
      %5231 = vst [vmem:[%s5214 + $0x200] sm:$0xff] %v5152
      %5232 = vst [vmem:[%s5214 + $0x210] sm:$0xff] %v5155
      %5233 = vst [vmem:[%s5214 + $0x240] sm:$0xff] %v5160
      %5234 = vst [vmem:[%s5214 + $0x250] sm:$0xff] %v5163
      %5235 = vst [vmem:[%s5214 + $0x280] sm:$0xff] %v5168
      %5236 = vst [vmem:[%s5214 + $0x290] sm:$0xff] %v5171
      %5237 = vst [vmem:[%s5214 + $0x2c0] sm:$0xff] %v5176
      %5238 = vst [vmem:[%s5214 + $0x2d0] sm:$0xff] %v5179
      %5239 = vst [vmem:[%s5214 + $0x300] sm:$0xff] %v5184
      %5240 = vst [vmem:[%s5214 + $0x310] sm:$0xff] %v5187
      %5241 = vst [vmem:[%s5214 + $0x340] sm:$0xff] %v5192
      %5242 = vst [vmem:[%s5214 + $0x350] sm:$0xff] %v5195
      %5243 = vst [vmem:[%s5214 + $0x380] sm:$0xff] %v5200
      %5244 = vst [vmem:[%s5214 + $0x390] sm:$0xff] %v5203
      %5245 = vst [vmem:[%s5214 + $0x3c0] sm:$0xff] %v5208
      %5246 = vst [vmem:[%s5214 + $0x3d0] sm:$0xff] %v5211
      %v5247 = vld [vmem:[%s221] sm:$0xf]
      %v5248 = vld [vmem:[%s221 + $0x4] sm:$0xf]
      %v5249 = vld [vmem:[%s221 + $0x8] sm:$0x1]
      %v5250 = vld [vmem:[%s221 + $0xc] sm:$0xf]
      %v5251 = vld [vmem:[%s221 + $0x10] sm:$0xf]
      %v5252 = vld [vmem:[%s221 + $0x14] sm:$0x1]
      %v5253 = vld [vmem:[%s221 + $0x18] sm:$0xf]
      %v5254 = vld [vmem:[%s221 + $0x1c] sm:$0xf]
      %v5255 = vld [vmem:[%s221 + $0x20] sm:$0x1]
      %v5256 = vld [vmem:[%s221 + $0x24] sm:$0xf]
      %v5257 = vld [vmem:[%s221 + $0x28] sm:$0xf]
      %v5258 = vld [vmem:[%s221 + $0x2c] sm:$0x1]
      %v5259 = vld [vmem:[%s221 + $0x30] sm:$0xf]
      %v5260 = vld [vmem:[%s221 + $0x34] sm:$0xf]
      %v5261 = vld [vmem:[%s221 + $0x38] sm:$0x1]
      %v5262 = vld [vmem:[%s221 + $0x3c] sm:$0xf]
      %v5263 = vld [vmem:[%s221 + $0x40] sm:$0xf]
      %v5264 = vld [vmem:[%s221 + $0x44] sm:$0x1]
      %v5265 = vld [vmem:[%s221 + $0x48] sm:$0xf]
      %v5266 = vld [vmem:[%s221 + $0x4c] sm:$0xf]
      %v5267 = vld [vmem:[%s221 + $0x50] sm:$0x1]
      %v5268 = vld [vmem:[%s221 + $0x54] sm:$0xf]
      %v5269 = vld [vmem:[%s221 + $0x58] sm:$0xf]
      %v5270 = vld [vmem:[%s221 + $0x5c] sm:$0x1]
      %v5271 = vld [vmem:[%s221 + $0x60] sm:$0xf]
      %v5272 = vld [vmem:[%s221 + $0x64] sm:$0xf]
      %v5273 = vld [vmem:[%s221 + $0x68] sm:$0x1]
      %v5274 = vld [vmem:[%s221 + $0x6c] sm:$0xf]
      %v5275 = vld [vmem:[%s221 + $0x70] sm:$0xf]
      %v5276 = vld [vmem:[%s221 + $0x74] sm:$0x1]
      %v5277 = vld [vmem:[%s221 + $0x78] sm:$0xf]
      %v5278 = vld [vmem:[%s221 + $0x7c] sm:$0xf]
      %v5279 = vld [vmem:[%s221 + $0x80] sm:$0x1]
      %v5280 = vld [vmem:[%s221 + $0x84] sm:$0xf]
      %v5281 = vld [vmem:[%s221 + $0x88] sm:$0xf]
      %v5282 = vld [vmem:[%s221 + $0x8c] sm:$0x1]
      %v5283 = vld [vmem:[%s221 + $0x90] sm:$0xf]
      %v5284 = vld [vmem:[%s221 + $0x94] sm:$0xf]
      %v5285 = vld [vmem:[%s221 + $0x98] sm:$0x1]
      %v5286 = vld [vmem:[%s221 + $0x9c] sm:$0xf]
      %v5287 = vld [vmem:[%s221 + $0xa0] sm:$0xf]
      %v5288 = vld [vmem:[%s221 + $0xa4] sm:$0x1]
      %v5289 = vld [vmem:[%s221 + $0xa8] sm:$0xf]
      %v5290 = vld [vmem:[%s221 + $0xac] sm:$0xf]
      %v5291 = vld [vmem:[%s221 + $0xb0] sm:$0x1]
      %v5292 = vld [vmem:[%s221 + $0xb4] sm:$0xf]
      %v5293 = vld [vmem:[%s221 + $0xb8] sm:$0xf]
      %v5294 = vld [vmem:[%s221 + $0xbc] sm:$0x1]
      %v5295 = vld [vmem:[%s221] sm:$0xe]
      %v5296 = vld [vmem:[%s221 + $0xc] sm:$0xe]
      %v5297 = vld [vmem:[%s221 + $0x18] sm:$0xe]
      %v5298 = vld [vmem:[%s221 + $0x24] sm:$0xe]
      %v5299 = vld [vmem:[%s221 + $0x30] sm:$0xe]
      %v5300 = vld [vmem:[%s221 + $0x3c] sm:$0xe]
      %v5301 = vld [vmem:[%s221 + $0x48] sm:$0xe]
      %v5302 = vld [vmem:[%s221 + $0x54] sm:$0xe]
      %v5303 = vld [vmem:[%s221 + $0x60] sm:$0xe]
      %v5304 = vld [vmem:[%s221 + $0x6c] sm:$0xe]
      %v5305 = vld [vmem:[%s221 + $0x78] sm:$0xe]
      %v5306 = vld [vmem:[%s221 + $0x84] sm:$0xe]
      %v5307 = vld [vmem:[%s221 + $0x90] sm:$0xe]
      %v5308 = vld [vmem:[%s221 + $0x9c] sm:$0xe]
      %v5309 = vld [vmem:[%s221 + $0xa8] sm:$0xe]
      %v5310 = vld [vmem:[%s221 + $0xb4] sm:$0xe]
      %v5311 = vld [vmem:[%s3882] sm:$0xf]
      %v5312 = vld [vmem:[%s3882 + $0x4] sm:$0xf]
      %v5313 = vld [vmem:[%s3882 + $0x8] sm:$0x1]
      %v5314 = vld [vmem:[%s3882 + $0xc] sm:$0xf]
      %v5315 = vld [vmem:[%s3882 + $0x10] sm:$0xf]
      %v5316 = vld [vmem:[%s3882 + $0x14] sm:$0x1]
      %v5317 = vld [vmem:[%s3882 + $0x18] sm:$0xf]
      %v5318 = vld [vmem:[%s3882 + $0x1c] sm:$0xf]
      %v5319 = vld [vmem:[%s3882 + $0x20] sm:$0x1]
      %v5320 = vld [vmem:[%s3882 + $0x24] sm:$0xf]
      %v5321 = vld [vmem:[%s3882 + $0x28] sm:$0xf]
      %v5322 = vld [vmem:[%s3882 + $0x2c] sm:$0x1]
      %v5323 = vld [vmem:[%s3882 + $0x30] sm:$0xf]
      %v5324 = vld [vmem:[%s3882 + $0x34] sm:$0xf]
      %v5325 = vld [vmem:[%s3882 + $0x38] sm:$0x1]
      %v5326 = vld [vmem:[%s3882 + $0x3c] sm:$0xf]
      %v5327 = vld [vmem:[%s3882 + $0x40] sm:$0xf]
      %v5328 = vld [vmem:[%s3882 + $0x44] sm:$0x1]
      %v5329 = vld [vmem:[%s3882 + $0x48] sm:$0xf]
      %v5330 = vld [vmem:[%s3882 + $0x4c] sm:$0xf]
      %v5331 = vld [vmem:[%s3882 + $0x50] sm:$0x1]
      %v5332 = vld [vmem:[%s3882 + $0x54] sm:$0xf]
      %v5333 = vld [vmem:[%s3882 + $0x58] sm:$0xf]
      %v5334 = vld [vmem:[%s3882 + $0x5c] sm:$0x1]
      %v5335 = vld [vmem:[%s3882 + $0x60] sm:$0xf]
      %v5336 = vld [vmem:[%s3882 + $0x64] sm:$0xf]
      %v5337 = vld [vmem:[%s3882 + $0x68] sm:$0x1]
      %v5338 = vld [vmem:[%s3882 + $0x6c] sm:$0xf]
      %v5339 = vld [vmem:[%s3882 + $0x70] sm:$0xf]
      %v5340 = vld [vmem:[%s3882 + $0x74] sm:$0x1]
      %v5341 = vld [vmem:[%s3882 + $0x78] sm:$0xf]
      %v5342 = vld [vmem:[%s3882 + $0x7c] sm:$0xf]
      %v5343 = vld [vmem:[%s3882 + $0x80] sm:$0x1]
      %v5344 = vld [vmem:[%s3882 + $0x84] sm:$0xf]
      %v5345 = vld [vmem:[%s3882 + $0x88] sm:$0xf]
      %v5346 = vld [vmem:[%s3882 + $0x8c] sm:$0x1]
      %v5347 = vld [vmem:[%s3882 + $0x90] sm:$0xf]
      %v5348 = vld [vmem:[%s3882 + $0x94] sm:$0xf]
      %v5349 = vld [vmem:[%s3882 + $0x98] sm:$0x1]
      %v5350 = vld [vmem:[%s3882 + $0x9c] sm:$0xf]
      %v5351 = vld [vmem:[%s3882 + $0xa0] sm:$0xf]
      %v5352 = vld [vmem:[%s3882 + $0xa4] sm:$0x1]
      %v5353 = vld [vmem:[%s3882 + $0xa8] sm:$0xf]
      %v5354 = vld [vmem:[%s3882 + $0xac] sm:$0xf]
      %v5355 = vld [vmem:[%s3882 + $0xb0] sm:$0x1]
      %v5356 = vld [vmem:[%s3882 + $0xb4] sm:$0xf]
      %v5357 = vld [vmem:[%s3882 + $0xb8] sm:$0xf]
      %v5358 = vld [vmem:[%s3882 + $0xbc] sm:$0x1]
      %v5359 = vld [vmem:[%s3882] sm:$0xe]
      %v5360 = vld [vmem:[%s3882 + $0xc] sm:$0xe]
      %v5361 = vld [vmem:[%s3882 + $0x18] sm:$0xe]
      %v5362 = vld [vmem:[%s3882 + $0x24] sm:$0xe]
      %v5363 = vld [vmem:[%s3882 + $0x30] sm:$0xe]
      %v5364 = vld [vmem:[%s3882 + $0x3c] sm:$0xe]
      %v5365 = vld [vmem:[%s3882 + $0x48] sm:$0xe]
      %v5366 = vld [vmem:[%s3882 + $0x54] sm:$0xe]
      %v5367 = vld [vmem:[%s3882 + $0x60] sm:$0xe]
      %v5368 = vld [vmem:[%s3882 + $0x6c] sm:$0xe]
      %v5369 = vld [vmem:[%s3882 + $0x78] sm:$0xe]
      %v5370 = vld [vmem:[%s3882 + $0x84] sm:$0xe]
      %v5371 = vld [vmem:[%s3882 + $0x90] sm:$0xe]
      %v5372 = vld [vmem:[%s3882 + $0x9c] sm:$0xe]
      %v5373 = vld [vmem:[%s3882 + $0xa8] sm:$0xe]
      %v5374 = vld [vmem:[%s3882 + $0xb4] sm:$0xe]
      %v5423 = vunpack.c.l.b16 %v5247
      %v5424 = vunpack.c.l.b16 %v5248
      %v5425 = vunpack.c.l.b16 %v5249
      %v5426 = vunpack.c.l.b16 %v5250
      %v5427 = vunpack.c.l.b16 %v5251
      %v5428 = vunpack.c.l.b16 %v5252
      %v5429 = vunpack.c.l.b16 %v5253
      %v5430 = vunpack.c.l.b16 %v5254
      %v5431 = vunpack.c.l.b16 %v5255
      %v5432 = vunpack.c.l.b16 %v5256
      %v5433 = vunpack.c.l.b16 %v5257
      %v5434 = vunpack.c.l.b16 %v5258
      %v5435 = vunpack.c.l.b16 %v5259
      %v5436 = vunpack.c.l.b16 %v5260
      %v5437 = vunpack.c.l.b16 %v5261
      %v5438 = vunpack.c.l.b16 %v5262
      %v5439 = vunpack.c.l.b16 %v5263
      %v5440 = vunpack.c.l.b16 %v5264
      %v5441 = vunpack.c.l.b16 %v5265
      %v5442 = vunpack.c.l.b16 %v5266
      %v5443 = vunpack.c.l.b16 %v5267
      %v5444 = vunpack.c.l.b16 %v5268
      %v5445 = vunpack.c.l.b16 %v5269
      %v5446 = vunpack.c.l.b16 %v5270
      %v5447 = vunpack.c.l.b16 %v5271
      %v5448 = vunpack.c.l.b16 %v5272
      %v5449 = vunpack.c.l.b16 %v5273
      %v5450 = vunpack.c.l.b16 %v5274
      %v5451 = vunpack.c.l.b16 %v5275
      %v5452 = vunpack.c.l.b16 %v5276
      %v5453 = vunpack.c.l.b16 %v5277
      %v5454 = vunpack.c.l.b16 %v5278
      %v5455 = vunpack.c.l.b16 %v5279
      %v5456 = vunpack.c.l.b16 %v5280
      %v5457 = vunpack.c.l.b16 %v5281
      %v5458 = vunpack.c.l.b16 %v5282
      %v5459 = vunpack.c.l.b16 %v5283
      %v5460 = vunpack.c.l.b16 %v5284
      %v5461 = vunpack.c.l.b16 %v5285
      %v5462 = vunpack.c.l.b16 %v5286
      %v5463 = vunpack.c.l.b16 %v5287
      %v5464 = vunpack.c.l.b16 %v5288
      %v5465 = vunpack.c.l.b16 %v5289
      %v5466 = vunpack.c.l.b16 %v5290
      %v5467 = vunpack.c.l.b16 %v5291
      %v5468 = vunpack.c.l.b16 %v5292
      %v5469 = vunpack.c.l.b16 %v5293
      %v5470 = vunpack.c.l.b16 %v5294
      %v5471 = vpack.c.b16 %v5424, %v5423
      %v5472 = vpack.c.b16 %v5425, %v5425
      %v5473 = vpack.c.b16 %v5427, %v5426
      %v5474 = vpack.c.b16 %v5428, %v5428
      %v5475 = vpack.c.b16 %v5430, %v5429
      %v5476 = vpack.c.b16 %v5431, %v5431
      %v5477 = vpack.c.b16 %v5433, %v5432
      %v5478 = vpack.c.b16 %v5434, %v5434
      %v5479 = vpack.c.b16 %v5436, %v5435
      %v5480 = vpack.c.b16 %v5437, %v5437
      %v5481 = vpack.c.b16 %v5439, %v5438
      %v5482 = vpack.c.b16 %v5440, %v5440
      %v5483 = vpack.c.b16 %v5442, %v5441
      %v5484 = vpack.c.b16 %v5443, %v5443
      %v5485 = vpack.c.b16 %v5445, %v5444
      %v5486 = vpack.c.b16 %v5446, %v5446
      %v5487 = vpack.c.b16 %v5448, %v5447
      %v5488 = vpack.c.b16 %v5449, %v5449
      %v5489 = vpack.c.b16 %v5451, %v5450
      %v5490 = vpack.c.b16 %v5452, %v5452
      %v5491 = vpack.c.b16 %v5454, %v5453
      %v5492 = vpack.c.b16 %v5455, %v5455
      %v5493 = vpack.c.b16 %v5457, %v5456
      %v5494 = vpack.c.b16 %v5458, %v5458
      %v5495 = vpack.c.b16 %v5460, %v5459
      %v5496 = vpack.c.b16 %v5461, %v5461
      %v5497 = vpack.c.b16 %v5463, %v5462
      %v5498 = vpack.c.b16 %v5464, %v5464
      %v5499 = vpack.c.b16 %v5466, %v5465
      %v5500 = vpack.c.b16 %v5467, %v5467
      %v5501 = vpack.c.b16 %v5469, %v5468
      %v5502 = vpack.c.b16 %v5470, %v5470
      %v5519 = vunpack.c.l.b16 %v5295
      %v5520 = vunpack.c.l.b16 %v5296
      %v5521 = vunpack.c.l.b16 %v5297
      %v5522 = vunpack.c.l.b16 %v5298
      %v5523 = vunpack.c.l.b16 %v5299
      %v5524 = vunpack.c.l.b16 %v5300
      %v5525 = vunpack.c.l.b16 %v5301
      %v5526 = vunpack.c.l.b16 %v5302
      %v5527 = vunpack.c.l.b16 %v5303
      %v5528 = vunpack.c.l.b16 %v5304
      %v5529 = vunpack.c.l.b16 %v5305
      %v5530 = vunpack.c.l.b16 %v5306
      %v5531 = vunpack.c.l.b16 %v5307
      %v5532 = vunpack.c.l.b16 %v5308
      %v5533 = vunpack.c.l.b16 %v5309
      %v5534 = vunpack.c.l.b16 %v5310
      %v5535 = vpack.c.b16 %v5424, %v5519
      %v5536 = vpack.c.b16 %v5427, %v5520
      %v5537 = vpack.c.b16 %v5430, %v5521
      %v5538 = vpack.c.b16 %v5433, %v5522
      %v5539 = vpack.c.b16 %v5436, %v5523
      %v5540 = vpack.c.b16 %v5439, %v5524
      %v5541 = vpack.c.b16 %v5442, %v5525
      %v5542 = vpack.c.b16 %v5445, %v5526
      %v5543 = vpack.c.b16 %v5448, %v5527
      %v5544 = vpack.c.b16 %v5451, %v5528
      %v5545 = vpack.c.b16 %v5454, %v5529
      %v5546 = vpack.c.b16 %v5457, %v5530
      %v5547 = vpack.c.b16 %v5460, %v5531
      %v5548 = vpack.c.b16 %v5463, %v5532
      %v5549 = vpack.c.b16 %v5466, %v5533
      %v5550 = vpack.c.b16 %v5469, %v5534
      %v5552 = vshrl.u32 %v5535, 16
      %v5554 = vshll.u32 %v5535, 16
      %v5556 = vrot.slane %v5554, 1
      %v5557 = vor.u32 %v5552, %v5556
      %v5559 = vshll.u32 %v5472, 16
      %v5561 = vrot.slane %v5559, 1
      %v5562 = vsel %vm414, %v5557, %v5561
      %v5563 = vshrl.u32 %v5472, 16
      %v5566 = vshrl.u32 %v5536, 16
      %v5568 = vshll.u32 %v5536, 16
      %v5570 = vrot.slane %v5568, 1
      %v5571 = vor.u32 %v5566, %v5570
      %v5573 = vshll.u32 %v5474, 16
      %v5575 = vrot.slane %v5573, 1
      %v5576 = vsel %vm414, %v5571, %v5575
      %v5577 = vshrl.u32 %v5474, 16
      %v5580 = vshrl.u32 %v5537, 16
      %v5582 = vshll.u32 %v5537, 16
      %v5584 = vrot.slane %v5582, 1
      %v5585 = vor.u32 %v5580, %v5584
      %v5587 = vshll.u32 %v5476, 16
      %v5589 = vrot.slane %v5587, 1
      %v5590 = vsel %vm414, %v5585, %v5589
      %v5591 = vshrl.u32 %v5476, 16
      %v5594 = vshrl.u32 %v5538, 16
      %v5596 = vshll.u32 %v5538, 16
      %v5598 = vrot.slane %v5596, 1
      %v5599 = vor.u32 %v5594, %v5598
      %v5601 = vshll.u32 %v5478, 16
      %v5603 = vrot.slane %v5601, 1
      %v5604 = vsel %vm414, %v5599, %v5603
      %v5605 = vshrl.u32 %v5478, 16
      %v5608 = vshrl.u32 %v5539, 16
      %v5610 = vshll.u32 %v5539, 16
      %v5612 = vrot.slane %v5610, 1
      %v5613 = vor.u32 %v5608, %v5612
      %v5615 = vshll.u32 %v5480, 16
      %v5617 = vrot.slane %v5615, 1
      %v5618 = vsel %vm414, %v5613, %v5617
      %v5619 = vshrl.u32 %v5480, 16
      %v5622 = vshrl.u32 %v5540, 16
      %v5624 = vshll.u32 %v5540, 16
      %v5626 = vrot.slane %v5624, 1
      %v5627 = vor.u32 %v5622, %v5626
      %v5629 = vshll.u32 %v5482, 16
      %v5631 = vrot.slane %v5629, 1
      %v5632 = vsel %vm414, %v5627, %v5631
      %v5633 = vshrl.u32 %v5482, 16
      %v5636 = vshrl.u32 %v5541, 16
      %v5638 = vshll.u32 %v5541, 16
      %v5640 = vrot.slane %v5638, 1
      %v5641 = vor.u32 %v5636, %v5640
      %v5643 = vshll.u32 %v5484, 16
      %v5645 = vrot.slane %v5643, 1
      %v5646 = vsel %vm414, %v5641, %v5645
      %v5647 = vshrl.u32 %v5484, 16
      %v5650 = vshrl.u32 %v5542, 16
      %v5652 = vshll.u32 %v5542, 16
      %v5654 = vrot.slane %v5652, 1
      %v5655 = vor.u32 %v5650, %v5654
      %v5657 = vshll.u32 %v5486, 16
      %v5659 = vrot.slane %v5657, 1
      %v5660 = vsel %vm414, %v5655, %v5659
      %v5661 = vshrl.u32 %v5486, 16
      %v5664 = vshrl.u32 %v5543, 16
      %v5666 = vshll.u32 %v5543, 16
      %v5668 = vrot.slane %v5666, 1
      %v5669 = vor.u32 %v5664, %v5668
      %v5671 = vshll.u32 %v5488, 16
      %v5673 = vrot.slane %v5671, 1
      %v5674 = vsel %vm414, %v5669, %v5673
      %v5675 = vshrl.u32 %v5488, 16
      %v5678 = vshrl.u32 %v5544, 16
      %v5680 = vshll.u32 %v5544, 16
      %v5682 = vrot.slane %v5680, 1
      %v5683 = vor.u32 %v5678, %v5682
      %v5685 = vshll.u32 %v5490, 16
      %v5687 = vrot.slane %v5685, 1
      %v5688 = vsel %vm414, %v5683, %v5687
      %v5689 = vshrl.u32 %v5490, 16
      %v5692 = vshrl.u32 %v5545, 16
      %v5694 = vshll.u32 %v5545, 16
      %v5696 = vrot.slane %v5694, 1
      %v5697 = vor.u32 %v5692, %v5696
      %v5699 = vshll.u32 %v5492, 16
      %v5701 = vrot.slane %v5699, 1
      %v5702 = vsel %vm414, %v5697, %v5701
      %v5703 = vshrl.u32 %v5492, 16
      %v5706 = vshrl.u32 %v5546, 16
      %v5708 = vshll.u32 %v5546, 16
      %v5710 = vrot.slane %v5708, 1
      %v5711 = vor.u32 %v5706, %v5710
      %v5713 = vshll.u32 %v5494, 16
      %v5715 = vrot.slane %v5713, 1
      %v5716 = vsel %vm414, %v5711, %v5715
      %v5717 = vshrl.u32 %v5494, 16
      %v5720 = vshrl.u32 %v5547, 16
      %v5722 = vshll.u32 %v5547, 16
      %v5724 = vrot.slane %v5722, 1
      %v5725 = vor.u32 %v5720, %v5724
      %v5727 = vshll.u32 %v5496, 16
      %v5729 = vrot.slane %v5727, 1
      %v5730 = vsel %vm414, %v5725, %v5729
      %v5731 = vshrl.u32 %v5496, 16
      %v5734 = vshrl.u32 %v5548, 16
      %v5736 = vshll.u32 %v5548, 16
      %v5738 = vrot.slane %v5736, 1
      %v5739 = vor.u32 %v5734, %v5738
      %v5741 = vshll.u32 %v5498, 16
      %v5743 = vrot.slane %v5741, 1
      %v5744 = vsel %vm414, %v5739, %v5743
      %v5745 = vshrl.u32 %v5498, 16
      %v5748 = vshrl.u32 %v5549, 16
      %v5750 = vshll.u32 %v5549, 16
      %v5752 = vrot.slane %v5750, 1
      %v5753 = vor.u32 %v5748, %v5752
      %v5755 = vshll.u32 %v5500, 16
      %v5757 = vrot.slane %v5755, 1
      %v5758 = vsel %vm414, %v5753, %v5757
      %v5759 = vshrl.u32 %v5500, 16
      %v5762 = vshrl.u32 %v5550, 16
      %v5764 = vshll.u32 %v5550, 16
      %v5766 = vrot.slane %v5764, 1
      %v5767 = vor.u32 %v5762, %v5766
      %v5769 = vshll.u32 %v5502, 16
      %v5771 = vrot.slane %v5769, 1
      %v5772 = vsel %vm414, %v5767, %v5771
      %v5773 = vshrl.u32 %v5502, 16
      %v5823 = vunpack.c.l.b16 %v5311
      %v5824 = vunpack.c.l.b16 %v5312
      %v5825 = vunpack.c.l.b16 %v5313
      %v5826 = vunpack.c.l.b16 %v5314
      %v5827 = vunpack.c.l.b16 %v5315
      %v5828 = vunpack.c.l.b16 %v5316
      %v5829 = vunpack.c.l.b16 %v5317
      %v5830 = vunpack.c.l.b16 %v5318
      %v5831 = vunpack.c.l.b16 %v5319
      %v5832 = vunpack.c.l.b16 %v5320
      %v5833 = vunpack.c.l.b16 %v5321
      %v5834 = vunpack.c.l.b16 %v5322
      %v5835 = vunpack.c.l.b16 %v5323
      %v5836 = vunpack.c.l.b16 %v5324
      %v5837 = vunpack.c.l.b16 %v5325
      %v5838 = vunpack.c.l.b16 %v5326
      %v5839 = vunpack.c.l.b16 %v5327
      %v5840 = vunpack.c.l.b16 %v5328
      %v5841 = vunpack.c.l.b16 %v5329
      %v5842 = vunpack.c.l.b16 %v5330
      %v5843 = vunpack.c.l.b16 %v5331
      %v5844 = vunpack.c.l.b16 %v5332
      %v5845 = vunpack.c.l.b16 %v5333
      %v5846 = vunpack.c.l.b16 %v5334
      %v5847 = vunpack.c.l.b16 %v5335
      %v5848 = vunpack.c.l.b16 %v5336
      %v5849 = vunpack.c.l.b16 %v5337
      %v5850 = vunpack.c.l.b16 %v5338
      %v5851 = vunpack.c.l.b16 %v5339
      %v5852 = vunpack.c.l.b16 %v5340
      %v5853 = vunpack.c.l.b16 %v5341
      %v5854 = vunpack.c.l.b16 %v5342
      %v5855 = vunpack.c.l.b16 %v5343
      %v5856 = vunpack.c.l.b16 %v5344
      %v5857 = vunpack.c.l.b16 %v5345
      %v5858 = vunpack.c.l.b16 %v5346
      %v5859 = vunpack.c.l.b16 %v5347
      %v5860 = vunpack.c.l.b16 %v5348
      %v5861 = vunpack.c.l.b16 %v5349
      %v5862 = vunpack.c.l.b16 %v5350
      %v5863 = vunpack.c.l.b16 %v5351
      %v5864 = vunpack.c.l.b16 %v5352
      %v5865 = vunpack.c.l.b16 %v5353
      %v5866 = vunpack.c.l.b16 %v5354
      %v5867 = vunpack.c.l.b16 %v5355
      %v5868 = vunpack.c.l.b16 %v5356
      %v5869 = vunpack.c.l.b16 %v5357
      %v5870 = vunpack.c.l.b16 %v5358
      %v5871 = vpack.c.b16 %v5824, %v5823
      %v5872 = vpack.c.b16 %v5825, %v5825
      %v5873 = vpack.c.b16 %v5827, %v5826
      %v5874 = vpack.c.b16 %v5828, %v5828
      %v5875 = vpack.c.b16 %v5830, %v5829
      %v5876 = vpack.c.b16 %v5831, %v5831
      %v5877 = vpack.c.b16 %v5833, %v5832
      %v5878 = vpack.c.b16 %v5834, %v5834
      %v5879 = vpack.c.b16 %v5836, %v5835
      %v5880 = vpack.c.b16 %v5837, %v5837
      %v5881 = vpack.c.b16 %v5839, %v5838
      %v5882 = vpack.c.b16 %v5840, %v5840
      %v5883 = vpack.c.b16 %v5842, %v5841
      %v5884 = vpack.c.b16 %v5843, %v5843
      %v5885 = vpack.c.b16 %v5845, %v5844
      %v5886 = vpack.c.b16 %v5846, %v5846
      %v5887 = vpack.c.b16 %v5848, %v5847
      %v5888 = vpack.c.b16 %v5849, %v5849
      %v5889 = vpack.c.b16 %v5851, %v5850
      %v5890 = vpack.c.b16 %v5852, %v5852
      %v5891 = vpack.c.b16 %v5854, %v5853
      %v5892 = vpack.c.b16 %v5855, %v5855
      %v5893 = vpack.c.b16 %v5857, %v5856
      %v5894 = vpack.c.b16 %v5858, %v5858
      %v5895 = vpack.c.b16 %v5860, %v5859
      %v5896 = vpack.c.b16 %v5861, %v5861
      %v5897 = vpack.c.b16 %v5863, %v5862
      %v5898 = vpack.c.b16 %v5864, %v5864
      %v5899 = vpack.c.b16 %v5866, %v5865
      %v5900 = vpack.c.b16 %v5867, %v5867
      %v5901 = vpack.c.b16 %v5869, %v5868
      %v5902 = vpack.c.b16 %v5870, %v5870
      %v5919 = vunpack.c.l.b16 %v5359
      %v5920 = vunpack.c.l.b16 %v5360
      %v5921 = vunpack.c.l.b16 %v5361
      %v5922 = vunpack.c.l.b16 %v5362
      %v5923 = vunpack.c.l.b16 %v5363
      %v5924 = vunpack.c.l.b16 %v5364
      %v5925 = vunpack.c.l.b16 %v5365
      %v5926 = vunpack.c.l.b16 %v5366
      %v5927 = vunpack.c.l.b16 %v5367
      %v5928 = vunpack.c.l.b16 %v5368
      %v5929 = vunpack.c.l.b16 %v5369
      %v5930 = vunpack.c.l.b16 %v5370
      %v5931 = vunpack.c.l.b16 %v5371
      %v5932 = vunpack.c.l.b16 %v5372
      %v5933 = vunpack.c.l.b16 %v5373
      %v5934 = vunpack.c.l.b16 %v5374
      %v5935 = vpack.c.b16 %v5824, %v5919
      %v5936 = vpack.c.b16 %v5827, %v5920
      %v5937 = vpack.c.b16 %v5830, %v5921
      %v5938 = vpack.c.b16 %v5833, %v5922
      %v5939 = vpack.c.b16 %v5836, %v5923
      %v5940 = vpack.c.b16 %v5839, %v5924
      %v5941 = vpack.c.b16 %v5842, %v5925
      %v5942 = vpack.c.b16 %v5845, %v5926
      %v5943 = vpack.c.b16 %v5848, %v5927
      %v5944 = vpack.c.b16 %v5851, %v5928
      %v5945 = vpack.c.b16 %v5854, %v5929
      %v5946 = vpack.c.b16 %v5857, %v5930
      %v5947 = vpack.c.b16 %v5860, %v5931
      %v5948 = vpack.c.b16 %v5863, %v5932
      %v5949 = vpack.c.b16 %v5866, %v5933
      %v5950 = vpack.c.b16 %v5869, %v5934
      %v5952 = vshrl.u32 %v5935, 16
      %v5954 = vshll.u32 %v5935, 16
      %v5956 = vrot.slane %v5954, 1
      %v5957 = vor.u32 %v5952, %v5956
      %v5959 = vshll.u32 %v5872, 16
      %v5961 = vrot.slane %v5959, 1
      %v5962 = vsel %vm414, %v5957, %v5961
      %v5963 = vshrl.u32 %v5872, 16
      %v5966 = vshrl.u32 %v5936, 16
      %v5968 = vshll.u32 %v5936, 16
      %v5970 = vrot.slane %v5968, 1
      %v5971 = vor.u32 %v5966, %v5970
      %v5973 = vshll.u32 %v5874, 16
      %v5975 = vrot.slane %v5973, 1
      %v5976 = vsel %vm414, %v5971, %v5975
      %v5977 = vshrl.u32 %v5874, 16
      %v5980 = vshrl.u32 %v5937, 16
      %v5982 = vshll.u32 %v5937, 16
      %v5984 = vrot.slane %v5982, 1
      %v5985 = vor.u32 %v5980, %v5984
      %v5987 = vshll.u32 %v5876, 16
      %v5989 = vrot.slane %v5987, 1
      %v5990 = vsel %vm414, %v5985, %v5989
      %v5991 = vshrl.u32 %v5876, 16
      %v5994 = vshrl.u32 %v5938, 16
      %v5996 = vshll.u32 %v5938, 16
      %v5998 = vrot.slane %v5996, 1
      %v5999 = vor.u32 %v5994, %v5998
      %v6001 = vshll.u32 %v5878, 16
      %v6003 = vrot.slane %v6001, 1
      %v6004 = vsel %vm414, %v5999, %v6003
      %v6005 = vshrl.u32 %v5878, 16
      %v6008 = vshrl.u32 %v5939, 16
      %v6010 = vshll.u32 %v5939, 16
      %v6012 = vrot.slane %v6010, 1
      %v6013 = vor.u32 %v6008, %v6012
      %v6015 = vshll.u32 %v5880, 16
      %v6017 = vrot.slane %v6015, 1
      %v6018 = vsel %vm414, %v6013, %v6017
      %v6019 = vshrl.u32 %v5880, 16
      %v6022 = vshrl.u32 %v5940, 16
      %v6024 = vshll.u32 %v5940, 16
      %v6026 = vrot.slane %v6024, 1
      %v6027 = vor.u32 %v6022, %v6026
      %v6029 = vshll.u32 %v5882, 16
      %v6031 = vrot.slane %v6029, 1
      %v6032 = vsel %vm414, %v6027, %v6031
      %v6033 = vshrl.u32 %v5882, 16
      %v6036 = vshrl.u32 %v5941, 16
      %v6038 = vshll.u32 %v5941, 16
      %v6040 = vrot.slane %v6038, 1
      %v6041 = vor.u32 %v6036, %v6040
      %v6043 = vshll.u32 %v5884, 16
      %v6045 = vrot.slane %v6043, 1
      %v6046 = vsel %vm414, %v6041, %v6045
      %v6047 = vshrl.u32 %v5884, 16
      %v6050 = vshrl.u32 %v5942, 16
      %v6052 = vshll.u32 %v5942, 16
      %v6054 = vrot.slane %v6052, 1
      %v6055 = vor.u32 %v6050, %v6054
      %v6057 = vshll.u32 %v5886, 16
      %v6059 = vrot.slane %v6057, 1
      %v6060 = vsel %vm414, %v6055, %v6059
      %v6061 = vshrl.u32 %v5886, 16
      %v6064 = vshrl.u32 %v5943, 16
      %v6066 = vshll.u32 %v5943, 16
      %v6068 = vrot.slane %v6066, 1
      %v6069 = vor.u32 %v6064, %v6068
      %v6071 = vshll.u32 %v5888, 16
      %v6073 = vrot.slane %v6071, 1
      %v6074 = vsel %vm414, %v6069, %v6073
      %v6075 = vshrl.u32 %v5888, 16
      %v6078 = vshrl.u32 %v5944, 16
      %v6080 = vshll.u32 %v5944, 16
      %v6082 = vrot.slane %v6080, 1
      %v6083 = vor.u32 %v6078, %v6082
      %v6085 = vshll.u32 %v5890, 16
      %v6087 = vrot.slane %v6085, 1
      %v6088 = vsel %vm414, %v6083, %v6087
      %v6089 = vshrl.u32 %v5890, 16
      %v6092 = vshrl.u32 %v5945, 16
      %v6094 = vshll.u32 %v5945, 16
      %v6096 = vrot.slane %v6094, 1
      %v6097 = vor.u32 %v6092, %v6096
      %v6099 = vshll.u32 %v5892, 16
      %v6101 = vrot.slane %v6099, 1
      %v6102 = vsel %vm414, %v6097, %v6101
      %v6103 = vshrl.u32 %v5892, 16
      %v6106 = vshrl.u32 %v5946, 16
      %v6108 = vshll.u32 %v5946, 16
      %v6110 = vrot.slane %v6108, 1
      %v6111 = vor.u32 %v6106, %v6110
      %v6113 = vshll.u32 %v5894, 16
      %v6115 = vrot.slane %v6113, 1
      %v6116 = vsel %vm414, %v6111, %v6115
      %v6117 = vshrl.u32 %v5894, 16
      %v6120 = vshrl.u32 %v5947, 16
      %v6122 = vshll.u32 %v5947, 16
      %v6124 = vrot.slane %v6122, 1
      %v6125 = vor.u32 %v6120, %v6124
      %v6127 = vshll.u32 %v5896, 16
      %v6129 = vrot.slane %v6127, 1
      %v6130 = vsel %vm414, %v6125, %v6129
      %v6131 = vshrl.u32 %v5896, 16
      %v6134 = vshrl.u32 %v5948, 16
      %v6136 = vshll.u32 %v5948, 16
      %v6138 = vrot.slane %v6136, 1
      %v6139 = vor.u32 %v6134, %v6138
      %v6141 = vshll.u32 %v5898, 16
      %v6143 = vrot.slane %v6141, 1
      %v6144 = vsel %vm414, %v6139, %v6143
      %v6145 = vshrl.u32 %v5898, 16
      %v6148 = vshrl.u32 %v5949, 16
      %v6150 = vshll.u32 %v5949, 16
      %v6152 = vrot.slane %v6150, 1
      %v6153 = vor.u32 %v6148, %v6152
      %v6155 = vshll.u32 %v5900, 16
      %v6157 = vrot.slane %v6155, 1
      %v6158 = vsel %vm414, %v6153, %v6157
      %v6159 = vshrl.u32 %v5900, 16
      %v6162 = vshrl.u32 %v5950, 16
      %v6164 = vshll.u32 %v5950, 16
      %v6166 = vrot.slane %v6164, 1
      %v6167 = vor.u32 %v6162, %v6166
      %v6169 = vshll.u32 %v5902, 16
      %v6171 = vrot.slane %v6169, 1
      %v6172 = vsel %vm414, %v6167, %v6171
      %v6173 = vshrl.u32 %v5902, 16
      %v6176 = vshrl.u32 %v5471, 16
      %v6178 = vshll.u32 %v5471, 16
      %v6180 = vrot.slane %v6178, 1
      %v6181 = vor.u32 %v6176, %v6180
      %v6182 = vsel %vm414, %v6181, %v5561
      %v6184 = vshrl.u32 %v5562, 16
      %v6186 = vshll.u32 %v5562, 16
      %v6188 = vrot.slane %v6186, 1
      %v6189 = vor.u32 %v6184, %v6188
      %v6191 = vshll.u32 %v5563, 16
      %v6193 = vrot.slane %v6191, 1
      %v6194 = vsel %vm414, %v6189, %v6193
      %v6196 = vshrl.u32 %v5871, 16
      %v6198 = vshll.u32 %v5871, 16
      %v6200 = vrot.slane %v6198, 1
      %v6201 = vor.u32 %v6196, %v6200
      %v6202 = vsel %vm414, %v6201, %v5961
      %v6204 = vshrl.u32 %v5962, 16
      %v6206 = vshll.u32 %v5962, 16
      %v6208 = vrot.slane %v6206, 1
      %v6209 = vor.u32 %v6204, %v6208
      %v6211 = vshll.u32 %v5963, 16
      %v6213 = vrot.slane %v6211, 1
      %v6214 = vsel %vm414, %v6209, %v6213
      %v6216 = vshrl.u32 %v5473, 16
      %v6218 = vshll.u32 %v5473, 16
      %v6220 = vrot.slane %v6218, 1
      %v6221 = vor.u32 %v6216, %v6220
      %v6222 = vsel %vm414, %v6221, %v5575
      %v6224 = vshrl.u32 %v5576, 16
      %v6226 = vshll.u32 %v5576, 16
      %v6228 = vrot.slane %v6226, 1
      %v6229 = vor.u32 %v6224, %v6228
      %v6231 = vshll.u32 %v5577, 16
      %v6233 = vrot.slane %v6231, 1
      %v6234 = vsel %vm414, %v6229, %v6233
      %v6236 = vshrl.u32 %v5873, 16
      %v6238 = vshll.u32 %v5873, 16
      %v6240 = vrot.slane %v6238, 1
      %v6241 = vor.u32 %v6236, %v6240
      %v6242 = vsel %vm414, %v6241, %v5975
      %v6244 = vshrl.u32 %v5976, 16
      %v6246 = vshll.u32 %v5976, 16
      %v6248 = vrot.slane %v6246, 1
      %v6249 = vor.u32 %v6244, %v6248
      %v6251 = vshll.u32 %v5977, 16
      %v6253 = vrot.slane %v6251, 1
      %v6254 = vsel %vm414, %v6249, %v6253
      %v6256 = vshrl.u32 %v5475, 16
      %v6258 = vshll.u32 %v5475, 16
      %v6260 = vrot.slane %v6258, 1
      %v6261 = vor.u32 %v6256, %v6260
      %v6262 = vsel %vm414, %v6261, %v5589
      %v6264 = vshrl.u32 %v5590, 16
      %v6266 = vshll.u32 %v5590, 16
      %v6268 = vrot.slane %v6266, 1
      %v6269 = vor.u32 %v6264, %v6268
      %v6271 = vshll.u32 %v5591, 16
      %v6273 = vrot.slane %v6271, 1
      %v6274 = vsel %vm414, %v6269, %v6273
      %v6276 = vshrl.u32 %v5875, 16
      %v6278 = vshll.u32 %v5875, 16
      %v6280 = vrot.slane %v6278, 1
      %v6281 = vor.u32 %v6276, %v6280
      %v6282 = vsel %vm414, %v6281, %v5989
      %v6284 = vshrl.u32 %v5990, 16
      %v6286 = vshll.u32 %v5990, 16
      %v6288 = vrot.slane %v6286, 1
      %v6289 = vor.u32 %v6284, %v6288
      %v6291 = vshll.u32 %v5991, 16
      %v6293 = vrot.slane %v6291, 1
      %v6294 = vsel %vm414, %v6289, %v6293
      %v6296 = vshrl.u32 %v5477, 16
      %v6298 = vshll.u32 %v5477, 16
      %v6300 = vrot.slane %v6298, 1
      %v6301 = vor.u32 %v6296, %v6300
      %v6302 = vsel %vm414, %v6301, %v5603
      %v6304 = vshrl.u32 %v5604, 16
      %v6306 = vshll.u32 %v5604, 16
      %v6308 = vrot.slane %v6306, 1
      %v6309 = vor.u32 %v6304, %v6308
      %v6311 = vshll.u32 %v5605, 16
      %v6313 = vrot.slane %v6311, 1
      %v6314 = vsel %vm414, %v6309, %v6313
      %v6316 = vshrl.u32 %v5877, 16
      %v6318 = vshll.u32 %v5877, 16
      %v6320 = vrot.slane %v6318, 1
      %v6321 = vor.u32 %v6316, %v6320
      %v6322 = vsel %vm414, %v6321, %v6003
      %v6324 = vshrl.u32 %v6004, 16
      %v6326 = vshll.u32 %v6004, 16
      %v6328 = vrot.slane %v6326, 1
      %v6329 = vor.u32 %v6324, %v6328
      %v6331 = vshll.u32 %v6005, 16
      %v6333 = vrot.slane %v6331, 1
      %v6334 = vsel %vm414, %v6329, %v6333
      %v6336 = vshrl.u32 %v5479, 16
      %v6338 = vshll.u32 %v5479, 16
      %v6340 = vrot.slane %v6338, 1
      %v6341 = vor.u32 %v6336, %v6340
      %v6342 = vsel %vm414, %v6341, %v5617
      %v6344 = vshrl.u32 %v5618, 16
      %v6346 = vshll.u32 %v5618, 16
      %v6348 = vrot.slane %v6346, 1
      %v6349 = vor.u32 %v6344, %v6348
      %v6351 = vshll.u32 %v5619, 16
      %v6353 = vrot.slane %v6351, 1
      %v6354 = vsel %vm414, %v6349, %v6353
      %v6356 = vshrl.u32 %v5879, 16
      %v6358 = vshll.u32 %v5879, 16
      %v6360 = vrot.slane %v6358, 1
      %v6361 = vor.u32 %v6356, %v6360
      %v6362 = vsel %vm414, %v6361, %v6017
      %v6364 = vshrl.u32 %v6018, 16
      %v6366 = vshll.u32 %v6018, 16
      %v6368 = vrot.slane %v6366, 1
      %v6369 = vor.u32 %v6364, %v6368
      %v6371 = vshll.u32 %v6019, 16
      %v6373 = vrot.slane %v6371, 1
      %v6374 = vsel %vm414, %v6369, %v6373
      %v6376 = vshrl.u32 %v5481, 16
      %v6378 = vshll.u32 %v5481, 16
      %v6380 = vrot.slane %v6378, 1
      %v6381 = vor.u32 %v6376, %v6380
      %v6382 = vsel %vm414, %v6381, %v5631
      %v6384 = vshrl.u32 %v5632, 16
      %v6386 = vshll.u32 %v5632, 16
      %v6388 = vrot.slane %v6386, 1
      %v6389 = vor.u32 %v6384, %v6388
      %v6391 = vshll.u32 %v5633, 16
      %v6393 = vrot.slane %v6391, 1
      %v6394 = vsel %vm414, %v6389, %v6393
      %v6396 = vshrl.u32 %v5881, 16
      %v6398 = vshll.u32 %v5881, 16
      %v6400 = vrot.slane %v6398, 1
      %v6401 = vor.u32 %v6396, %v6400
      %v6402 = vsel %vm414, %v6401, %v6031
      %v6404 = vshrl.u32 %v6032, 16
      %v6406 = vshll.u32 %v6032, 16
      %v6408 = vrot.slane %v6406, 1
      %v6409 = vor.u32 %v6404, %v6408
      %v6411 = vshll.u32 %v6033, 16
      %v6413 = vrot.slane %v6411, 1
      %v6414 = vsel %vm414, %v6409, %v6413
      %v6416 = vshrl.u32 %v5483, 16
      %v6418 = vshll.u32 %v5483, 16
      %v6420 = vrot.slane %v6418, 1
      %v6421 = vor.u32 %v6416, %v6420
      %v6422 = vsel %vm414, %v6421, %v5645
      %v6424 = vshrl.u32 %v5646, 16
      %v6426 = vshll.u32 %v5646, 16
      %v6428 = vrot.slane %v6426, 1
      %v6429 = vor.u32 %v6424, %v6428
      %v6431 = vshll.u32 %v5647, 16
      %v6433 = vrot.slane %v6431, 1
      %v6434 = vsel %vm414, %v6429, %v6433
      %v6436 = vshrl.u32 %v5883, 16
      %v6438 = vshll.u32 %v5883, 16
      %v6440 = vrot.slane %v6438, 1
      %v6441 = vor.u32 %v6436, %v6440
      %v6442 = vsel %vm414, %v6441, %v6045
      %v6444 = vshrl.u32 %v6046, 16
      %v6446 = vshll.u32 %v6046, 16
      %v6448 = vrot.slane %v6446, 1
      %v6449 = vor.u32 %v6444, %v6448
      %v6451 = vshll.u32 %v6047, 16
      %v6453 = vrot.slane %v6451, 1
      %v6454 = vsel %vm414, %v6449, %v6453
      %v6456 = vshrl.u32 %v5485, 16
      %v6458 = vshll.u32 %v5485, 16
      %v6460 = vrot.slane %v6458, 1
      %v6461 = vor.u32 %v6456, %v6460
      %v6462 = vsel %vm414, %v6461, %v5659
      %v6464 = vshrl.u32 %v5660, 16
      %v6466 = vshll.u32 %v5660, 16
      %v6468 = vrot.slane %v6466, 1
      %v6469 = vor.u32 %v6464, %v6468
      %v6471 = vshll.u32 %v5661, 16
      %v6473 = vrot.slane %v6471, 1
      %v6474 = vsel %vm414, %v6469, %v6473
      %v6476 = vshrl.u32 %v5885, 16
      %v6478 = vshll.u32 %v5885, 16
      %v6480 = vrot.slane %v6478, 1
      %v6481 = vor.u32 %v6476, %v6480
      %v6482 = vsel %vm414, %v6481, %v6059
      %v6484 = vshrl.u32 %v6060, 16
      %v6486 = vshll.u32 %v6060, 16
      %v6488 = vrot.slane %v6486, 1
      %v6489 = vor.u32 %v6484, %v6488
      %v6491 = vshll.u32 %v6061, 16
      %v6493 = vrot.slane %v6491, 1
      %v6494 = vsel %vm414, %v6489, %v6493
      %v6496 = vshrl.u32 %v5487, 16
      %v6498 = vshll.u32 %v5487, 16
      %v6500 = vrot.slane %v6498, 1
      %v6501 = vor.u32 %v6496, %v6500
      %v6502 = vsel %vm414, %v6501, %v5673
      %v6504 = vshrl.u32 %v5674, 16
      %v6506 = vshll.u32 %v5674, 16
      %v6508 = vrot.slane %v6506, 1
      %v6509 = vor.u32 %v6504, %v6508
      %v6511 = vshll.u32 %v5675, 16
      %v6513 = vrot.slane %v6511, 1
      %v6514 = vsel %vm414, %v6509, %v6513
      %v6516 = vshrl.u32 %v5887, 16
      %v6518 = vshll.u32 %v5887, 16
      %v6520 = vrot.slane %v6518, 1
      %v6521 = vor.u32 %v6516, %v6520
      %v6522 = vsel %vm414, %v6521, %v6073
      %v6524 = vshrl.u32 %v6074, 16
      %v6526 = vshll.u32 %v6074, 16
      %v6528 = vrot.slane %v6526, 1
      %v6529 = vor.u32 %v6524, %v6528
      %v6531 = vshll.u32 %v6075, 16
      %v6533 = vrot.slane %v6531, 1
      %v6534 = vsel %vm414, %v6529, %v6533
      %v6536 = vshrl.u32 %v5489, 16
      %v6538 = vshll.u32 %v5489, 16
      %v6540 = vrot.slane %v6538, 1
      %v6541 = vor.u32 %v6536, %v6540
      %v6542 = vsel %vm414, %v6541, %v5687
      %v6544 = vshrl.u32 %v5688, 16
      %v6546 = vshll.u32 %v5688, 16
      %v6548 = vrot.slane %v6546, 1
      %v6549 = vor.u32 %v6544, %v6548
      %v6551 = vshll.u32 %v5689, 16
      %v6553 = vrot.slane %v6551, 1
      %v6554 = vsel %vm414, %v6549, %v6553
      %v6556 = vshrl.u32 %v5889, 16
      %v6558 = vshll.u32 %v5889, 16
      %v6560 = vrot.slane %v6558, 1
      %v6561 = vor.u32 %v6556, %v6560
      %v6562 = vsel %vm414, %v6561, %v6087
      %v6564 = vshrl.u32 %v6088, 16
      %v6566 = vshll.u32 %v6088, 16
      %v6568 = vrot.slane %v6566, 1
      %v6569 = vor.u32 %v6564, %v6568
      %v6571 = vshll.u32 %v6089, 16
      %v6573 = vrot.slane %v6571, 1
      %v6574 = vsel %vm414, %v6569, %v6573
      %v6576 = vshrl.u32 %v5491, 16
      %v6578 = vshll.u32 %v5491, 16
      %v6580 = vrot.slane %v6578, 1
      %v6581 = vor.u32 %v6576, %v6580
      %v6582 = vsel %vm414, %v6581, %v5701
      %v6584 = vshrl.u32 %v5702, 16
      %v6586 = vshll.u32 %v5702, 16
      %v6588 = vrot.slane %v6586, 1
      %v6589 = vor.u32 %v6584, %v6588
      %v6591 = vshll.u32 %v5703, 16
      %v6593 = vrot.slane %v6591, 1
      %v6594 = vsel %vm414, %v6589, %v6593
      %v6596 = vshrl.u32 %v5891, 16
      %v6598 = vshll.u32 %v5891, 16
      %v6600 = vrot.slane %v6598, 1
      %v6601 = vor.u32 %v6596, %v6600
      %v6602 = vsel %vm414, %v6601, %v6101
      %v6604 = vshrl.u32 %v6102, 16
      %v6606 = vshll.u32 %v6102, 16
      %v6608 = vrot.slane %v6606, 1
      %v6609 = vor.u32 %v6604, %v6608
      %v6611 = vshll.u32 %v6103, 16
      %v6613 = vrot.slane %v6611, 1
      %v6614 = vsel %vm414, %v6609, %v6613
      %v6616 = vshrl.u32 %v5493, 16
      %v6618 = vshll.u32 %v5493, 16
      %v6620 = vrot.slane %v6618, 1
      %v6621 = vor.u32 %v6616, %v6620
      %v6622 = vsel %vm414, %v6621, %v5715
      %v6624 = vshrl.u32 %v5716, 16
      %v6626 = vshll.u32 %v5716, 16
      %v6628 = vrot.slane %v6626, 1
      %v6629 = vor.u32 %v6624, %v6628
      %v6631 = vshll.u32 %v5717, 16
      %v6633 = vrot.slane %v6631, 1
      %v6634 = vsel %vm414, %v6629, %v6633
      %v6636 = vshrl.u32 %v5893, 16
      %v6638 = vshll.u32 %v5893, 16
      %v6640 = vrot.slane %v6638, 1
      %v6641 = vor.u32 %v6636, %v6640
      %v6642 = vsel %vm414, %v6641, %v6115
      %v6644 = vshrl.u32 %v6116, 16
      %v6646 = vshll.u32 %v6116, 16
      %v6648 = vrot.slane %v6646, 1
      %v6649 = vor.u32 %v6644, %v6648
      %v6651 = vshll.u32 %v6117, 16
      %v6653 = vrot.slane %v6651, 1
      %v6654 = vsel %vm414, %v6649, %v6653
      %v6656 = vshrl.u32 %v5495, 16
      %v6658 = vshll.u32 %v5495, 16
      %v6660 = vrot.slane %v6658, 1
      %v6661 = vor.u32 %v6656, %v6660
      %v6662 = vsel %vm414, %v6661, %v5729
      %v6664 = vshrl.u32 %v5730, 16
      %v6666 = vshll.u32 %v5730, 16
      %v6668 = vrot.slane %v6666, 1
      %v6669 = vor.u32 %v6664, %v6668
      %v6671 = vshll.u32 %v5731, 16
      %v6673 = vrot.slane %v6671, 1
      %v6674 = vsel %vm414, %v6669, %v6673
      %v6676 = vshrl.u32 %v5895, 16
      %v6678 = vshll.u32 %v5895, 16
      %v6680 = vrot.slane %v6678, 1
      %v6681 = vor.u32 %v6676, %v6680
      %v6682 = vsel %vm414, %v6681, %v6129
      %v6684 = vshrl.u32 %v6130, 16
      %v6686 = vshll.u32 %v6130, 16
      %v6688 = vrot.slane %v6686, 1
      %v6689 = vor.u32 %v6684, %v6688
      %v6691 = vshll.u32 %v6131, 16
      %v6693 = vrot.slane %v6691, 1
      %v6694 = vsel %vm414, %v6689, %v6693
      %v6696 = vshrl.u32 %v5497, 16
      %v6698 = vshll.u32 %v5497, 16
      %v6700 = vrot.slane %v6698, 1
      %v6701 = vor.u32 %v6696, %v6700
      %v6702 = vsel %vm414, %v6701, %v5743
      %v6704 = vshrl.u32 %v5744, 16
      %v6706 = vshll.u32 %v5744, 16
      %v6708 = vrot.slane %v6706, 1
      %v6709 = vor.u32 %v6704, %v6708
      %v6711 = vshll.u32 %v5745, 16
      %v6713 = vrot.slane %v6711, 1
      %v6714 = vsel %vm414, %v6709, %v6713
      %v6716 = vshrl.u32 %v5897, 16
      %v6718 = vshll.u32 %v5897, 16
      %v6720 = vrot.slane %v6718, 1
      %v6721 = vor.u32 %v6716, %v6720
      %v6722 = vsel %vm414, %v6721, %v6143
      %v6724 = vshrl.u32 %v6144, 16
      %v6726 = vshll.u32 %v6144, 16
      %v6728 = vrot.slane %v6726, 1
      %v6729 = vor.u32 %v6724, %v6728
      %v6731 = vshll.u32 %v6145, 16
      %v6733 = vrot.slane %v6731, 1
      %v6734 = vsel %vm414, %v6729, %v6733
      %v6736 = vshrl.u32 %v5499, 16
      %v6738 = vshll.u32 %v5499, 16
      %v6740 = vrot.slane %v6738, 1
      %v6741 = vor.u32 %v6736, %v6740
      %v6742 = vsel %vm414, %v6741, %v5757
      %v6744 = vshrl.u32 %v5758, 16
      %v6746 = vshll.u32 %v5758, 16
      %v6748 = vrot.slane %v6746, 1
      %v6749 = vor.u32 %v6744, %v6748
      %v6751 = vshll.u32 %v5759, 16
      %v6753 = vrot.slane %v6751, 1
      %v6754 = vsel %vm414, %v6749, %v6753
      %v6756 = vshrl.u32 %v5899, 16
      %v6758 = vshll.u32 %v5899, 16
      %v6760 = vrot.slane %v6758, 1
      %v6761 = vor.u32 %v6756, %v6760
      %v6762 = vsel %vm414, %v6761, %v6157
      %v6764 = vshrl.u32 %v6158, 16
      %v6766 = vshll.u32 %v6158, 16
      %v6768 = vrot.slane %v6766, 1
      %v6769 = vor.u32 %v6764, %v6768
      %v6771 = vshll.u32 %v6159, 16
      %v6773 = vrot.slane %v6771, 1
      %v6774 = vsel %vm414, %v6769, %v6773
      %v6776 = vshrl.u32 %v5501, 16
      %v6778 = vshll.u32 %v5501, 16
      %v6780 = vrot.slane %v6778, 1
      %v6781 = vor.u32 %v6776, %v6780
      %v6782 = vsel %vm414, %v6781, %v5771
      %v6784 = vshrl.u32 %v5772, 16
      %v6786 = vshll.u32 %v5772, 16
      %v6788 = vrot.slane %v6786, 1
      %v6789 = vor.u32 %v6784, %v6788
      %v6791 = vshll.u32 %v5773, 16
      %v6793 = vrot.slane %v6791, 1
      %v6794 = vsel %vm414, %v6789, %v6793
      %v6796 = vshrl.u32 %v5901, 16
      %v6798 = vshll.u32 %v5901, 16
      %v6800 = vrot.slane %v6798, 1
      %v6801 = vor.u32 %v6796, %v6800
      %v6802 = vsel %vm414, %v6801, %v6171
      %v6804 = vshrl.u32 %v6172, 16
      %v6806 = vshll.u32 %v6172, 16
      %v6808 = vrot.slane %v6806, 1
      %v6809 = vor.u32 %v6804, %v6808
      %v6811 = vshll.u32 %v6173, 16
      %v6813 = vrot.slane %v6811, 1
      %v6814 = vsel %vm414, %v6809, %v6813
      %s6879 = scalar_lea.vmem %s1, 768
      %v6880 = vld [vmem:[%s6879] sm:$0xf]
      %v6881 = vld [vmem:[%s6879 + $0x4] sm:$0xf]
      %v6882 = vld [vmem:[%s6879 + $0x8] sm:$0xf]
      %v6883 = vld [vmem:[%s6879 + $0xc] sm:$0xf]
      %v6884 = vld [vmem:[%s6879 + $0x10] sm:$0xf]
      %v6885 = vld [vmem:[%s6879 + $0x14] sm:$0xf]
      %v6886 = vld [vmem:[%s6879 + $0x18] sm:$0xf]
      %v6887 = vld [vmem:[%s6879 + $0x1c] sm:$0xf]
      %v6888 = vld [vmem:[%s6879 + $0x20] sm:$0xf]
      %v6889 = vld [vmem:[%s6879 + $0x24] sm:$0xf]
      %v6890 = vld [vmem:[%s6879 + $0x28] sm:$0xf]
      %v6891 = vld [vmem:[%s6879 + $0x2c] sm:$0xf]
      %v6892 = vld [vmem:[%s6879 + $0x30] sm:$0xf]
      %v6893 = vld [vmem:[%s6879 + $0x34] sm:$0xf]
      %v6894 = vld [vmem:[%s6879 + $0x38] sm:$0xf]
      %v6895 = vld [vmem:[%s6879 + $0x3c] sm:$0xf]
      %v6896 = vld [vmem:[%s6879 + $0x40] sm:$0xf]
      %v6897 = vld [vmem:[%s6879 + $0x44] sm:$0xf]
      %v6898 = vld [vmem:[%s6879 + $0x48] sm:$0xf]
      %v6899 = vld [vmem:[%s6879 + $0x4c] sm:$0xf]
      %v6900 = vld [vmem:[%s6879 + $0x50] sm:$0xf]
      %v6901 = vld [vmem:[%s6879 + $0x54] sm:$0xf]
      %v6902 = vld [vmem:[%s6879 + $0x58] sm:$0xf]
      %v6903 = vld [vmem:[%s6879 + $0x5c] sm:$0xf]
      %v6904 = vld [vmem:[%s6879 + $0x60] sm:$0xf]
      %v6905 = vld [vmem:[%s6879 + $0x64] sm:$0xf]
      %v6906 = vld [vmem:[%s6879 + $0x68] sm:$0xf]
      %v6907 = vld [vmem:[%s6879 + $0x6c] sm:$0xf]
      %v6908 = vld [vmem:[%s6879 + $0x70] sm:$0xf]
      %v6909 = vld [vmem:[%s6879 + $0x74] sm:$0xf]
      %v6910 = vld [vmem:[%s6879 + $0x78] sm:$0xf]
      %v6911 = vld [vmem:[%s6879 + $0x7c] sm:$0xf]
      %v6912 = vld [vmem:[%s6879 + $0x80] sm:$0xf]
      %v6913 = vld [vmem:[%s6879 + $0x84] sm:$0xf]
      %v6914 = vld [vmem:[%s6879 + $0x88] sm:$0xf]
      %v6915 = vld [vmem:[%s6879 + $0x8c] sm:$0xf]
      %v6916 = vld [vmem:[%s6879 + $0x90] sm:$0xf]
      %v6917 = vld [vmem:[%s6879 + $0x94] sm:$0xf]
      %v6918 = vld [vmem:[%s6879 + $0x98] sm:$0xf]
      %v6919 = vld [vmem:[%s6879 + $0x9c] sm:$0xf]
      %v6920 = vld [vmem:[%s6879 + $0xa0] sm:$0xf]
      %v6921 = vld [vmem:[%s6879 + $0xa4] sm:$0xf]
      %v6922 = vld [vmem:[%s6879 + $0xa8] sm:$0xf]
      %v6923 = vld [vmem:[%s6879 + $0xac] sm:$0xf]
      %v6924 = vld [vmem:[%s6879 + $0xb0] sm:$0xf]
      %v6925 = vld [vmem:[%s6879 + $0xb4] sm:$0xf]
      %v6926 = vld [vmem:[%s6879 + $0xb8] sm:$0xf]
      %v6927 = vld [vmem:[%s6879 + $0xbc] sm:$0xf]
      %v6928 = vld [vmem:[%s6879 + $0xc0] sm:$0xf]
      %v6929 = vld [vmem:[%s6879 + $0xc4] sm:$0xf]
      %v6930 = vld [vmem:[%s6879 + $0xc8] sm:$0xf]
      %v6931 = vld [vmem:[%s6879 + $0xcc] sm:$0xf]
      %v6932 = vld [vmem:[%s6879 + $0xd0] sm:$0xf]
      %v6933 = vld [vmem:[%s6879 + $0xd4] sm:$0xf]
      %v6934 = vld [vmem:[%s6879 + $0xd8] sm:$0xf]
      %v6935 = vld [vmem:[%s6879 + $0xdc] sm:$0xf]
      %v6936 = vld [vmem:[%s6879 + $0xe0] sm:$0xf]
      %v6937 = vld [vmem:[%s6879 + $0xe4] sm:$0xf]
      %v6938 = vld [vmem:[%s6879 + $0xe8] sm:$0xf]
      %v6939 = vld [vmem:[%s6879 + $0xec] sm:$0xf]
      %v6940 = vld [vmem:[%s6879 + $0xf0] sm:$0xf]
      %v6941 = vld [vmem:[%s6879 + $0xf4] sm:$0xf]
      %v6942 = vld [vmem:[%s6879 + $0xf8] sm:$0xf]
      %v6943 = vld [vmem:[%s6879 + $0xfc] sm:$0xf]
      %v7008 = vunpack.c.l.b16 %v6880
      %v7009 = vunpack.c.l.b16 %v6881
      %v7010 = vunpack.c.l.b16 %v6882
      %v7011 = vunpack.c.l.b16 %v6883
      %v7012 = vunpack.c.l.b16 %v6884
      %v7013 = vunpack.c.l.b16 %v6885
      %v7014 = vunpack.c.l.b16 %v6886
      %v7015 = vunpack.c.l.b16 %v6887
      %v7016 = vunpack.c.l.b16 %v6888
      %v7017 = vunpack.c.l.b16 %v6889
      %v7018 = vunpack.c.l.b16 %v6890
      %v7019 = vunpack.c.l.b16 %v6891
      %v7020 = vunpack.c.l.b16 %v6892
      %v7021 = vunpack.c.l.b16 %v6893
      %v7022 = vunpack.c.l.b16 %v6894
      %v7023 = vunpack.c.l.b16 %v6895
      %v7024 = vunpack.c.l.b16 %v6896
      %v7025 = vunpack.c.l.b16 %v6897
      %v7026 = vunpack.c.l.b16 %v6898
      %v7027 = vunpack.c.l.b16 %v6899
      %v7028 = vunpack.c.l.b16 %v6900
      %v7029 = vunpack.c.l.b16 %v6901
      %v7030 = vunpack.c.l.b16 %v6902
      %v7031 = vunpack.c.l.b16 %v6903
      %v7032 = vunpack.c.l.b16 %v6904
      %v7033 = vunpack.c.l.b16 %v6905
      %v7034 = vunpack.c.l.b16 %v6906
      %v7035 = vunpack.c.l.b16 %v6907
      %v7036 = vunpack.c.l.b16 %v6908
      %v7037 = vunpack.c.l.b16 %v6909
      %v7038 = vunpack.c.l.b16 %v6910
      %v7039 = vunpack.c.l.b16 %v6911
      %v7040 = vunpack.c.l.b16 %v6912
      %v7041 = vunpack.c.l.b16 %v6913
      %v7042 = vunpack.c.l.b16 %v6914
      %v7043 = vunpack.c.l.b16 %v6915
      %v7044 = vunpack.c.l.b16 %v6916
      %v7045 = vunpack.c.l.b16 %v6917
      %v7046 = vunpack.c.l.b16 %v6918
      %v7047 = vunpack.c.l.b16 %v6919
      %v7048 = vunpack.c.l.b16 %v6920
      %v7049 = vunpack.c.l.b16 %v6921
      %v7050 = vunpack.c.l.b16 %v6922
      %v7051 = vunpack.c.l.b16 %v6923
      %v7052 = vunpack.c.l.b16 %v6924
      %v7053 = vunpack.c.l.b16 %v6925
      %v7054 = vunpack.c.l.b16 %v6926
      %v7055 = vunpack.c.l.b16 %v6927
      %v7056 = vunpack.c.l.b16 %v6928
      %v7057 = vunpack.c.l.b16 %v6929
      %v7058 = vunpack.c.l.b16 %v6930
      %v7059 = vunpack.c.l.b16 %v6931
      %v7060 = vunpack.c.l.b16 %v6932
      %v7061 = vunpack.c.l.b16 %v6933
      %v7062 = vunpack.c.l.b16 %v6934
      %v7063 = vunpack.c.l.b16 %v6935
      %v7064 = vunpack.c.l.b16 %v6936
      %v7065 = vunpack.c.l.b16 %v6937
      %v7066 = vunpack.c.l.b16 %v6938
      %v7067 = vunpack.c.l.b16 %v6939
      %v7068 = vunpack.c.l.b16 %v6940
      %v7069 = vunpack.c.l.b16 %v6941
      %v7070 = vunpack.c.l.b16 %v6942
      %v7071 = vunpack.c.l.b16 %v6943
      %v7072 = vpack.c.b16 %v7009, %v7008
      %v7073 = vpack.c.b16 %v7011, %v7010
      %v7074 = vpack.c.b16 %v7013, %v7012
      %v7075 = vpack.c.b16 %v7015, %v7014
      %v7076 = vpack.c.b16 %v7017, %v7016
      %v7077 = vpack.c.b16 %v7019, %v7018
      %v7078 = vpack.c.b16 %v7021, %v7020
      %v7079 = vpack.c.b16 %v7023, %v7022
      %v7080 = vpack.c.b16 %v7025, %v7024
      %v7081 = vpack.c.b16 %v7027, %v7026
      %v7082 = vpack.c.b16 %v7029, %v7028
      %v7083 = vpack.c.b16 %v7031, %v7030
      %v7084 = vpack.c.b16 %v7033, %v7032
      %v7085 = vpack.c.b16 %v7035, %v7034
      %v7086 = vpack.c.b16 %v7037, %v7036
      %v7087 = vpack.c.b16 %v7039, %v7038
      %v7088 = vpack.c.b16 %v7041, %v7040
      %v7089 = vpack.c.b16 %v7043, %v7042
      %v7090 = vpack.c.b16 %v7045, %v7044
      %v7091 = vpack.c.b16 %v7047, %v7046
      %v7092 = vpack.c.b16 %v7049, %v7048
      %v7093 = vpack.c.b16 %v7051, %v7050
      %v7094 = vpack.c.b16 %v7053, %v7052
      %v7095 = vpack.c.b16 %v7055, %v7054
      %v7096 = vpack.c.b16 %v7057, %v7056
      %v7097 = vpack.c.b16 %v7059, %v7058
      %v7098 = vpack.c.b16 %v7061, %v7060
      %v7099 = vpack.c.b16 %v7063, %v7062
      %v7100 = vpack.c.b16 %v7065, %v7064
      %v7101 = vpack.c.b16 %v7067, %v7066
      %v7102 = vpack.c.b16 %v7069, %v7068
      %v7103 = vpack.c.b16 %v7071, %v7070
      %7136 = vmatprep.subr.bf16.mxu0 0
      %7137 = vmatpush1.bf16.msra.mxu0 %v7079
      %7138 = vmatprep.subr.bf16.mxu0 0
      %7139 = vmatpush1.bf16.msra.mxu0 %v7078
      %7140 = vmatprep.subr.bf16.mxu0 0
      %7141 = vmatpush1.bf16.msra.mxu0 %v7077
      %7142 = vmatprep.subr.bf16.mxu0 0
      %7143 = vmatpush1.bf16.msra.mxu0 %v7076
      %7144 = vmatprep.subr.bf16.mxu0 0
      %7145 = vmatpush1.bf16.msra.mxu0 %v7075
      %7146 = vmatprep.subr.bf16.mxu0 0
      %7147 = vmatpush1.bf16.msra.mxu0 %v7074
      %7148 = vmatprep.subr.bf16.mxu0 0
      %7149 = vmatpush1.bf16.msra.mxu0 %v7073
      %7150 = vmatprep.subr.bf16.mxu0 0
      %7151 = vmatpush1.bf16.msra.mxu0 %v7072
      %7152 = vmatprep.subr.bf16.mxu0 0
      %7153 = vmatpush2.bf16.msra.mxu0 %v7087
      %7154 = vmatprep.subr.bf16.mxu0 0
      %7155 = vmatpush2.bf16.msra.mxu0 %v7086
      %7156 = vmatprep.subr.bf16.mxu0 0
      %7157 = vmatpush2.bf16.msra.mxu0 %v7085
      %7158 = vmatprep.subr.bf16.mxu0 0
      %7159 = vmatpush2.bf16.msra.mxu0 %v7084
      %7160 = vmatprep.subr.bf16.mxu0 0
      %7161 = vmatpush2.bf16.msra.mxu0 %v7083
      %7162 = vmatprep.subr.bf16.mxu0 0
      %7163 = vmatpush2.bf16.msra.mxu0 %v7082
      %7164 = vmatprep.subr.bf16.mxu0 0
      %7165 = vmatpush2.bf16.msra.mxu0 %v7081
      %7166 = vmatprep.subr.bf16.mxu0 0
      %7167 = vmatpush2.bf16.msra.mxu0 %v7080
      %7168 = vmatprep.mubr.bf16.mxu0 %v6194
      %7169 = vmatmul.mubr.bf16.gmra.mxu0 %v6182
      %v7170 = vpop.f32.mrf.mxu0
      %v7171 = vadd.f32 %v1043, %v7170
      %v7172 = vpop.f32.mrf.mxu0
      %v7173 = vpop.f32.mrf.mxu0
      %v7174 = vadd.f32 %v1043, %v7173
      %v7175 = vpop.f32.mrf.mxu0
      %7176 = vmatprep.mubr.bf16.mxu0 %v6234
      %7177 = vmatmul.mubr.bf16.gmra.mxu0 %v6222
      %v7178 = vpop.f32.mrf.mxu0
      %v7179 = vadd.f32 %v1043, %v7178
      %v7180 = vpop.f32.mrf.mxu0
      %v7181 = vpop.f32.mrf.mxu0
      %v7182 = vadd.f32 %v1043, %v7181
      %v7183 = vpop.f32.mrf.mxu0
      %7184 = vmatprep.mubr.bf16.mxu0 %v6274
      %7185 = vmatmul.mubr.bf16.gmra.mxu0 %v6262
      %v7186 = vpop.f32.mrf.mxu0
      %v7187 = vadd.f32 %v1043, %v7186
      %v7188 = vpop.f32.mrf.mxu0
      %v7189 = vpop.f32.mrf.mxu0
      %v7190 = vadd.f32 %v1043, %v7189
      %v7191 = vpop.f32.mrf.mxu0
      %7192 = vmatprep.mubr.bf16.mxu0 %v6314
      %7193 = vmatmul.mubr.bf16.gmra.mxu0 %v6302
      %v7194 = vpop.f32.mrf.mxu0
      %v7195 = vadd.f32 %v1043, %v7194
      %v7196 = vpop.f32.mrf.mxu0
      %v7197 = vpop.f32.mrf.mxu0
      %v7198 = vadd.f32 %v1043, %v7197
      %v7199 = vpop.f32.mrf.mxu0
      %7200 = vmatprep.mubr.bf16.mxu0 %v6354
      %7201 = vmatmul.mubr.bf16.gmra.mxu0 %v6342
      %v7202 = vpop.f32.mrf.mxu0
      %v7203 = vadd.f32 %v1043, %v7202
      %v7204 = vpop.f32.mrf.mxu0
      %v7205 = vpop.f32.mrf.mxu0
      %v7206 = vadd.f32 %v1043, %v7205
      %v7207 = vpop.f32.mrf.mxu0
      %7208 = vmatprep.mubr.bf16.mxu0 %v6394
      %7209 = vmatmul.mubr.bf16.gmra.mxu0 %v6382
      %v7210 = vpop.f32.mrf.mxu0
      %v7211 = vadd.f32 %v1043, %v7210
      %v7212 = vpop.f32.mrf.mxu0
      %v7213 = vpop.f32.mrf.mxu0
      %v7214 = vadd.f32 %v1043, %v7213
      %v7215 = vpop.f32.mrf.mxu0
      %7216 = vmatprep.mubr.bf16.mxu0 %v6434
      %7217 = vmatmul.mubr.bf16.gmra.mxu0 %v6422
      %v7218 = vpop.f32.mrf.mxu0
      %v7219 = vadd.f32 %v1043, %v7218
      %v7220 = vpop.f32.mrf.mxu0
      %v7221 = vpop.f32.mrf.mxu0
      %v7222 = vadd.f32 %v1043, %v7221
      %v7223 = vpop.f32.mrf.mxu0
      %7224 = vmatprep.mubr.bf16.mxu0 %v6474
      %7225 = vmatmul.mubr.bf16.gmra.mxu0 %v6462
      %v7226 = vpop.f32.mrf.mxu0
      %v7227 = vadd.f32 %v1043, %v7226
      %v7228 = vpop.f32.mrf.mxu0
      %v7229 = vpop.f32.mrf.mxu0
      %v7230 = vadd.f32 %v1043, %v7229
      %v7231 = vpop.f32.mrf.mxu0
      %7232 = vmatprep.mubr.bf16.mxu0 %v6514
      %7233 = vmatmul.mubr.bf16.gmra.mxu0 %v6502
      %v7234 = vpop.f32.mrf.mxu0
      %v7235 = vadd.f32 %v1043, %v7234
      %v7236 = vpop.f32.mrf.mxu0
      %v7237 = vpop.f32.mrf.mxu0
      %v7238 = vadd.f32 %v1043, %v7237
      %v7239 = vpop.f32.mrf.mxu0
      %7240 = vmatprep.mubr.bf16.mxu0 %v6554
      %7241 = vmatmul.mubr.bf16.gmra.mxu0 %v6542
      %v7242 = vpop.f32.mrf.mxu0
      %v7243 = vadd.f32 %v1043, %v7242
      %v7244 = vpop.f32.mrf.mxu0
      %v7245 = vpop.f32.mrf.mxu0
      %v7246 = vadd.f32 %v1043, %v7245
      %v7247 = vpop.f32.mrf.mxu0
      %7248 = vmatprep.mubr.bf16.mxu0 %v6594
      %7249 = vmatmul.mubr.bf16.gmra.mxu0 %v6582
      %v7250 = vpop.f32.mrf.mxu0
      %v7251 = vadd.f32 %v1043, %v7250
      %v7252 = vpop.f32.mrf.mxu0
      %v7253 = vpop.f32.mrf.mxu0
      %v7254 = vadd.f32 %v1043, %v7253
      %v7255 = vpop.f32.mrf.mxu0
      %7256 = vmatprep.mubr.bf16.mxu0 %v6634
      %7257 = vmatmul.mubr.bf16.gmra.mxu0 %v6622
      %v7258 = vpop.f32.mrf.mxu0
      %v7259 = vadd.f32 %v1043, %v7258
      %v7260 = vpop.f32.mrf.mxu0
      %v7261 = vpop.f32.mrf.mxu0
      %v7262 = vadd.f32 %v1043, %v7261
      %v7263 = vpop.f32.mrf.mxu0
      %7264 = vmatprep.mubr.bf16.mxu0 %v6674
      %7265 = vmatmul.mubr.bf16.gmra.mxu0 %v6662
      %v7266 = vpop.f32.mrf.mxu0
      %v7267 = vadd.f32 %v1043, %v7266
      %v7268 = vpop.f32.mrf.mxu0
      %v7269 = vpop.f32.mrf.mxu0
      %v7270 = vadd.f32 %v1043, %v7269
      %v7271 = vpop.f32.mrf.mxu0
      %7272 = vmatprep.mubr.bf16.mxu0 %v6714
      %7273 = vmatmul.mubr.bf16.gmra.mxu0 %v6702
      %v7274 = vpop.f32.mrf.mxu0
      %v7275 = vadd.f32 %v1043, %v7274
      %v7276 = vpop.f32.mrf.mxu0
      %v7277 = vpop.f32.mrf.mxu0
      %v7278 = vadd.f32 %v1043, %v7277
      %v7279 = vpop.f32.mrf.mxu0
      %7280 = vmatprep.mubr.bf16.mxu0 %v6754
      %7281 = vmatmul.mubr.bf16.gmra.mxu0 %v6742
      %v7282 = vpop.f32.mrf.mxu0
      %v7283 = vadd.f32 %v1043, %v7282
      %v7284 = vpop.f32.mrf.mxu0
      %v7285 = vpop.f32.mrf.mxu0
      %v7286 = vadd.f32 %v1043, %v7285
      %v7287 = vpop.f32.mrf.mxu0
      %7288 = vmatprep.mubr.bf16.mxu0 %v6794
      %7289 = vmatmul.mubr.bf16.gmra.mxu0 %v6782
      %v7290 = vpop.f32.mrf.mxu0
      %v7291 = vadd.f32 %v1043, %v7290
      %v7292 = vpop.f32.mrf.mxu0
      %v7293 = vpop.f32.mrf.mxu0
      %v7294 = vadd.f32 %v1043, %v7293
      %v7295 = vpop.f32.mrf.mxu0
      %7296 = vdwg.mxu0
      %7297 = vmatprep.subr.bf16.mxu0 0
      %7298 = vmatpush1.bf16.msra.mxu0 %v7095
      %7299 = vmatprep.subr.bf16.mxu0 0
      %7300 = vmatpush1.bf16.msra.mxu0 %v7094
      %7301 = vmatprep.subr.bf16.mxu0 0
      %7302 = vmatpush1.bf16.msra.mxu0 %v7093
      %7303 = vmatprep.subr.bf16.mxu0 0
      %7304 = vmatpush1.bf16.msra.mxu0 %v7092
      %7305 = vmatprep.subr.bf16.mxu0 0
      %7306 = vmatpush1.bf16.msra.mxu0 %v7091
      %7307 = vmatprep.subr.bf16.mxu0 0
      %7308 = vmatpush1.bf16.msra.mxu0 %v7090
      %7309 = vmatprep.subr.bf16.mxu0 0
      %7310 = vmatpush1.bf16.msra.mxu0 %v7089
      %7311 = vmatprep.subr.bf16.mxu0 0
      %7312 = vmatpush1.bf16.msra.mxu0 %v7088
      %7313 = vmatprep.subr.bf16.mxu0 0
      %7314 = vmatpush2.bf16.msra.mxu0 %v7103
      %7315 = vmatprep.subr.bf16.mxu0 0
      %7316 = vmatpush2.bf16.msra.mxu0 %v7102
      %7317 = vmatprep.subr.bf16.mxu0 0
      %7318 = vmatpush2.bf16.msra.mxu0 %v7101
      %7319 = vmatprep.subr.bf16.mxu0 0
      %7320 = vmatpush2.bf16.msra.mxu0 %v7100
      %7321 = vmatprep.subr.bf16.mxu0 0
      %7322 = vmatpush2.bf16.msra.mxu0 %v7099
      %7323 = vmatprep.subr.bf16.mxu0 0
      %7324 = vmatpush2.bf16.msra.mxu0 %v7098
      %7325 = vmatprep.subr.bf16.mxu0 0
      %7326 = vmatpush2.bf16.msra.mxu0 %v7097
      %7327 = vmatprep.subr.bf16.mxu0 0
      %7328 = vmatpush2.bf16.msra.mxu0 %v7096
      %7329 = vmatprep.mubr.bf16.mxu0 %v6214
      %7330 = vmatmul.mubr.bf16.gmra.mxu0 %v6202
      %v7331 = vpop.f32.mrf.mxu0
      %v7332 = vadd.f32 %v7171, %v7331
      %v7333 = vpop.f32.mrf.mxu0
      %v7334 = vpop.f32.mrf.mxu0
      %v7335 = vadd.f32 %v7174, %v7334
      %v7336 = vpop.f32.mrf.mxu0
      %7337 = vmatprep.mubr.bf16.mxu0 %v6254
      %7338 = vmatmul.mubr.bf16.gmra.mxu0 %v6242
      %v7339 = vpop.f32.mrf.mxu0
      %v7340 = vadd.f32 %v7179, %v7339
      %v7341 = vpop.f32.mrf.mxu0
      %v7342 = vpop.f32.mrf.mxu0
      %v7343 = vadd.f32 %v7182, %v7342
      %v7344 = vpop.f32.mrf.mxu0
      %7345 = vmatprep.mubr.bf16.mxu0 %v6294
      %7346 = vmatmul.mubr.bf16.gmra.mxu0 %v6282
      %v7347 = vpop.f32.mrf.mxu0
      %v7348 = vadd.f32 %v7187, %v7347
      %v7349 = vpop.f32.mrf.mxu0
      %v7350 = vpop.f32.mrf.mxu0
      %v7351 = vadd.f32 %v7190, %v7350
      %v7352 = vpop.f32.mrf.mxu0
      %7353 = vmatprep.mubr.bf16.mxu0 %v6334
      %7354 = vmatmul.mubr.bf16.gmra.mxu0 %v6322
      %v7355 = vpop.f32.mrf.mxu0
      %v7356 = vadd.f32 %v7195, %v7355
      %v7357 = vpop.f32.mrf.mxu0
      %v7358 = vpop.f32.mrf.mxu0
      %v7359 = vadd.f32 %v7198, %v7358
      %v7360 = vpop.f32.mrf.mxu0
      %7361 = vmatprep.mubr.bf16.mxu0 %v6374
      %7362 = vmatmul.mubr.bf16.gmra.mxu0 %v6362
      %v7363 = vpop.f32.mrf.mxu0
      %v7364 = vadd.f32 %v7203, %v7363
      %v7365 = vpop.f32.mrf.mxu0
      %v7366 = vpop.f32.mrf.mxu0
      %v7367 = vadd.f32 %v7206, %v7366
      %v7368 = vpop.f32.mrf.mxu0
      %7369 = vmatprep.mubr.bf16.mxu0 %v6414
      %7370 = vmatmul.mubr.bf16.gmra.mxu0 %v6402
      %v7371 = vpop.f32.mrf.mxu0
      %v7372 = vadd.f32 %v7211, %v7371
      %v7373 = vpop.f32.mrf.mxu0
      %v7374 = vpop.f32.mrf.mxu0
      %v7375 = vadd.f32 %v7214, %v7374
      %v7376 = vpop.f32.mrf.mxu0
      %7377 = vmatprep.mubr.bf16.mxu0 %v6454
      %7378 = vmatmul.mubr.bf16.gmra.mxu0 %v6442
      %v7379 = vpop.f32.mrf.mxu0
      %v7380 = vadd.f32 %v7219, %v7379
      %v7381 = vpop.f32.mrf.mxu0
      %v7382 = vpop.f32.mrf.mxu0
      %v7383 = vadd.f32 %v7222, %v7382
      %v7384 = vpop.f32.mrf.mxu0
      %7385 = vmatprep.mubr.bf16.mxu0 %v6494
      %7386 = vmatmul.mubr.bf16.gmra.mxu0 %v6482
      %v7387 = vpop.f32.mrf.mxu0
      %v7388 = vadd.f32 %v7227, %v7387
      %v7389 = vpop.f32.mrf.mxu0
      %v7390 = vpop.f32.mrf.mxu0
      %v7391 = vadd.f32 %v7230, %v7390
      %v7392 = vpop.f32.mrf.mxu0
      %7393 = vmatprep.mubr.bf16.mxu0 %v6534
      %7394 = vmatmul.mubr.bf16.gmra.mxu0 %v6522
      %v7395 = vpop.f32.mrf.mxu0
      %v7396 = vadd.f32 %v7235, %v7395
      %v7397 = vpop.f32.mrf.mxu0
      %v7398 = vpop.f32.mrf.mxu0
      %v7399 = vadd.f32 %v7238, %v7398
      %v7400 = vpop.f32.mrf.mxu0
      %7401 = vmatprep.mubr.bf16.mxu0 %v6574
      %7402 = vmatmul.mubr.bf16.gmra.mxu0 %v6562
      %v7403 = vpop.f32.mrf.mxu0
      %v7404 = vadd.f32 %v7243, %v7403
      %v7405 = vpop.f32.mrf.mxu0
      %v7406 = vpop.f32.mrf.mxu0
      %v7407 = vadd.f32 %v7246, %v7406
      %v7408 = vpop.f32.mrf.mxu0
      %7409 = vmatprep.mubr.bf16.mxu0 %v6614
      %7410 = vmatmul.mubr.bf16.gmra.mxu0 %v6602
      %v7411 = vpop.f32.mrf.mxu0
      %v7412 = vadd.f32 %v7251, %v7411
      %v7413 = vpop.f32.mrf.mxu0
      %v7414 = vpop.f32.mrf.mxu0
      %v7415 = vadd.f32 %v7254, %v7414
      %v7416 = vpop.f32.mrf.mxu0
      %7417 = vmatprep.mubr.bf16.mxu0 %v6654
      %7418 = vmatmul.mubr.bf16.gmra.mxu0 %v6642
      %v7419 = vpop.f32.mrf.mxu0
      %v7420 = vadd.f32 %v7259, %v7419
      %v7421 = vpop.f32.mrf.mxu0
      %v7422 = vpop.f32.mrf.mxu0
      %v7423 = vadd.f32 %v7262, %v7422
      %v7424 = vpop.f32.mrf.mxu0
      %7425 = vmatprep.mubr.bf16.mxu0 %v6694
      %7426 = vmatmul.mubr.bf16.gmra.mxu0 %v6682
      %v7427 = vpop.f32.mrf.mxu0
      %v7428 = vadd.f32 %v7267, %v7427
      %v7429 = vpop.f32.mrf.mxu0
      %v7430 = vpop.f32.mrf.mxu0
      %v7431 = vadd.f32 %v7270, %v7430
      %v7432 = vpop.f32.mrf.mxu0
      %7433 = vmatprep.mubr.bf16.mxu0 %v6734
      %7434 = vmatmul.mubr.bf16.gmra.mxu0 %v6722
      %v7435 = vpop.f32.mrf.mxu0
      %v7436 = vadd.f32 %v7275, %v7435
      %v7437 = vpop.f32.mrf.mxu0
      %v7438 = vpop.f32.mrf.mxu0
      %v7439 = vadd.f32 %v7278, %v7438
      %v7440 = vpop.f32.mrf.mxu0
      %7441 = vmatprep.mubr.bf16.mxu0 %v6774
      %7442 = vmatmul.mubr.bf16.gmra.mxu0 %v6762
      %v7443 = vpop.f32.mrf.mxu0
      %v7444 = vadd.f32 %v7283, %v7443
      %v7445 = vpop.f32.mrf.mxu0
      %v7446 = vpop.f32.mrf.mxu0
      %v7447 = vadd.f32 %v7286, %v7446
      %v7448 = vpop.f32.mrf.mxu0
      %7449 = vmatprep.mubr.bf16.mxu0 %v6814
      %7450 = vmatmul.mubr.bf16.gmra.mxu0 %v6802
      %v7451 = vpop.f32.mrf.mxu0
      %v7452 = vadd.f32 %v7291, %v7451
      %v7453 = vpop.f32.mrf.mxu0
      %v7454 = vpop.f32.mrf.mxu0
      %v7455 = vadd.f32 %v7294, %v7454
      %v7456 = vpop.f32.mrf.mxu0
      %7457 = vdwg.mxu0
      %7458 = vst [vmem:[%s5214 + $0x8] sm:$0xff] %v7332
      %7459 = vst [vmem:[%s5214 + $0x18] sm:$0xff] %v7335
      %7460 = vst [vmem:[%s5214 + $0x48] sm:$0xff] %v7340
      %7461 = vst [vmem:[%s5214 + $0x58] sm:$0xff] %v7343
      %7462 = vst [vmem:[%s5214 + $0x88] sm:$0xff] %v7348
      %7463 = vst [vmem:[%s5214 + $0x98] sm:$0xff] %v7351
      %7464 = vst [vmem:[%s5214 + $0xc8] sm:$0xff] %v7356
      %7465 = vst [vmem:[%s5214 + $0xd8] sm:$0xff] %v7359
      %7466 = vst [vmem:[%s5214 + $0x108] sm:$0xff] %v7364
      %7467 = vst [vmem:[%s5214 + $0x118] sm:$0xff] %v7367
      %7468 = vst [vmem:[%s5214 + $0x148] sm:$0xff] %v7372
      %7469 = vst [vmem:[%s5214 + $0x158] sm:$0xff] %v7375
      %7470 = vst [vmem:[%s5214 + $0x188] sm:$0xff] %v7380
      %7471 = vst [vmem:[%s5214 + $0x198] sm:$0xff] %v7383
      %7472 = vst [vmem:[%s5214 + $0x1c8] sm:$0xff] %v7388
      %7473 = vst [vmem:[%s5214 + $0x1d8] sm:$0xff] %v7391
      %7474 = vst [vmem:[%s5214 + $0x208] sm:$0xff] %v7396
      %7475 = vst [vmem:[%s5214 + $0x218] sm:$0xff] %v7399
      %7476 = vst [vmem:[%s5214 + $0x248] sm:$0xff] %v7404
      %7477 = vst [vmem:[%s5214 + $0x258] sm:$0xff] %v7407
      %7478 = vst [vmem:[%s5214 + $0x288] sm:$0xff] %v7412
      %7479 = vst [vmem:[%s5214 + $0x298] sm:$0xff] %v7415
      %7480 = vst [vmem:[%s5214 + $0x2c8] sm:$0xff] %v7420
      %7481 = vst [vmem:[%s5214 + $0x2d8] sm:$0xff] %v7423
      %7482 = vst [vmem:[%s5214 + $0x308] sm:$0xff] %v7428
      %7483 = vst [vmem:[%s5214 + $0x318] sm:$0xff] %v7431
      %7484 = vst [vmem:[%s5214 + $0x348] sm:$0xff] %v7436
      %7485 = vst [vmem:[%s5214 + $0x358] sm:$0xff] %v7439
      %7486 = vst [vmem:[%s5214 + $0x388] sm:$0xff] %v7444
      %7487 = vst [vmem:[%s5214 + $0x398] sm:$0xff] %v7447
      %7488 = vst [vmem:[%s5214 + $0x3c8] sm:$0xff] %v7452
      %7489 = vst [vmem:[%s5214 + $0x3d8] sm:$0xff] %v7455
      %p7490 = scmp.lt.s32.totalorder %s14, 1
      %s7491 = scalar_select %p7490, %s14, 1
      %s7492 = smul.addr %s7491, 128
      %s7493 = smul.addr %s7492, 8
      %s7494 = scalar_lea.vmem %s3, %s7493
      // Predicated region
      $region33: #{fused_upsample.1} parent=31 // pred_check
        %p7495 = pneg %p100
      $region34: #{fused_upsample.1} parent=31 // pred_check_branch
        %7497 = sbr.rel (%p7495) target = $region36
      $region35: #{fused_upsample.1} parent=31 // pred_region
        _
      $region36: #{fused_upsample.1} parent=31 // pred_fallthru
        _
    $region32: #{fused_upsample.1} parent=5 // pred_fallthru
      _
    %p7498 = scmp.le.s32.totalorder 2, %s9
    // Predicated region
    $region37: #{fused_upsample.1} parent=5 // pred_check
      %p7499 = pneg %p7498
    $region38: #{fused_upsample.1} parent=5 // pred_check_branch
      %7501 = sbr.rel (%p7499) target = $region40
    $region39: #{fused_upsample.1} parent=5 // pred_region
      %s7502 = ssub.s32 %s9, 2
      // Predicated region
      $region41: #{fused_upsample.1} parent=39 // pred_check
        %p7503 = pneg %p106
      $region42: #{fused_upsample.1} parent=39 // pred_check_branch
        %7505 = sbr.rel (%p7503) target = $region44
      $region43: #{fused_upsample.1} parent=39 // pred_region
        %p7506 = scmp.lt.s32.totalorder %s15, 1
        %s7507 = scalar_select %p7506, %s15, 1
        %s7508 = smul.addr %s7507, 128
        %s7509 = smul.addr %s7508, 8
        %s7510 = scalar_lea.vmem %s3, %s7509
      $region44: #{fused_upsample.1} parent=39 // pred_fallthru
        _
    $region40: #{fused_upsample.1} parent=5 // pred_fallthru
      _
  $region6: #{fused_upsample.1} parent=0 // loop_footer
    %s13 = sadd.s32 1, %s9
  $region7: #{fused_upsample.1} parent=0 // loop_footer_branch
    %8 = sbr.rel target = $region3
  $region8: #{fused_upsample.1} parent=0 // loop_exit
    _

</llo_original>
